<compile_context>
chip_gen: v5e
topology: v5e:2x2
jax: 0.10.0
libtpu: 0.0.40
codegen_flags: <defaults>
</compile_context>

<pallas_src>
import functools

import jax
import jax.numpy as jnp
from jax import lax
from jax.experimental import pallas as pl
from jax.experimental.pallas import tpu as pltpu

P = 8            # pad_size / max_displacement of corr4x
SX = 2 * P + 1   # 17 displacements per axis -> 289 correlation channels
KK = 3           # ConvIn consumes a 3x3 unfold


# ----------------------------------------------------------------------------
# Pallas kernel: fused unfold+ConvIn (both images) + normalize + correlation
# ----------------------------------------------------------------------------
def _flat_shift(x, s):
    """y[:, p] = x[:, p + s]; zero where p + s falls outside the last axis."""
    if s == 0:
        return x
    c, n = x.shape
    if s > 0:
        return jnp.concatenate([x[:, s:], jnp.zeros((c, s), x.dtype)], axis=1)
    return jnp.concatenate([jnp.zeros((c, -s), x.dtype), x[:, :n + s]], axis=1)


def _conv9(x_ref, w_ref, wcol, W):
    """unfold(3x3, pad=1) + 1x1 ConvIn, fused as 9 accumulated MXU matmuls.

    x_ref : (Cin, S) channel-major features, flat spatial S = H*W on lanes.
    w_ref : (9, Cin, Cout) per-tap weights (tap index = kh*3 + kw).
    wcol  : (1, S) int32, column index w = p % W of every flat position.
    Returns (Cout, S) float32.
    """
    x = x_ref[...]
    acc = None
    for kh in range(KK):
        for kw in range(KK):
            dh, dw = kh - 1, kw - 1
            wk = w_ref[kh * KK + kw]                       # (Cin, Cout)
            # y[o, p] = sum_c wk[c, o] * x[c, p]  -> (Cout, S), lane dense.
            y = lax.dot_general(wk, x, (((0,), (0,)), ((), ())),
                                preferred_element_type=jnp.float32)
            # shift by the tap offset in flat spatial coordinates; the flat
            # zero-fill handles the vertical (h) border, the w-mask below the
            # horizontal one (matches zero-padded unfold).
            y = _flat_shift(y, dh * W + dw)
            if dw != 0:
                valid = (wcol + dw >= 0) & (wcol + dw < W)
                y = jnp.where(valid, y, 0.0)
            acc = y if acc is None else acc + y
    return acc


def _fused_kernel(x1_ref, x2_ref, w_ref, wcol_ref,
                  cos_ref, maxv_ref, maxi_ref, gshift_ref, *, H, W):
    S = H * W
    Cout = w_ref.shape[2]
    wcol = wcol_ref[...]                                   # (1, S) int32

    # ---- ConvIn (fused 3x3 unfold + 1x1 conv) for both feature maps ---------
    f1 = _conv9(x1_ref, w_ref, wcol, W)                    # (Cout, S)
    f2 = _conv9(x2_ref, w_ref, wcol, W)                    # (Cout, S)

    # ---- L2 normalize over channels (rsqrt -> EUP).  Matches
    #      F.normalize(x, dim=1): x / max(||x||, 1e-12). ----------------------
    f1n = f1 * lax.rsqrt(jnp.maximum(jnp.sum(f1 * f1, axis=0, keepdims=True),
                                     1e-24))
    f2n = f2 * lax.rsqrt(jnp.maximum(jnp.sum(f2 * f2, axis=0, keepdims=True),
                                     1e-24))

    # ---- Pre-compute the 17 vertically displaced copies of f2n (zero fill
    #      at the h border) so the main loop needs no dynamic lane shifts. ----
    zrow = jnp.zeros((Cout, P * W), jnp.float32)
    f2v = jnp.concatenate([zrow, f2n, zrow], axis=1)       # (Cout, S + 2*P*W)
    for dyi in range(SX):
        gshift_ref[dyi] = lax.slice_in_dim(f2v, dyi * W, dyi * W + S, axis=1)

    # ---- 17x17 correlation (cosine per displacement) + running max/argmax ---
    def body(dyi, carry):
        maxv, maxi = carry
        g = gshift_ref[dyi]                                # (Cout, S)
        zc = jnp.zeros((Cout, P), jnp.float32)
        gpad = jnp.concatenate([zc, g, zc], axis=1)        # (Cout, S + 2P)
        rows = []
        for dxi in range(SX):
            dx = dxi - P
            gs = lax.slice_in_dim(gpad, dxi, dxi + S, axis=1)   # shift by dx
            r = jnp.sum(f1n * gs, axis=0, keepdims=True)        # (1, S)
            valid = (wcol + dx >= 0) & (wcol + dx < W)
            r = jnp.where(valid, r, 0.0)     # zero where displaced window is OOB
            rows.append(r)
            d = dyi * SX + dxi
            better = r > maxv
            maxv = jnp.where(better, r, maxv)
            maxi = jnp.where(better, d, maxi)
        cos_ref[dyi] = jnp.concatenate(rows, axis=0)       # (SX, S) dense store
        return maxv, maxi

    init = (jnp.full((1, S), -jnp.inf, dtype=jnp.float32),
            jnp.zeros((1, S), dtype=jnp.int32))
    maxv, maxi = lax.fori_loop(0, SX, body, init)
    maxv_ref[...] = maxv
    maxi_ref[...] = maxi


def fused_convin_correlation(x1_nchw, x2_nchw, w_conv):
    """ConvIn(unfold(x,3,pad=1)) for both inputs + normalized 17x17 correlation.

    Returns cosDis (N, 289, H, W), maxValue (N, H, W), maxIdx (N, H, W).
    cosDis is the plain cosine, i.e. corr(normalize(f1), normalize(f2)) * C
    since the Correlation layer normalizes by the channel count.
    """
    N, C, H, W = x1_nchw.shape
    Cout = w_conv.shape[0]
    S = H * W
    x1 = x1_nchw.reshape(N, C, S)            # channel-major, flat spatial (lanes)
    x2 = x2_nchw.reshape(N, C, S)
    # ConvIn weight (Cout, C*9, 1, 1); unfold channel order is (c, kh, kw).
    w = jnp.transpose(w_conv.reshape(Cout, C, KK, KK),
                      (2, 3, 1, 0)).reshape(KK * KK, C, Cout)
    wcol = (jnp.arange(S, dtype=jnp.int32) % W).reshape(1, S)

    cos4, maxv, maxi = pl.pallas_call(
        functools.partial(_fused_kernel, H=H, W=W),
        out_shape=(jax.ShapeDtypeStruct((N, SX, SX, S), jnp.float32),
                   jax.ShapeDtypeStruct((N, 1, S), jnp.float32),
                   jax.ShapeDtypeStruct((N, 1, S), jnp.int32)),
        grid_spec=pltpu.PrefetchScalarGridSpec(
            num_scalar_prefetch=0,
            grid=(N,),
            in_specs=[
                pl.BlockSpec((None, C, S), lambda n: (n, 0, 0)),
                pl.BlockSpec((None, C, S), lambda n: (n, 0, 0)),
                pl.BlockSpec((KK * KK, C, Cout), lambda n: (0, 0, 0)),
                pl.BlockSpec((1, S), lambda n: (0, 0)),
            ],
            out_specs=[
                pl.BlockSpec((None, SX, SX, S), lambda n: (n, 0, 0, 0)),
                pl.BlockSpec((None, 1, S), lambda n: (n, 0, 0)),
                pl.BlockSpec((None, 1, S), lambda n: (n, 0, 0)),
            ],
            scratch_shapes=[pltpu.VMEM((SX, Cout, S), jnp.float32)]),
        compiler_params=pltpu.CompilerParams(
            dimension_semantics=("parallel",)),
    )(x1, x2, w, wcol)

    cosDis = cos4.reshape(N, SX * SX, H, W)
    maxValue = maxv.reshape(N, H, W)
    maxIdx = maxi.reshape(N, H, W)
    return cosDis, maxValue, maxIdx


# ----------------------------------------------------------------------------
# JAX glue (unfold / fold / warp / sub-pixel offsets)
# ----------------------------------------------------------------------------
def unfold(x, k, p, s):
    """F.unfold, output reshaped to (N, C*k*k, Ho, Wo) (PyTorch channel order)."""
    N, C, H, W = x.shape
    Ho = (H + 2 * p - k) // s + 1
    Wo = (W + 2 * p - k) // s + 1
    xp = jnp.pad(x, ((0, 0), (0, 0), (p, p), (p, p)))
    patches = []
    for kh in range(k):
        for kw in range(k):
            patches.append(xp[:, :, kh:kh + s * Ho:s, kw:kw + s * Wo:s])
    out = jnp.stack(patches, axis=2)           # (N, C, k*k, Ho, Wo)
    return out.reshape(N, C * k * k, Ho, Wo)


def fold(x, output_size, k, p, s):
    """F.fold: x is (N, C*k*k, L); sums overlapping patches."""
    N, Ckk, L = x.shape
    C = Ckk // (k * k)
    Hout, Wout = output_size
    Ho = (Hout + 2 * p - k) // s + 1
    Wo = (Wout + 2 * p - k) // s + 1
    xr = x.reshape(N, C, k, k, Ho, Wo)
    out = jnp.zeros((N, C, Hout + 2 * p, Wout + 2 * p), x.dtype)
    for kh in range(k):
        for kw in range(k):
            out = out.at[:, :, kh:kh + s * Ho:s, kw:kw + s * Wo:s].add(
                xr[:, :, kh, kw])
    return out[:, :, p:p + Hout, p:p + Wout]


def bwarp(x, flo):
    """Backward warp x (N, C, H, W) by flow (N, 2, H, W); ch0 = U (x), ch1 = V (y).
    TODO(synk): bWarp is not defined in the provided source; a standard bilinear
    backward warp (grid_sample, zeros padding, align_corners=True) is assumed."""
    N, C, H, W = x.shape
    xx = jnp.arange(W, dtype=jnp.float32)[None, None, :]
    yy = jnp.arange(H, dtype=jnp.float32)[None, :, None]
    sx = xx + flo[:, 0]
    sy = yy + flo[:, 1]
    x0 = jnp.floor(sx)
    y0 = jnp.floor(sy)
    x1 = x0 + 1.0
    y1 = y0 + 1.0
    wx1 = sx - x0
    wx0 = 1.0 - wx1
    wy1 = sy - y0
    wy0 = 1.0 - wy1
    xflat = x.reshape(N, C, H * W)

    def sample(yi, xi):
        valid = ((xi >= 0) & (xi <= W - 1) &
                 (yi >= 0) & (yi <= H - 1)).astype(x.dtype)
        xc = jnp.clip(xi, 0, W - 1).astype(jnp.int32)
        yc = jnp.clip(yi, 0, H - 1).astype(jnp.int32)
        idx = (yc * W + xc).reshape(N, 1, H * W)
        g = jnp.take_along_axis(xflat, idx, axis=2).reshape(N, C, H, W)
        return g * valid[:, None, :, :]

    return (sample(y0, x0) * (wy0 * wx0)[:, None]
            + sample(y0, x1) * (wy0 * wx1)[:, None]
            + sample(y1, x0) * (wy1 * wx0)[:, None]
            + sample(y1, x1) * (wy1 * wx1)[:, None])


def max_id_to_offset(maxIdx, p):
    # NOTE: the PyTorch code does `maxIdx.int() / int(2p+1)`; the intended
    # (legacy PyTorch) semantics is integer/floor division, used here.
    U = (maxIdx % (2 * p + 1) - p).astype(jnp.float32)
    V = (maxIdx // (2 * p + 1) - p).astype(jnp.float32)
    return jnp.stack([U, V], axis=1)      # (N, 2, H, W)


def get_sub_offset(cosDis, maxIdx, subAttnConv):
    N, sxsx, H, W = cosDis.shape
    cout = subAttnConv.shape[0]           # 4  (weight shape (4, 1, 1, 3, 3))
    l2 = 2.0 - 2.0 * cosDis
    l2 = jnp.transpose(l2, (0, 2, 3, 1)).reshape(N, H * W, SX, SX)
    l2p = jnp.pad(l2, ((0, 0), (0, 0), (1, 1), (1, 1)), constant_values=2.0)
    w3 = subAttnConv.reshape(cout, 3, 3)
    ABC = jnp.zeros((N, cout, H * W, SX, SX), jnp.float32)
    for kh in range(3):
        for kw in range(3):
            ABC = ABC + (w3[:, kh, kw][None, :, None, None, None]
                         * l2p[:, None, :, kh:kh + SX, kw:kw + SX])
    ABC = ABC.reshape(N, cout, H, W, SX * SX)
    idx = jnp.broadcast_to(maxIdx[:, None, :, :, None], (N, cout, H, W, 1))
    ABCHard = jnp.take_along_axis(ABC, idx, axis=4)[..., 0]   # (N, cout, H, W)
    subOffU = jnp.clip(-ABCHard[:, 2] / jnp.maximum(ABCHard[:, 0], 1e-6),
                       -1.0, 1.0)
    subOffV = jnp.clip(-ABCHard[:, 3] / jnp.maximum(ABCHard[:, 1], 1e-6),
                       -1.0, 1.0)
    return jnp.stack([subOffU, subOffV], axis=1)


# ----------------------------------------------------------------------------
# Full forward pass (mirrors MultiScaleAttn.forward)
# ----------------------------------------------------------------------------
def multiscale_attn_forward(Kt1x, Kt2x, KVt4x, V01x, V02x, KV04x,
                            subAttnMatC, convin_w):
    del Kt1x, Kt2x                      # unused by the reference forward
    N, C, H, W = KVt4x.shape

    # Fused: unfold(3x3) + ConvIn + normalize + 17x17 correlation + max/argmax.
    cosDis4x, maxValue4x, maxIdx4x = fused_convin_correlation(
        KVt4x, KV04x, convin_w)

    S = maxValue4x.reshape(N, 1, H, W)
    hardOffset4x = max_id_to_offset(maxIdx4x, P)
    subOffset4x = get_sub_offset(cosDis4x, maxIdx4x, subAttnMatC)
    flowOff4x = hardOffset4x + subOffset4x

    KV04x_unf = unfold(KV04x, 3, 1, 1)          # (N, 9C, H, W)  (warp path)
    V02x_unf = unfold(V02x, 6, 2, 2)            # (N, C2*36, H, W)
    V01x_unf = unfold(V01x, 12, 4, 4)           # (N, C1*144, H, W)

    T4x_unf = bwarp(KV04x_unf, flowOff4x).reshape(N, -1, H * W)
    T2x_unf = bwarp(V02x_unf, flowOff4x).reshape(N, -1, H * W)
    T1x_unf = bwarp(V01x_unf, flowOff4x).reshape(N, -1, H * W)

    T4x = fold(T4x_unf, (H, W), 3, 1, 1) / 9.0
    T2x = fold(T2x_unf, (2 * H, 2 * W), 6, 2, 2) / 9.0
    T1x = fold(T1x_unf, (4 * H, 4 * W), 12, 4, 4) / 9.0
    return S, T4x, T2x, T1x


# ----------------------------------------------------------------------------
# Pure-JAX reference of the fused kernel (for a numerical self-check)
# ----------------------------------------------------------------------------
def reference_convin_correlation(x1, x2, w_conv):
    N, C, H, W = x1.shape
    Cout = w_conv.shape[0]
    w2d = w_conv.reshape(Cout, C * 9)

    def feat(x):
        u = unfold(x, 3, 1, 1).reshape(N, C * 9, H * W)
        f = jnp.einsum('ok,nkp->nop', w2d, u,
                       precision=jax.lax.Precision.HIGHEST)
        n = jnp.sqrt(jnp.sum(f * f, axis=1, keepdims=True))
        return (f / jnp.maximum(n, 1e-12)).reshape(N, Cout, H, W)

    f1n, f2n = feat(x1), feat(x2)
    f2p = jnp.pad(f2n, ((0, 0), (0, 0), (P, P), (P, P)))
    rows = []
    for dy in range(SX):
        for dx in range(SX):
            rows.append(jnp.sum(f1n * f2p[:, :, dy:dy + H, dx:dx + W], axis=1))
    return jnp.stack(rows, axis=1)      # (N, 289, H, W)


# ----------------------------------------------------------------------------
if __name__ == "__main__":
    key = jax.random.PRNGKey(0)
    ks = jax.random.split(key, 8)

    # ConvIn is nn.Conv2d(1152, 32, 1) -> input feature maps have 128 channels.
    N, C, H, W = 2, 128, 16, 16
    C2, C1 = 8, 4

    KVt4x = jax.random.normal(ks[0], (N, C, H, W), jnp.float32)
    KV04x = jax.random.normal(ks[1], (N, C, H, W), jnp.float32)
    V02x = jax.random.normal(ks[2], (N, C2, 2 * H, 2 * W), jnp.float32)
    V01x = jax.random.normal(ks[3], (N, C1, 4 * H, 4 * W), jnp.float32)
    Kt2x = jax.random.normal(ks[4], (N, C2, 2 * H, 2 * W), jnp.float32)
    Kt1x = jax.random.normal(ks[5], (N, C1, 4 * H, 4 * W), jnp.float32)

    # Deterministic parameters (synthetic, not loaded from a checkpoint).
    convin_w = jax.random.normal(ks[6], (32, 9 * C, 1, 1), jnp.float32) \
        * (1.0 / jnp.sqrt(9.0 * C))
    subAttnMatC = jax.random.normal(ks[7], (4, 1, 1, 3, 3), jnp.float32)

    # Full forward pass.
    fwd = jax.jit(multiscale_attn_forward)
    S, T4x, T2x, T1x = fwd(Kt1x, Kt2x, KVt4x, V01x, V02x, KV04x,
                           subAttnMatC, convin_w)
    for t in (S, T4x, T2x, T1x):
        jax.block_until_ready(t)

    assert S.shape == (N, 1, H, W)
    assert T4x.shape == (N, C, H, W)
    assert T2x.shape == (N, C2, 2 * H, 2 * W)
    assert T1x.shape == (N, C1, 4 * H, 4 * W)
    assert jnp.all(jnp.isfinite(S)) and jnp.all(jnp.isfinite(T4x))

    # Numerical self-check of the fused Pallas kernel vs. a pure-JAX reference.
    cosDis, maxValue, maxIdx = jax.jit(fused_convin_correlation)(
        KVt4x, KV04x, convin_w)
    cos_ref = jax.jit(reference_convin_correlation)(KVt4x, KV04x, convin_w)
    jax.block_until_ready(cos_ref)
    assert jnp.max(jnp.abs(cosDis - cos_ref)) < 5e-3
    ref_max = jnp.max(cos_ref, axis=1)
    assert jnp.max(jnp.abs(maxValue - ref_max)) < 5e-3
    picked = jnp.take_along_axis(cos_ref, maxIdx[:, None], axis=1)[:, 0]
    assert jnp.min(picked - ref_max) > -5e-3

    print("KERNEL_OK")
</pallas_src>

<mosaic_0001>
module attributes {stable_mosaic.version = 11 : i64} {
  func.func @_fused_kernel(%arg0: i32, %arg1: memref<1x128x256xf32, #tpu.memory_space<vmem>>, %arg2: memref<1x128x256xf32, #tpu.memory_space<vmem>>, %arg3: memref<9x128x32xf32, #tpu.memory_space<vmem>>, %arg4: memref<1x256xi32, #tpu.memory_space<vmem>>, %arg5: memref<1x17x17x256xf32, #tpu.memory_space<vmem>>, %arg6: memref<1x1x256xf32, #tpu.memory_space<vmem>>, %arg7: memref<1x1x256xi32, #tpu.memory_space<vmem>>, %arg8: memref<17x32x256xf32, #tpu.memory_space<vmem>>) attributes {dimension_semantics = [#tpu.dimension_semantics<parallel>], iteration_bounds = array<i64: 2>, scalar_prefetch = 0 : i64, scratch_operands = 1 : i64, tpu.core_type = #tpu.core_type<tc>, window_params = [{transform_indices = @transform_0, window_bounds = array<i64: 1, 128, 256>}, {transform_indices = @transform_1, window_bounds = array<i64: 1, 128, 256>}, {pipeline_mode = #tpu.pipeline_mode<synchronous>, transform_indices = @transform_2, window_bounds = array<i64: 9, 128, 32>}, {pipeline_mode = #tpu.pipeline_mode<synchronous>, transform_indices = @transform_3, window_bounds = array<i64: 1, 256>}, {transform_indices = @transform_4, window_bounds = array<i64: 1, 17, 17, 256>}, {transform_indices = @transform_5, window_bounds = array<i64: 1, 1, 256>}, {transform_indices = @transform_6, window_bounds = array<i64: 1, 1, 256>}]} {
    %c0 = arith.constant 0 : index
    %c0_0 = arith.constant 0 : index
    %0 = vector.load %arg4[%c0, %c0_0] : memref<1x256xi32, #tpu.memory_space<vmem>>, vector<1x256xi32>
    %c0_1 = arith.constant 0 : index
    %c0_2 = arith.constant 0 : index
    %c0_3 = arith.constant 0 : index
    %1 = vector.load %arg1[%c0_1, %c0_2, %c0_3] : memref<1x128x256xf32, #tpu.memory_space<vmem>>, vector<1x128x256xf32>
    %2 = vector.shape_cast %1 : vector<1x128x256xf32> to vector<128x256xf32>
    %c0_4 = arith.constant 0 : index
    %c0_5 = arith.constant 0 : index
    %c0_6 = arith.constant 0 : index
    %3 = vector.load %arg3[%c0_4, %c0_5, %c0_6] : memref<9x128x32xf32, #tpu.memory_space<vmem>>, vector<1x128x32xf32>
    %4 = vector.shape_cast %3 : vector<1x128x32xf32> to vector<128x32xf32>
    %cst = arith.constant dense<0.000000e+00> : vector<32x256xf32>
    %5 = tpu.matmul %4, %2, %cst {dimension_numbers = #tpu.dot_dimension_numbers<[0], [0], [1], [1], [0, 1, 1, 1], [], []>} : vector<128x32xf32>, vector<128x256xf32>, vector<32x256xf32> -> vector<32x256xf32>
    %cst_7 = arith.constant 0.000000e+00 : f32
    %6 = vector.broadcast %cst_7 : f32 to vector<32x17xf32>
    %7 = vector.extract_strided_slice %5 {offsets = [0, 0], sizes = [32, 239], strides = [1, 1]} : vector<32x256xf32> to vector<32x239xf32>
    %8 = tpu.concatenate %6, %7 in 1 : vector<32x17xf32>, vector<32x239xf32> -> vector<32x256xf32>
    %c-1_i32 = arith.constant -1 : i32
    %9 = vector.broadcast %c-1_i32 : i32 to vector<1x256xi32>
    %10 = arith.addi %0, %9 : vector<1x256xi32>
    %c0_i32 = arith.constant 0 : i32
    %11 = vector.broadcast %c0_i32 : i32 to vector<1x256xi32>
    %12 = arith.cmpi sge, %10, %11 : vector<1x256xi32>
    %c-1_i32_8 = arith.constant -1 : i32
    %13 = vector.broadcast %c-1_i32_8 : i32 to vector<1x256xi32>
    %14 = arith.addi %0, %13 : vector<1x256xi32>
    %c16_i32 = arith.constant 16 : i32
    %15 = vector.broadcast %c16_i32 : i32 to vector<1x256xi32>
    %16 = arith.cmpi slt, %14, %15 : vector<1x256xi32>
    %17 = arith.andi %12, %16 : vector<1x256xi1>
    %cst_9 = arith.constant 0.000000e+00 : f32
    %18 = vector.shape_cast %17 : vector<1x256xi1> to vector<1x256xi1>
    %19 = vector.broadcast %18 : vector<1x256xi1> to vector<32x256xi1>
    %20 = vector.broadcast %cst_9 : f32 to vector<32x256xf32>
    %21 = arith.select %19, %8, %20 : vector<32x256xi1>, vector<32x256xf32>
    %c1 = arith.constant 1 : index
    %c0_10 = arith.constant 0 : index
    %c0_11 = arith.constant 0 : index
    %22 = vector.load %arg3[%c1, %c0_10, %c0_11] : memref<9x128x32xf32, #tpu.memory_space<vmem>>, vector<1x128x32xf32>
    %23 = vector.shape_cast %22 : vector<1x128x32xf32> to vector<128x32xf32>
    %cst_12 = arith.constant dense<0.000000e+00> : vector<32x256xf32>
    %24 = tpu.matmul %23, %2, %cst_12 {dimension_numbers = #tpu.dot_dimension_numbers<[0], [0], [1], [1], [0, 1, 1, 1], [], []>} : vector<128x32xf32>, vector<128x256xf32>, vector<32x256xf32> -> vector<32x256xf32>
    %cst_13 = arith.constant 0.000000e+00 : f32
    %25 = vector.broadcast %cst_13 : f32 to vector<32x16xf32>
    %26 = vector.extract_strided_slice %24 {offsets = [0, 0], sizes = [32, 240], strides = [1, 1]} : vector<32x256xf32> to vector<32x240xf32>
    %27 = tpu.concatenate %25, %26 in 1 : vector<32x16xf32>, vector<32x240xf32> -> vector<32x256xf32>
    %28 = arith.addf %21, %27 : vector<32x256xf32>
    %c2 = arith.constant 2 : index
    %c0_14 = arith.constant 0 : index
    %c0_15 = arith.constant 0 : index
    %29 = vector.load %arg3[%c2, %c0_14, %c0_15] : memref<9x128x32xf32, #tpu.memory_space<vmem>>, vector<1x128x32xf32>
    %30 = vector.shape_cast %29 : vector<1x128x32xf32> to vector<128x32xf32>
    %cst_16 = arith.constant dense<0.000000e+00> : vector<32x256xf32>
    %31 = tpu.matmul %30, %2, %cst_16 {dimension_numbers = #tpu.dot_dimension_numbers<[0], [0], [1], [1], [0, 1, 1, 1], [], []>} : vector<128x32xf32>, vector<128x256xf32>, vector<32x256xf32> -> vector<32x256xf32>
    %cst_17 = arith.constant 0.000000e+00 : f32
    %32 = vector.broadcast %cst_17 : f32 to vector<32x15xf32>
    %33 = vector.extract_strided_slice %31 {offsets = [0, 0], sizes = [32, 241], strides = [1, 1]} : vector<32x256xf32> to vector<32x241xf32>
    %34 = tpu.concatenate %32, %33 in 1 : vector<32x15xf32>, vector<32x241xf32> -> vector<32x256xf32>
    %c1_i32 = arith.constant 1 : i32
    %35 = vector.broadcast %c1_i32 : i32 to vector<1x256xi32>
    %36 = arith.addi %0, %35 : vector<1x256xi32>
    %c0_i32_18 = arith.constant 0 : i32
    %37 = vector.broadcast %c0_i32_18 : i32 to vector<1x256xi32>
    %38 = arith.cmpi sge, %36, %37 : vector<1x256xi32>
    %c1_i32_19 = arith.constant 1 : i32
    %39 = vector.broadcast %c1_i32_19 : i32 to vector<1x256xi32>
    %40 = arith.addi %0, %39 : vector<1x256xi32>
    %c16_i32_20 = arith.constant 16 : i32
    %41 = vector.broadcast %c16_i32_20 : i32 to vector<1x256xi32>
    %42 = arith.cmpi slt, %40, %41 : vector<1x256xi32>
    %43 = arith.andi %38, %42 : vector<1x256xi1>
    %cst_21 = arith.constant 0.000000e+00 : f32
    %44 = vector.shape_cast %43 : vector<1x256xi1> to vector<1x256xi1>
    %45 = vector.broadcast %44 : vector<1x256xi1> to vector<32x256xi1>
    %46 = vector.broadcast %cst_21 : f32 to vector<32x256xf32>
    %47 = arith.select %45, %34, %46 : vector<32x256xi1>, vector<32x256xf32>
    %48 = arith.addf %28, %47 : vector<32x256xf32>
    %c3 = arith.constant 3 : index
    %c0_22 = arith.constant 0 : index
    %c0_23 = arith.constant 0 : index
    %49 = vector.load %arg3[%c3, %c0_22, %c0_23] : memref<9x128x32xf32, #tpu.memory_space<vmem>>, vector<1x128x32xf32>
    %50 = vector.shape_cast %49 : vector<1x128x32xf32> to vector<128x32xf32>
    %cst_24 = arith.constant dense<0.000000e+00> : vector<32x256xf32>
    %51 = tpu.matmul %50, %2, %cst_24 {dimension_numbers = #tpu.dot_dimension_numbers<[0], [0], [1], [1], [0, 1, 1, 1], [], []>} : vector<128x32xf32>, vector<128x256xf32>, vector<32x256xf32> -> vector<32x256xf32>
    %cst_25 = arith.constant 0.000000e+00 : f32
    %52 = vector.broadcast %cst_25 : f32 to vector<32x1xf32>
    %53 = vector.extract_strided_slice %51 {offsets = [0, 0], sizes = [32, 255], strides = [1, 1]} : vector<32x256xf32> to vector<32x255xf32>
    %54 = tpu.concatenate %52, %53 in 1 : vector<32x1xf32>, vector<32x255xf32> -> vector<32x256xf32>
    %c-1_i32_26 = arith.constant -1 : i32
    %55 = vector.broadcast %c-1_i32_26 : i32 to vector<1x256xi32>
    %56 = arith.addi %0, %55 : vector<1x256xi32>
    %c0_i32_27 = arith.constant 0 : i32
    %57 = vector.broadcast %c0_i32_27 : i32 to vector<1x256xi32>
    %58 = arith.cmpi sge, %56, %57 : vector<1x256xi32>
    %c-1_i32_28 = arith.constant -1 : i32
    %59 = vector.broadcast %c-1_i32_28 : i32 to vector<1x256xi32>
    %60 = arith.addi %0, %59 : vector<1x256xi32>
    %c16_i32_29 = arith.constant 16 : i32
    %61 = vector.broadcast %c16_i32_29 : i32 to vector<1x256xi32>
    %62 = arith.cmpi slt, %60, %61 : vector<1x256xi32>
    %63 = arith.andi %58, %62 : vector<1x256xi1>
    %cst_30 = arith.constant 0.000000e+00 : f32
    %64 = vector.shape_cast %63 : vector<1x256xi1> to vector<1x256xi1>
    %65 = vector.broadcast %64 : vector<1x256xi1> to vector<32x256xi1>
    %66 = vector.broadcast %cst_30 : f32 to vector<32x256xf32>
    %67 = arith.select %65, %54, %66 : vector<32x256xi1>, vector<32x256xf32>
    %68 = arith.addf %48, %67 : vector<32x256xf32>
    %c4 = arith.constant 4 : index
    %c0_31 = arith.constant 0 : index
    %c0_32 = arith.constant 0 : index
    %69 = vector.load %arg3[%c4, %c0_31, %c0_32] : memref<9x128x32xf32, #tpu.memory_space<vmem>>, vector<1x128x32xf32>
    %70 = vector.shape_cast %69 : vector<1x128x32xf32> to vector<128x32xf32>
    %cst_33 = arith.constant dense<0.000000e+00> : vector<32x256xf32>
    %71 = tpu.matmul %70, %2, %cst_33 {dimension_numbers = #tpu.dot_dimension_numbers<[0], [0], [1], [1], [0, 1, 1, 1], [], []>} : vector<128x32xf32>, vector<128x256xf32>, vector<32x256xf32> -> vector<32x256xf32>
    %72 = arith.addf %68, %71 : vector<32x256xf32>
    %c5 = arith.constant 5 : index
    %c0_34 = arith.constant 0 : index
    %c0_35 = arith.constant 0 : index
    %73 = vector.load %arg3[%c5, %c0_34, %c0_35] : memref<9x128x32xf32, #tpu.memory_space<vmem>>, vector<1x128x32xf32>
    %74 = vector.shape_cast %73 : vector<1x128x32xf32> to vector<128x32xf32>
    %cst_36 = arith.constant dense<0.000000e+00> : vector<32x256xf32>
    %75 = tpu.matmul %74, %2, %cst_36 {dimension_numbers = #tpu.dot_dimension_numbers<[0], [0], [1], [1], [0, 1, 1, 1], [], []>} : vector<128x32xf32>, vector<128x256xf32>, vector<32x256xf32> -> vector<32x256xf32>
    %76 = vector.extract_strided_slice %75 {offsets = [0, 1], sizes = [32, 255], strides = [1, 1]} : vector<32x256xf32> to vector<32x255xf32>
    %cst_37 = arith.constant 0.000000e+00 : f32
    %77 = vector.broadcast %cst_37 : f32 to vector<32x1xf32>
    %78 = tpu.concatenate %76, %77 in 1 : vector<32x255xf32>, vector<32x1xf32> -> vector<32x256xf32>
    %c1_i32_38 = arith.constant 1 : i32
    %79 = vector.broadcast %c1_i32_38 : i32 to vector<1x256xi32>
    %80 = arith.addi %0, %79 : vector<1x256xi32>
    %c0_i32_39 = arith.constant 0 : i32
    %81 = vector.broadcast %c0_i32_39 : i32 to vector<1x256xi32>
    %82 = arith.cmpi sge, %80, %81 : vector<1x256xi32>
    %c1_i32_40 = arith.constant 1 : i32
    %83 = vector.broadcast %c1_i32_40 : i32 to vector<1x256xi32>
    %84 = arith.addi %0, %83 : vector<1x256xi32>
    %c16_i32_41 = arith.constant 16 : i32
    %85 = vector.broadcast %c16_i32_41 : i32 to vector<1x256xi32>
    %86 = arith.cmpi slt, %84, %85 : vector<1x256xi32>
    %87 = arith.andi %82, %86 : vector<1x256xi1>
    %cst_42 = arith.constant 0.000000e+00 : f32
    %88 = vector.shape_cast %87 : vector<1x256xi1> to vector<1x256xi1>
    %89 = vector.broadcast %88 : vector<1x256xi1> to vector<32x256xi1>
    %90 = vector.broadcast %cst_42 : f32 to vector<32x256xf32>
    %91 = arith.select %89, %78, %90 : vector<32x256xi1>, vector<32x256xf32>
    %92 = arith.addf %72, %91 : vector<32x256xf32>
    %c6 = arith.constant 6 : index
    %c0_43 = arith.constant 0 : index
    %c0_44 = arith.constant 0 : index
    %93 = vector.load %arg3[%c6, %c0_43, %c0_44] : memref<9x128x32xf32, #tpu.memory_space<vmem>>, vector<1x128x32xf32>
    %94 = vector.shape_cast %93 : vector<1x128x32xf32> to vector<128x32xf32>
    %cst_45 = arith.constant dense<0.000000e+00> : vector<32x256xf32>
    %95 = tpu.matmul %94, %2, %cst_45 {dimension_numbers = #tpu.dot_dimension_numbers<[0], [0], [1], [1], [0, 1, 1, 1], [], []>} : vector<128x32xf32>, vector<128x256xf32>, vector<32x256xf32> -> vector<32x256xf32>
    %96 = vector.extract_strided_slice %95 {offsets = [0, 15], sizes = [32, 241], strides = [1, 1]} : vector<32x256xf32> to vector<32x241xf32>
    %cst_46 = arith.constant 0.000000e+00 : f32
    %97 = vector.broadcast %cst_46 : f32 to vector<32x15xf32>
    %98 = tpu.concatenate %96, %97 in 1 : vector<32x241xf32>, vector<32x15xf32> -> vector<32x256xf32>
    %c-1_i32_47 = arith.constant -1 : i32
    %99 = vector.broadcast %c-1_i32_47 : i32 to vector<1x256xi32>
    %100 = arith.addi %0, %99 : vector<1x256xi32>
    %c0_i32_48 = arith.constant 0 : i32
    %101 = vector.broadcast %c0_i32_48 : i32 to vector<1x256xi32>
    %102 = arith.cmpi sge, %100, %101 : vector<1x256xi32>
    %c-1_i32_49 = arith.constant -1 : i32
    %103 = vector.broadcast %c-1_i32_49 : i32 to vector<1x256xi32>
    %104 = arith.addi %0, %103 : vector<1x256xi32>
    %c16_i32_50 = arith.constant 16 : i32
    %105 = vector.broadcast %c16_i32_50 : i32 to vector<1x256xi32>
    %106 = arith.cmpi slt, %104, %105 : vector<1x256xi32>
    %107 = arith.andi %102, %106 : vector<1x256xi1>
    %cst_51 = arith.constant 0.000000e+00 : f32
    %108 = vector.shape_cast %107 : vector<1x256xi1> to vector<1x256xi1>
    %109 = vector.broadcast %108 : vector<1x256xi1> to vector<32x256xi1>
    %110 = vector.broadcast %cst_51 : f32 to vector<32x256xf32>
    %111 = arith.select %109, %98, %110 : vector<32x256xi1>, vector<32x256xf32>
    %112 = arith.addf %92, %111 : vector<32x256xf32>
    %c7 = arith.constant 7 : index
    %c0_52 = arith.constant 0 : index
    %c0_53 = arith.constant 0 : index
    %113 = vector.load %arg3[%c7, %c0_52, %c0_53] : memref<9x128x32xf32, #tpu.memory_space<vmem>>, vector<1x128x32xf32>
    %114 = vector.shape_cast %113 : vector<1x128x32xf32> to vector<128x32xf32>
    %cst_54 = arith.constant dense<0.000000e+00> : vector<32x256xf32>
    %115 = tpu.matmul %114, %2, %cst_54 {dimension_numbers = #tpu.dot_dimension_numbers<[0], [0], [1], [1], [0, 1, 1, 1], [], []>} : vector<128x32xf32>, vector<128x256xf32>, vector<32x256xf32> -> vector<32x256xf32>
    %116 = vector.extract_strided_slice %115 {offsets = [0, 16], sizes = [32, 240], strides = [1, 1]} : vector<32x256xf32> to vector<32x240xf32>
    %cst_55 = arith.constant 0.000000e+00 : f32
    %117 = vector.broadcast %cst_55 : f32 to vector<32x16xf32>
    %118 = tpu.concatenate %116, %117 in 1 : vector<32x240xf32>, vector<32x16xf32> -> vector<32x256xf32>
    %119 = arith.addf %112, %118 : vector<32x256xf32>
    %c8 = arith.constant 8 : index
    %c0_56 = arith.constant 0 : index
    %c0_57 = arith.constant 0 : index
    %120 = vector.load %arg3[%c8, %c0_56, %c0_57] : memref<9x128x32xf32, #tpu.memory_space<vmem>>, vector<1x128x32xf32>
    %121 = vector.shape_cast %120 : vector<1x128x32xf32> to vector<128x32xf32>
    %cst_58 = arith.constant dense<0.000000e+00> : vector<32x256xf32>
    %122 = tpu.matmul %121, %2, %cst_58 {dimension_numbers = #tpu.dot_dimension_numbers<[0], [0], [1], [1], [0, 1, 1, 1], [], []>} : vector<128x32xf32>, vector<128x256xf32>, vector<32x256xf32> -> vector<32x256xf32>
    %123 = vector.extract_strided_slice %122 {offsets = [0, 17], sizes = [32, 239], strides = [1, 1]} : vector<32x256xf32> to vector<32x239xf32>
    %cst_59 = arith.constant 0.000000e+00 : f32
    %124 = vector.broadcast %cst_59 : f32 to vector<32x17xf32>
    %125 = tpu.concatenate %123, %124 in 1 : vector<32x239xf32>, vector<32x17xf32> -> vector<32x256xf32>
    %c1_i32_60 = arith.constant 1 : i32
    %126 = vector.broadcast %c1_i32_60 : i32 to vector<1x256xi32>
    %127 = arith.addi %0, %126 : vector<1x256xi32>
    %c0_i32_61 = arith.constant 0 : i32
    %128 = vector.broadcast %c0_i32_61 : i32 to vector<1x256xi32>
    %129 = arith.cmpi sge, %127, %128 : vector<1x256xi32>
    %c1_i32_62 = arith.constant 1 : i32
    %130 = vector.broadcast %c1_i32_62 : i32 to vector<1x256xi32>
    %131 = arith.addi %0, %130 : vector<1x256xi32>
    %c16_i32_63 = arith.constant 16 : i32
    %132 = vector.broadcast %c16_i32_63 : i32 to vector<1x256xi32>
    %133 = arith.cmpi slt, %131, %132 : vector<1x256xi32>
    %134 = arith.andi %129, %133 : vector<1x256xi1>
    %cst_64 = arith.constant 0.000000e+00 : f32
    %135 = vector.shape_cast %134 : vector<1x256xi1> to vector<1x256xi1>
    %136 = vector.broadcast %135 : vector<1x256xi1> to vector<32x256xi1>
    %137 = vector.broadcast %cst_64 : f32 to vector<32x256xf32>
    %138 = arith.select %136, %125, %137 : vector<32x256xi1>, vector<32x256xf32>
    %139 = arith.addf %119, %138 : vector<32x256xf32>
    %c0_65 = arith.constant 0 : index
    %c0_66 = arith.constant 0 : index
    %c0_67 = arith.constant 0 : index
    %140 = vector.load %arg2[%c0_65, %c0_66, %c0_67] : memref<1x128x256xf32, #tpu.memory_space<vmem>>, vector<1x128x256xf32>
    %141 = vector.shape_cast %140 : vector<1x128x256xf32> to vector<128x256xf32>
    %c0_68 = arith.constant 0 : index
    %c0_69 = arith.constant 0 : index
    %c0_70 = arith.constant 0 : index
    %142 = vector.load %arg3[%c0_68, %c0_69, %c0_70] : memref<9x128x32xf32, #tpu.memory_space<vmem>>, vector<1x128x32xf32>
    %143 = vector.shape_cast %142 : vector<1x128x32xf32> to vector<128x32xf32>
    %cst_71 = arith.constant dense<0.000000e+00> : vector<32x256xf32>
    %144 = tpu.matmul %143, %141, %cst_71 {dimension_numbers = #tpu.dot_dimension_numbers<[0], [0], [1], [1], [0, 1, 1, 1], [], []>} : vector<128x32xf32>, vector<128x256xf32>, vector<32x256xf32> -> vector<32x256xf32>
    %cst_72 = arith.constant 0.000000e+00 : f32
    %145 = vector.broadcast %cst_72 : f32 to vector<32x17xf32>
    %146 = vector.extract_strided_slice %144 {offsets = [0, 0], sizes = [32, 239], strides = [1, 1]} : vector<32x256xf32> to vector<32x239xf32>
    %147 = tpu.concatenate %145, %146 in 1 : vector<32x17xf32>, vector<32x239xf32> -> vector<32x256xf32>
    %c-1_i32_73 = arith.constant -1 : i32
    %148 = vector.broadcast %c-1_i32_73 : i32 to vector<1x256xi32>
    %149 = arith.addi %0, %148 : vector<1x256xi32>
    %c0_i32_74 = arith.constant 0 : i32
    %150 = vector.broadcast %c0_i32_74 : i32 to vector<1x256xi32>
    %151 = arith.cmpi sge, %149, %150 : vector<1x256xi32>
    %c-1_i32_75 = arith.constant -1 : i32
    %152 = vector.broadcast %c-1_i32_75 : i32 to vector<1x256xi32>
    %153 = arith.addi %0, %152 : vector<1x256xi32>
    %c16_i32_76 = arith.constant 16 : i32
    %154 = vector.broadcast %c16_i32_76 : i32 to vector<1x256xi32>
    %155 = arith.cmpi slt, %153, %154 : vector<1x256xi32>
    %156 = arith.andi %151, %155 : vector<1x256xi1>
    %cst_77 = arith.constant 0.000000e+00 : f32
    %157 = vector.shape_cast %156 : vector<1x256xi1> to vector<1x256xi1>
    %158 = vector.broadcast %157 : vector<1x256xi1> to vector<32x256xi1>
    %159 = vector.broadcast %cst_77 : f32 to vector<32x256xf32>
    %160 = arith.select %158, %147, %159 : vector<32x256xi1>, vector<32x256xf32>
    %c1_78 = arith.constant 1 : index
    %c0_79 = arith.constant 0 : index
    %c0_80 = arith.constant 0 : index
    %161 = vector.load %arg3[%c1_78, %c0_79, %c0_80] : memref<9x128x32xf32, #tpu.memory_space<vmem>>, vector<1x128x32xf32>
    %162 = vector.shape_cast %161 : vector<1x128x32xf32> to vector<128x32xf32>
    %cst_81 = arith.constant dense<0.000000e+00> : vector<32x256xf32>
    %163 = tpu.matmul %162, %141, %cst_81 {dimension_numbers = #tpu.dot_dimension_numbers<[0], [0], [1], [1], [0, 1, 1, 1], [], []>} : vector<128x32xf32>, vector<128x256xf32>, vector<32x256xf32> -> vector<32x256xf32>
    %cst_82 = arith.constant 0.000000e+00 : f32
    %164 = vector.broadcast %cst_82 : f32 to vector<32x16xf32>
    %165 = vector.extract_strided_slice %163 {offsets = [0, 0], sizes = [32, 240], strides = [1, 1]} : vector<32x256xf32> to vector<32x240xf32>
    %166 = tpu.concatenate %164, %165 in 1 : vector<32x16xf32>, vector<32x240xf32> -> vector<32x256xf32>
    %167 = arith.addf %160, %166 : vector<32x256xf32>
    %c2_83 = arith.constant 2 : index
    %c0_84 = arith.constant 0 : index
    %c0_85 = arith.constant 0 : index
    %168 = vector.load %arg3[%c2_83, %c0_84, %c0_85] : memref<9x128x32xf32, #tpu.memory_space<vmem>>, vector<1x128x32xf32>
    %169 = vector.shape_cast %168 : vector<1x128x32xf32> to vector<128x32xf32>
    %cst_86 = arith.constant dense<0.000000e+00> : vector<32x256xf32>
    %170 = tpu.matmul %169, %141, %cst_86 {dimension_numbers = #tpu.dot_dimension_numbers<[0], [0], [1], [1], [0, 1, 1, 1], [], []>} : vector<128x32xf32>, vector<128x256xf32>, vector<32x256xf32> -> vector<32x256xf32>
    %cst_87 = arith.constant 0.000000e+00 : f32
    %171 = vector.broadcast %cst_87 : f32 to vector<32x15xf32>
    %172 = vector.extract_strided_slice %170 {offsets = [0, 0], sizes = [32, 241], strides = [1, 1]} : vector<32x256xf32> to vector<32x241xf32>
    %173 = tpu.concatenate %171, %172 in 1 : vector<32x15xf32>, vector<32x241xf32> -> vector<32x256xf32>
    %c1_i32_88 = arith.constant 1 : i32
    %174 = vector.broadcast %c1_i32_88 : i32 to vector<1x256xi32>
    %175 = arith.addi %0, %174 : vector<1x256xi32>
    %c0_i32_89 = arith.constant 0 : i32
    %176 = vector.broadcast %c0_i32_89 : i32 to vector<1x256xi32>
    %177 = arith.cmpi sge, %175, %176 : vector<1x256xi32>
    %c1_i32_90 = arith.constant 1 : i32
    %178 = vector.broadcast %c1_i32_90 : i32 to vector<1x256xi32>
    %179 = arith.addi %0, %178 : vector<1x256xi32>
    %c16_i32_91 = arith.constant 16 : i32
    %180 = vector.broadcast %c16_i32_91 : i32 to vector<1x256xi32>
    %181 = arith.cmpi slt, %179, %180 : vector<1x256xi32>
    %182 = arith.andi %177, %181 : vector<1x256xi1>
    %cst_92 = arith.constant 0.000000e+00 : f32
    %183 = vector.shape_cast %182 : vector<1x256xi1> to vector<1x256xi1>
    %184 = vector.broadcast %183 : vector<1x256xi1> to vector<32x256xi1>
    %185 = vector.broadcast %cst_92 : f32 to vector<32x256xf32>
    %186 = arith.select %184, %173, %185 : vector<32x256xi1>, vector<32x256xf32>
    %187 = arith.addf %167, %186 : vector<32x256xf32>
    %c3_93 = arith.constant 3 : index
    %c0_94 = arith.constant 0 : index
    %c0_95 = arith.constant 0 : index
    %188 = vector.load %arg3[%c3_93, %c0_94, %c0_95] : memref<9x128x32xf32, #tpu.memory_space<vmem>>, vector<1x128x32xf32>
    %189 = vector.shape_cast %188 : vector<1x128x32xf32> to vector<128x32xf32>
    %cst_96 = arith.constant dense<0.000000e+00> : vector<32x256xf32>
    %190 = tpu.matmul %189, %141, %cst_96 {dimension_numbers = #tpu.dot_dimension_numbers<[0], [0], [1], [1], [0, 1, 1, 1], [], []>} : vector<128x32xf32>, vector<128x256xf32>, vector<32x256xf32> -> vector<32x256xf32>
    %cst_97 = arith.constant 0.000000e+00 : f32
    %191 = vector.broadcast %cst_97 : f32 to vector<32x1xf32>
    %192 = vector.extract_strided_slice %190 {offsets = [0, 0], sizes = [32, 255], strides = [1, 1]} : vector<32x256xf32> to vector<32x255xf32>
    %193 = tpu.concatenate %191, %192 in 1 : vector<32x1xf32>, vector<32x255xf32> -> vector<32x256xf32>
    %c-1_i32_98 = arith.constant -1 : i32
    %194 = vector.broadcast %c-1_i32_98 : i32 to vector<1x256xi32>
    %195 = arith.addi %0, %194 : vector<1x256xi32>
    %c0_i32_99 = arith.constant 0 : i32
    %196 = vector.broadcast %c0_i32_99 : i32 to vector<1x256xi32>
    %197 = arith.cmpi sge, %195, %196 : vector<1x256xi32>
    %c-1_i32_100 = arith.constant -1 : i32
    %198 = vector.broadcast %c-1_i32_100 : i32 to vector<1x256xi32>
    %199 = arith.addi %0, %198 : vector<1x256xi32>
    %c16_i32_101 = arith.constant 16 : i32
    %200 = vector.broadcast %c16_i32_101 : i32 to vector<1x256xi32>
    %201 = arith.cmpi slt, %199, %200 : vector<1x256xi32>
    %202 = arith.andi %197, %201 : vector<1x256xi1>
    %cst_102 = arith.constant 0.000000e+00 : f32
    %203 = vector.shape_cast %202 : vector<1x256xi1> to vector<1x256xi1>
    %204 = vector.broadcast %203 : vector<1x256xi1> to vector<32x256xi1>
    %205 = vector.broadcast %cst_102 : f32 to vector<32x256xf32>
    %206 = arith.select %204, %193, %205 : vector<32x256xi1>, vector<32x256xf32>
    %207 = arith.addf %187, %206 : vector<32x256xf32>
    %c4_103 = arith.constant 4 : index
    %c0_104 = arith.constant 0 : index
    %c0_105 = arith.constant 0 : index
    %208 = vector.load %arg3[%c4_103, %c0_104, %c0_105] : memref<9x128x32xf32, #tpu.memory_space<vmem>>, vector<1x128x32xf32>
    %209 = vector.shape_cast %208 : vector<1x128x32xf32> to vector<128x32xf32>
    %cst_106 = arith.constant dense<0.000000e+00> : vector<32x256xf32>
    %210 = tpu.matmul %209, %141, %cst_106 {dimension_numbers = #tpu.dot_dimension_numbers<[0], [0], [1], [1], [0, 1, 1, 1], [], []>} : vector<128x32xf32>, vector<128x256xf32>, vector<32x256xf32> -> vector<32x256xf32>
    %211 = arith.addf %207, %210 : vector<32x256xf32>
    %c5_107 = arith.constant 5 : index
    %c0_108 = arith.constant 0 : index
    %c0_109 = arith.constant 0 : index
    %212 = vector.load %arg3[%c5_107, %c0_108, %c0_109] : memref<9x128x32xf32, #tpu.memory_space<vmem>>, vector<1x128x32xf32>
    %213 = vector.shape_cast %212 : vector<1x128x32xf32> to vector<128x32xf32>
    %cst_110 = arith.constant dense<0.000000e+00> : vector<32x256xf32>
    %214 = tpu.matmul %213, %141, %cst_110 {dimension_numbers = #tpu.dot_dimension_numbers<[0], [0], [1], [1], [0, 1, 1, 1], [], []>} : vector<128x32xf32>, vector<128x256xf32>, vector<32x256xf32> -> vector<32x256xf32>
    %215 = vector.extract_strided_slice %214 {offsets = [0, 1], sizes = [32, 255], strides = [1, 1]} : vector<32x256xf32> to vector<32x255xf32>
    %cst_111 = arith.constant 0.000000e+00 : f32
    %216 = vector.broadcast %cst_111 : f32 to vector<32x1xf32>
    %217 = tpu.concatenate %215, %216 in 1 : vector<32x255xf32>, vector<32x1xf32> -> vector<32x256xf32>
    %c1_i32_112 = arith.constant 1 : i32
    %218 = vector.broadcast %c1_i32_112 : i32 to vector<1x256xi32>
    %219 = arith.addi %0, %218 : vector<1x256xi32>
    %c0_i32_113 = arith.constant 0 : i32
    %220 = vector.broadcast %c0_i32_113 : i32 to vector<1x256xi32>
    %221 = arith.cmpi sge, %219, %220 : vector<1x256xi32>
    %c1_i32_114 = arith.constant 1 : i32
    %222 = vector.broadcast %c1_i32_114 : i32 to vector<1x256xi32>
    %223 = arith.addi %0, %222 : vector<1x256xi32>
    %c16_i32_115 = arith.constant 16 : i32
    %224 = vector.broadcast %c16_i32_115 : i32 to vector<1x256xi32>
    %225 = arith.cmpi slt, %223, %224 : vector<1x256xi32>
    %226 = arith.andi %221, %225 : vector<1x256xi1>
    %cst_116 = arith.constant 0.000000e+00 : f32
    %227 = vector.shape_cast %226 : vector<1x256xi1> to vector<1x256xi1>
    %228 = vector.broadcast %227 : vector<1x256xi1> to vector<32x256xi1>
    %229 = vector.broadcast %cst_116 : f32 to vector<32x256xf32>
    %230 = arith.select %228, %217, %229 : vector<32x256xi1>, vector<32x256xf32>
    %231 = arith.addf %211, %230 : vector<32x256xf32>
    %c6_117 = arith.constant 6 : index
    %c0_118 = arith.constant 0 : index
    %c0_119 = arith.constant 0 : index
    %232 = vector.load %arg3[%c6_117, %c0_118, %c0_119] : memref<9x128x32xf32, #tpu.memory_space<vmem>>, vector<1x128x32xf32>
    %233 = vector.shape_cast %232 : vector<1x128x32xf32> to vector<128x32xf32>
    %cst_120 = arith.constant dense<0.000000e+00> : vector<32x256xf32>
    %234 = tpu.matmul %233, %141, %cst_120 {dimension_numbers = #tpu.dot_dimension_numbers<[0], [0], [1], [1], [0, 1, 1, 1], [], []>} : vector<128x32xf32>, vector<128x256xf32>, vector<32x256xf32> -> vector<32x256xf32>
    %235 = vector.extract_strided_slice %234 {offsets = [0, 15], sizes = [32, 241], strides = [1, 1]} : vector<32x256xf32> to vector<32x241xf32>
    %cst_121 = arith.constant 0.000000e+00 : f32
    %236 = vector.broadcast %cst_121 : f32 to vector<32x15xf32>
    %237 = tpu.concatenate %235, %236 in 1 : vector<32x241xf32>, vector<32x15xf32> -> vector<32x256xf32>
    %c-1_i32_122 = arith.constant -1 : i32
    %238 = vector.broadcast %c-1_i32_122 : i32 to vector<1x256xi32>
    %239 = arith.addi %0, %238 : vector<1x256xi32>
    %c0_i32_123 = arith.constant 0 : i32
    %240 = vector.broadcast %c0_i32_123 : i32 to vector<1x256xi32>
    %241 = arith.cmpi sge, %239, %240 : vector<1x256xi32>
    %c-1_i32_124 = arith.constant -1 : i32
    %242 = vector.broadcast %c-1_i32_124 : i32 to vector<1x256xi32>
    %243 = arith.addi %0, %242 : vector<1x256xi32>
    %c16_i32_125 = arith.constant 16 : i32
    %244 = vector.broadcast %c16_i32_125 : i32 to vector<1x256xi32>
    %245 = arith.cmpi slt, %243, %244 : vector<1x256xi32>
    %246 = arith.andi %241, %245 : vector<1x256xi1>
    %cst_126 = arith.constant 0.000000e+00 : f32
    %247 = vector.shape_cast %246 : vector<1x256xi1> to vector<1x256xi1>
    %248 = vector.broadcast %247 : vector<1x256xi1> to vector<32x256xi1>
    %249 = vector.broadcast %cst_126 : f32 to vector<32x256xf32>
    %250 = arith.select %248, %237, %249 : vector<32x256xi1>, vector<32x256xf32>
    %251 = arith.addf %231, %250 : vector<32x256xf32>
    %c7_127 = arith.constant 7 : index
    %c0_128 = arith.constant 0 : index
    %c0_129 = arith.constant 0 : index
    %252 = vector.load %arg3[%c7_127, %c0_128, %c0_129] : memref<9x128x32xf32, #tpu.memory_space<vmem>>, vector<1x128x32xf32>
    %253 = vector.shape_cast %252 : vector<1x128x32xf32> to vector<128x32xf32>
    %cst_130 = arith.constant dense<0.000000e+00> : vector<32x256xf32>
    %254 = tpu.matmul %253, %141, %cst_130 {dimension_numbers = #tpu.dot_dimension_numbers<[0], [0], [1], [1], [0, 1, 1, 1], [], []>} : vector<128x32xf32>, vector<128x256xf32>, vector<32x256xf32> -> vector<32x256xf32>
    %255 = vector.extract_strided_slice %254 {offsets = [0, 16], sizes = [32, 240], strides = [1, 1]} : vector<32x256xf32> to vector<32x240xf32>
    %cst_131 = arith.constant 0.000000e+00 : f32
    %256 = vector.broadcast %cst_131 : f32 to vector<32x16xf32>
    %257 = tpu.concatenate %255, %256 in 1 : vector<32x240xf32>, vector<32x16xf32> -> vector<32x256xf32>
    %258 = arith.addf %251, %257 : vector<32x256xf32>
    %c8_132 = arith.constant 8 : index
    %c0_133 = arith.constant 0 : index
    %c0_134 = arith.constant 0 : index
    %259 = vector.load %arg3[%c8_132, %c0_133, %c0_134] : memref<9x128x32xf32, #tpu.memory_space<vmem>>, vector<1x128x32xf32>
    %260 = vector.shape_cast %259 : vector<1x128x32xf32> to vector<128x32xf32>
    %cst_135 = arith.constant dense<0.000000e+00> : vector<32x256xf32>
    %261 = tpu.matmul %260, %141, %cst_135 {dimension_numbers = #tpu.dot_dimension_numbers<[0], [0], [1], [1], [0, 1, 1, 1], [], []>} : vector<128x32xf32>, vector<128x256xf32>, vector<32x256xf32> -> vector<32x256xf32>
    %262 = vector.extract_strided_slice %261 {offsets = [0, 17], sizes = [32, 239], strides = [1, 1]} : vector<32x256xf32> to vector<32x239xf32>
    %cst_136 = arith.constant 0.000000e+00 : f32
    %263 = vector.broadcast %cst_136 : f32 to vector<32x17xf32>
    %264 = tpu.concatenate %262, %263 in 1 : vector<32x239xf32>, vector<32x17xf32> -> vector<32x256xf32>
    %c1_i32_137 = arith.constant 1 : i32
    %265 = vector.broadcast %c1_i32_137 : i32 to vector<1x256xi32>
    %266 = arith.addi %0, %265 : vector<1x256xi32>
    %c0_i32_138 = arith.constant 0 : i32
    %267 = vector.broadcast %c0_i32_138 : i32 to vector<1x256xi32>
    %268 = arith.cmpi sge, %266, %267 : vector<1x256xi32>
    %c1_i32_139 = arith.constant 1 : i32
    %269 = vector.broadcast %c1_i32_139 : i32 to vector<1x256xi32>
    %270 = arith.addi %0, %269 : vector<1x256xi32>
    %c16_i32_140 = arith.constant 16 : i32
    %271 = vector.broadcast %c16_i32_140 : i32 to vector<1x256xi32>
    %272 = arith.cmpi slt, %270, %271 : vector<1x256xi32>
    %273 = arith.andi %268, %272 : vector<1x256xi1>
    %cst_141 = arith.constant 0.000000e+00 : f32
    %274 = vector.shape_cast %273 : vector<1x256xi1> to vector<1x256xi1>
    %275 = vector.broadcast %274 : vector<1x256xi1> to vector<32x256xi1>
    %276 = vector.broadcast %cst_141 : f32 to vector<32x256xf32>
    %277 = arith.select %275, %264, %276 : vector<32x256xi1>, vector<32x256xf32>
    %278 = arith.addf %258, %277 : vector<32x256xf32>
    %279 = arith.mulf %139, %139 : vector<32x256xf32>
    %cst_142 = arith.constant dense<0.000000e+00> : vector<256xf32>
    %280 = vector.multi_reduction <add>, %279, %cst_142 [0] : vector<32x256xf32> to vector<256xf32>
    %281 = vector.shape_cast %280 : vector<256xf32> to vector<1x256xf32>
    %cst_143 = arith.constant 1.000000e-24 : f32
    %282 = vector.broadcast %cst_143 : f32 to vector<1x256xf32>
    %283 = arith.maximumf %281, %282 : vector<1x256xf32>
    %284 = math.rsqrt %283 : vector<1x256xf32>
    %285 = vector.broadcast %284 : vector<1x256xf32> to vector<32x256xf32>
    %286 = arith.mulf %139, %285 : vector<32x256xf32>
    %287 = arith.mulf %278, %278 : vector<32x256xf32>
    %cst_144 = arith.constant dense<0.000000e+00> : vector<256xf32>
    %288 = vector.multi_reduction <add>, %287, %cst_144 [0] : vector<32x256xf32> to vector<256xf32>
    %289 = vector.shape_cast %288 : vector<256xf32> to vector<1x256xf32>
    %cst_145 = arith.constant 1.000000e-24 : f32
    %290 = vector.broadcast %cst_145 : f32 to vector<1x256xf32>
    %291 = arith.maximumf %289, %290 : vector<1x256xf32>
    %292 = math.rsqrt %291 : vector<1x256xf32>
    %293 = vector.broadcast %292 : vector<1x256xf32> to vector<32x256xf32>
    %294 = arith.mulf %278, %293 : vector<32x256xf32>
    %cst_146 = arith.constant 0.000000e+00 : f32
    %295 = vector.broadcast %cst_146 : f32 to vector<32x128xf32>
    %296 = tpu.concatenate %295, %294, %295 in 1 : vector<32x128xf32>, vector<32x256xf32>, vector<32x128xf32> -> vector<32x512xf32>
    %297 = vector.extract_strided_slice %296 {offsets = [0, 0], sizes = [32, 256], strides = [1, 1]} : vector<32x512xf32> to vector<32x256xf32>
    %c0_147 = arith.constant 0 : index
    %c0_148 = arith.constant 0 : index
    %c0_149 = arith.constant 0 : index
    %298 = vector.load %arg8[%c0_147, %c0_148, %c0_149] : memref<17x32x256xf32, #tpu.memory_space<vmem>>, vector<1x32x256xf32>
    %299 = vector.shape_cast %298 : vector<1x32x256xf32> to vector<32x256xf32>
    %300 = vector.shape_cast %297 : vector<32x256xf32> to vector<1x32x256xf32>
    tpu.vector_store %arg8[%c0_147, %c0_148, %c0_149], %300 {strides = array<i32>} : memref<17x32x256xf32, #tpu.memory_space<vmem>>, vector<1x32x256xf32>,
    %301 = vector.extract_strided_slice %296 {offsets = [0, 16], sizes = [32, 256], strides = [1, 1]} : vector<32x512xf32> to vector<32x256xf32>
    %c1_150 = arith.constant 1 : index
    %c0_151 = arith.constant 0 : index
    %c0_152 = arith.constant 0 : index
    %302 = vector.load %arg8[%c1_150, %c0_151, %c0_152] : memref<17x32x256xf32, #tpu.memory_space<vmem>>, vector<1x32x256xf32>
    %303 = vector.shape_cast %302 : vector<1x32x256xf32> to vector<32x256xf32>
    %304 = vector.shape_cast %301 : vector<32x256xf32> to vector<1x32x256xf32>
    tpu.vector_store %arg8[%c1_150, %c0_151, %c0_152], %304 {strides = array<i32>} : memref<17x32x256xf32, #tpu.memory_space<vmem>>, vector<1x32x256xf32>,
    %305 = vector.extract_strided_slice %296 {offsets = [0, 32], sizes = [32, 256], strides = [1, 1]} : vector<32x512xf32> to vector<32x256xf32>
    %c2_153 = arith.constant 2 : index
    %c0_154 = arith.constant 0 : index
    %c0_155 = arith.constant 0 : index
    %306 = vector.load %arg8[%c2_153, %c0_154, %c0_155] : memref<17x32x256xf32, #tpu.memory_space<vmem>>, vector<1x32x256xf32>
    %307 = vector.shape_cast %306 : vector<1x32x256xf32> to vector<32x256xf32>
    %308 = vector.shape_cast %305 : vector<32x256xf32> to vector<1x32x256xf32>
    tpu.vector_store %arg8[%c2_153, %c0_154, %c0_155], %308 {strides = array<i32>} : memref<17x32x256xf32, #tpu.memory_space<vmem>>, vector<1x32x256xf32>,
    %309 = vector.extract_strided_slice %296 {offsets = [0, 48], sizes = [32, 256], strides = [1, 1]} : vector<32x512xf32> to vector<32x256xf32>
    %c3_156 = arith.constant 3 : index
    %c0_157 = arith.constant 0 : index
    %c0_158 = arith.constant 0 : index
    %310 = vector.load %arg8[%c3_156, %c0_157, %c0_158] : memref<17x32x256xf32, #tpu.memory_space<vmem>>, vector<1x32x256xf32>
    %311 = vector.shape_cast %310 : vector<1x32x256xf32> to vector<32x256xf32>
    %312 = vector.shape_cast %309 : vector<32x256xf32> to vector<1x32x256xf32>
    tpu.vector_store %arg8[%c3_156, %c0_157, %c0_158], %312 {strides = array<i32>} : memref<17x32x256xf32, #tpu.memory_space<vmem>>, vector<1x32x256xf32>,
    %313 = vector.extract_strided_slice %296 {offsets = [0, 64], sizes = [32, 256], strides = [1, 1]} : vector<32x512xf32> to vector<32x256xf32>
    %c4_159 = arith.constant 4 : index
    %c0_160 = arith.constant 0 : index
    %c0_161 = arith.constant 0 : index
    %314 = vector.load %arg8[%c4_159, %c0_160, %c0_161] : memref<17x32x256xf32, #tpu.memory_space<vmem>>, vector<1x32x256xf32>
    %315 = vector.shape_cast %314 : vector<1x32x256xf32> to vector<32x256xf32>
    %316 = vector.shape_cast %313 : vector<32x256xf32> to vector<1x32x256xf32>
    tpu.vector_store %arg8[%c4_159, %c0_160, %c0_161], %316 {strides = array<i32>} : memref<17x32x256xf32, #tpu.memory_space<vmem>>, vector<1x32x256xf32>,
    %317 = vector.extract_strided_slice %296 {offsets = [0, 80], sizes = [32, 256], strides = [1, 1]} : vector<32x512xf32> to vector<32x256xf32>
    %c5_162 = arith.constant 5 : index
    %c0_163 = arith.constant 0 : index
    %c0_164 = arith.constant 0 : index
    %318 = vector.load %arg8[%c5_162, %c0_163, %c0_164] : memref<17x32x256xf32, #tpu.memory_space<vmem>>, vector<1x32x256xf32>
    %319 = vector.shape_cast %318 : vector<1x32x256xf32> to vector<32x256xf32>
    %320 = vector.shape_cast %317 : vector<32x256xf32> to vector<1x32x256xf32>
    tpu.vector_store %arg8[%c5_162, %c0_163, %c0_164], %320 {strides = array<i32>} : memref<17x32x256xf32, #tpu.memory_space<vmem>>, vector<1x32x256xf32>,
    %321 = vector.extract_strided_slice %296 {offsets = [0, 96], sizes = [32, 256], strides = [1, 1]} : vector<32x512xf32> to vector<32x256xf32>
    %c6_165 = arith.constant 6 : index
    %c0_166 = arith.constant 0 : index
    %c0_167 = arith.constant 0 : index
    %322 = vector.load %arg8[%c6_165, %c0_166, %c0_167] : memref<17x32x256xf32, #tpu.memory_space<vmem>>, vector<1x32x256xf32>
    %323 = vector.shape_cast %322 : vector<1x32x256xf32> to vector<32x256xf32>
    %324 = vector.shape_cast %321 : vector<32x256xf32> to vector<1x32x256xf32>
    tpu.vector_store %arg8[%c6_165, %c0_166, %c0_167], %324 {strides = array<i32>} : memref<17x32x256xf32, #tpu.memory_space<vmem>>, vector<1x32x256xf32>,
    %325 = vector.extract_strided_slice %296 {offsets = [0, 112], sizes = [32, 256], strides = [1, 1]} : vector<32x512xf32> to vector<32x256xf32>
    %c7_168 = arith.constant 7 : index
    %c0_169 = arith.constant 0 : index
    %c0_170 = arith.constant 0 : index
    %326 = vector.load %arg8[%c7_168, %c0_169, %c0_170] : memref<17x32x256xf32, #tpu.memory_space<vmem>>, vector<1x32x256xf32>
    %327 = vector.shape_cast %326 : vector<1x32x256xf32> to vector<32x256xf32>
    %328 = vector.shape_cast %325 : vector<32x256xf32> to vector<1x32x256xf32>
    tpu.vector_store %arg8[%c7_168, %c0_169, %c0_170], %328 {strides = array<i32>} : memref<17x32x256xf32, #tpu.memory_space<vmem>>, vector<1x32x256xf32>,
    %329 = vector.extract_strided_slice %296 {offsets = [0, 128], sizes = [32, 256], strides = [1, 1]} : vector<32x512xf32> to vector<32x256xf32>
    %c8_171 = arith.constant 8 : index
    %c0_172 = arith.constant 0 : index
    %c0_173 = arith.constant 0 : index
    %330 = vector.load %arg8[%c8_171, %c0_172, %c0_173] : memref<17x32x256xf32, #tpu.memory_space<vmem>>, vector<1x32x256xf32>
    %331 = vector.shape_cast %330 : vector<1x32x256xf32> to vector<32x256xf32>
    %332 = vector.shape_cast %329 : vector<32x256xf32> to vector<1x32x256xf32>
    tpu.vector_store %arg8[%c8_171, %c0_172, %c0_173], %332 {strides = array<i32>} : memref<17x32x256xf32, #tpu.memory_space<vmem>>, vector<1x32x256xf32>,
    %333 = vector.extract_strided_slice %296 {offsets = [0, 144], sizes = [32, 256], strides = [1, 1]} : vector<32x512xf32> to vector<32x256xf32>
    %c9 = arith.constant 9 : index
    %c0_174 = arith.constant 0 : index
    %c0_175 = arith.constant 0 : index
    %334 = vector.load %arg8[%c9, %c0_174, %c0_175] : memref<17x32x256xf32, #tpu.memory_space<vmem>>, vector<1x32x256xf32>
    %335 = vector.shape_cast %334 : vector<1x32x256xf32> to vector<32x256xf32>
    %336 = vector.shape_cast %333 : vector<32x256xf32> to vector<1x32x256xf32>
    tpu.vector_store %arg8[%c9, %c0_174, %c0_175], %336 {strides = array<i32>} : memref<17x32x256xf32, #tpu.memory_space<vmem>>, vector<1x32x256xf32>,
    %337 = vector.extract_strided_slice %296 {offsets = [0, 160], sizes = [32, 256], strides = [1, 1]} : vector<32x512xf32> to vector<32x256xf32>
    %c10 = arith.constant 10 : index
    %c0_176 = arith.constant 0 : index
    %c0_177 = arith.constant 0 : index
    %338 = vector.load %arg8[%c10, %c0_176, %c0_177] : memref<17x32x256xf32, #tpu.memory_space<vmem>>, vector<1x32x256xf32>
    %339 = vector.shape_cast %338 : vector<1x32x256xf32> to vector<32x256xf32>
    %340 = vector.shape_cast %337 : vector<32x256xf32> to vector<1x32x256xf32>
    tpu.vector_store %arg8[%c10, %c0_176, %c0_177], %340 {strides = array<i32>} : memref<17x32x256xf32, #tpu.memory_space<vmem>>, vector<1x32x256xf32>,
    %341 = vector.extract_strided_slice %296 {offsets = [0, 176], sizes = [32, 256], strides = [1, 1]} : vector<32x512xf32> to vector<32x256xf32>
    %c11 = arith.constant 11 : index
    %c0_178 = arith.constant 0 : index
    %c0_179 = arith.constant 0 : index
    %342 = vector.load %arg8[%c11, %c0_178, %c0_179] : memref<17x32x256xf32, #tpu.memory_space<vmem>>, vector<1x32x256xf32>
    %343 = vector.shape_cast %342 : vector<1x32x256xf32> to vector<32x256xf32>
    %344 = vector.shape_cast %341 : vector<32x256xf32> to vector<1x32x256xf32>
    tpu.vector_store %arg8[%c11, %c0_178, %c0_179], %344 {strides = array<i32>} : memref<17x32x256xf32, #tpu.memory_space<vmem>>, vector<1x32x256xf32>,
    %345 = vector.extract_strided_slice %296 {offsets = [0, 192], sizes = [32, 256], strides = [1, 1]} : vector<32x512xf32> to vector<32x256xf32>
    %c12 = arith.constant 12 : index
    %c0_180 = arith.constant 0 : index
    %c0_181 = arith.constant 0 : index
    %346 = vector.load %arg8[%c12, %c0_180, %c0_181] : memref<17x32x256xf32, #tpu.memory_space<vmem>>, vector<1x32x256xf32>
    %347 = vector.shape_cast %346 : vector<1x32x256xf32> to vector<32x256xf32>
    %348 = vector.shape_cast %345 : vector<32x256xf32> to vector<1x32x256xf32>
    tpu.vector_store %arg8[%c12, %c0_180, %c0_181], %348 {strides = array<i32>} : memref<17x32x256xf32, #tpu.memory_space<vmem>>, vector<1x32x256xf32>,
    %349 = vector.extract_strided_slice %296 {offsets = [0, 208], sizes = [32, 256], strides = [1, 1]} : vector<32x512xf32> to vector<32x256xf32>
    %c13 = arith.constant 13 : index
    %c0_182 = arith.constant 0 : index
    %c0_183 = arith.constant 0 : index
    %350 = vector.load %arg8[%c13, %c0_182, %c0_183] : memref<17x32x256xf32, #tpu.memory_space<vmem>>, vector<1x32x256xf32>
    %351 = vector.shape_cast %350 : vector<1x32x256xf32> to vector<32x256xf32>
    %352 = vector.shape_cast %349 : vector<32x256xf32> to vector<1x32x256xf32>
    tpu.vector_store %arg8[%c13, %c0_182, %c0_183], %352 {strides = array<i32>} : memref<17x32x256xf32, #tpu.memory_space<vmem>>, vector<1x32x256xf32>,
    %353 = vector.extract_strided_slice %296 {offsets = [0, 224], sizes = [32, 256], strides = [1, 1]} : vector<32x512xf32> to vector<32x256xf32>
    %c14 = arith.constant 14 : index
    %c0_184 = arith.constant 0 : index
    %c0_185 = arith.constant 0 : index
    %354 = vector.load %arg8[%c14, %c0_184, %c0_185] : memref<17x32x256xf32, #tpu.memory_space<vmem>>, vector<1x32x256xf32>
    %355 = vector.shape_cast %354 : vector<1x32x256xf32> to vector<32x256xf32>
    %356 = vector.shape_cast %353 : vector<32x256xf32> to vector<1x32x256xf32>
    tpu.vector_store %arg8[%c14, %c0_184, %c0_185], %356 {strides = array<i32>} : memref<17x32x256xf32, #tpu.memory_space<vmem>>, vector<1x32x256xf32>,
    %357 = vector.extract_strided_slice %296 {offsets = [0, 240], sizes = [32, 256], strides = [1, 1]} : vector<32x512xf32> to vector<32x256xf32>
    %c15 = arith.constant 15 : index
    %c0_186 = arith.constant 0 : index
    %c0_187 = arith.constant 0 : index
    %358 = vector.load %arg8[%c15, %c0_186, %c0_187] : memref<17x32x256xf32, #tpu.memory_space<vmem>>, vector<1x32x256xf32>
    %359 = vector.shape_cast %358 : vector<1x32x256xf32> to vector<32x256xf32>
    %360 = vector.shape_cast %357 : vector<32x256xf32> to vector<1x32x256xf32>
    tpu.vector_store %arg8[%c15, %c0_186, %c0_187], %360 {strides = array<i32>} : memref<17x32x256xf32, #tpu.memory_space<vmem>>, vector<1x32x256xf32>,
    %361 = vector.extract_strided_slice %296 {offsets = [0, 256], sizes = [32, 256], strides = [1, 1]} : vector<32x512xf32> to vector<32x256xf32>
    %c16 = arith.constant 16 : index
    %c0_188 = arith.constant 0 : index
    %c0_189 = arith.constant 0 : index
    %362 = vector.load %arg8[%c16, %c0_188, %c0_189] : memref<17x32x256xf32, #tpu.memory_space<vmem>>, vector<1x32x256xf32>
    %363 = vector.shape_cast %362 : vector<1x32x256xf32> to vector<32x256xf32>
    %364 = vector.shape_cast %361 : vector<32x256xf32> to vector<1x32x256xf32>
    tpu.vector_store %arg8[%c16, %c0_188, %c0_189], %364 {strides = array<i32>} : memref<17x32x256xf32, #tpu.memory_space<vmem>>, vector<1x32x256xf32>,
    %cst_190 = arith.constant 0xFF800000 : f32
    %365 = vector.broadcast %cst_190 : f32 to vector<1x256xf32>
    %c0_i32_191 = arith.constant 0 : i32
    %366 = vector.broadcast %c0_i32_191 : i32 to vector<1x256xi32>
    %c0_i32_192 = arith.constant 0 : i32
    %c17_i32 = arith.constant 17 : i32
    %367 = arith.addi %c0_i32_192, %c17_i32 : i32
    %c1_i32_193 = arith.constant 1 : i32
    %368:2 = scf.for %arg9 = %c0_i32_192 to %367 step %c1_i32_193 iter_args(%arg10 = %365, %arg11 = %366) -> (vector<1x256xf32>, vector<1x256xi32>)  : i32 {
      %375 = arith.index_cast %arg9 : i32 to index
      %c0_201 = arith.constant 0 : index
      %c0_202 = arith.constant 0 : index
      %376 = vector.load %arg8[%375, %c0_201, %c0_202] : memref<17x32x256xf32, #tpu.memory_space<vmem>>, vector<1x32x256xf32>
      %377 = vector.shape_cast %376 : vector<1x32x256xf32> to vector<32x256xf32>
      %cst_203 = arith.constant 0.000000e+00 : f32
      %378 = vector.broadcast %cst_203 : f32 to vector<32x8xf32>
      %379 = tpu.concatenate %378, %377, %378 in 1 : vector<32x8xf32>, vector<32x256xf32>, vector<32x8xf32> -> vector<32x272xf32>
      %380 = vector.extract_strided_slice %379 {offsets = [0, 0], sizes = [32, 256], strides = [1, 1]} : vector<32x272xf32> to vector<32x256xf32>
      %381 = arith.mulf %286, %380 : vector<32x256xf32>
      %cst_204 = arith.constant dense<0.000000e+00> : vector<256xf32>
      %382 = vector.multi_reduction <add>, %381, %cst_204 [0] : vector<32x256xf32> to vector<256xf32>
      %383 = vector.shape_cast %382 : vector<256xf32> to vector<1x256xf32>
      %c-8_i32 = arith.constant -8 : i32
      %384 = vector.broadcast %c-8_i32 : i32 to vector<1x256xi32>
      %385 = arith.addi %0, %384 : vector<1x256xi32>
      %c0_i32_205 = arith.constant 0 : i32
      %386 = vector.broadcast %c0_i32_205 : i32 to vector<1x256xi32>
      %387 = arith.cmpi sge, %385, %386 : vector<1x256xi32>
      %c-8_i32_206 = arith.constant -8 : i32
      %388 = vector.broadcast %c-8_i32_206 : i32 to vector<1x256xi32>
      %389 = arith.addi %0, %388 : vector<1x256xi32>
      %c16_i32_207 = arith.constant 16 : i32
      %390 = vector.broadcast %c16_i32_207 : i32 to vector<1x256xi32>
      %391 = arith.cmpi slt, %389, %390 : vector<1x256xi32>
      %392 = arith.andi %387, %391 : vector<1x256xi1>
      %cst_208 = arith.constant 0.000000e+00 : f32
      %393 = vector.broadcast %cst_208 : f32 to vector<1x256xf32>
      %394 = arith.select %392, %383, %393 : vector<1x256xi1>, vector<1x256xf32>
      %c17_i32_209 = arith.constant 17 : i32
      %395 = arith.muli %arg9, %c17_i32_209 : i32
      %c0_i32_210 = arith.constant 0 : i32
      %396 = arith.addi %395, %c0_i32_210 : i32
      %397 = arith.cmpf ogt, %394, %arg10 : vector<1x256xf32>
      %398 = arith.select %397, %394, %arg10 : vector<1x256xi1>, vector<1x256xf32>
      %399 = vector.broadcast %396 : i32 to vector<1x256xi32>
      %400 = arith.select %397, %399, %arg11 : vector<1x256xi1>, vector<1x256xi32>
      %401 = vector.extract_strided_slice %379 {offsets = [0, 1], sizes = [32, 256], strides = [1, 1]} : vector<32x272xf32> to vector<32x256xf32>
      %402 = arith.mulf %286, %401 : vector<32x256xf32>
      %cst_211 = arith.constant dense<0.000000e+00> : vector<256xf32>
      %403 = vector.multi_reduction <add>, %402, %cst_211 [0] : vector<32x256xf32> to vector<256xf32>
      %404 = vector.shape_cast %403 : vector<256xf32> to vector<1x256xf32>
      %c-7_i32 = arith.constant -7 : i32
      %405 = vector.broadcast %c-7_i32 : i32 to vector<1x256xi32>
      %406 = arith.addi %0, %405 : vector<1x256xi32>
      %c0_i32_212 = arith.constant 0 : i32
      %407 = vector.broadcast %c0_i32_212 : i32 to vector<1x256xi32>
      %408 = arith.cmpi sge, %406, %407 : vector<1x256xi32>
      %c-7_i32_213 = arith.constant -7 : i32
      %409 = vector.broadcast %c-7_i32_213 : i32 to vector<1x256xi32>
      %410 = arith.addi %0, %409 : vector<1x256xi32>
      %c16_i32_214 = arith.constant 16 : i32
      %411 = vector.broadcast %c16_i32_214 : i32 to vector<1x256xi32>
      %412 = arith.cmpi slt, %410, %411 : vector<1x256xi32>
      %413 = arith.andi %408, %412 : vector<1x256xi1>
      %cst_215 = arith.constant 0.000000e+00 : f32
      %414 = vector.broadcast %cst_215 : f32 to vector<1x256xf32>
      %415 = arith.select %413, %404, %414 : vector<1x256xi1>, vector<1x256xf32>
      %c17_i32_216 = arith.constant 17 : i32
      %416 = arith.muli %arg9, %c17_i32_216 : i32
      %c1_i32_217 = arith.constant 1 : i32
      %417 = arith.addi %416, %c1_i32_217 : i32
      %418 = arith.cmpf ogt, %415, %398 : vector<1x256xf32>
      %419 = arith.select %418, %415, %398 : vector<1x256xi1>, vector<1x256xf32>
      %420 = vector.broadcast %417 : i32 to vector<1x256xi32>
      %421 = arith.select %418, %420, %400 : vector<1x256xi1>, vector<1x256xi32>
      %422 = vector.extract_strided_slice %379 {offsets = [0, 2], sizes = [32, 256], strides = [1, 1]} : vector<32x272xf32> to vector<32x256xf32>
      %423 = arith.mulf %286, %422 : vector<32x256xf32>
      %cst_218 = arith.constant dense<0.000000e+00> : vector<256xf32>
      %424 = vector.multi_reduction <add>, %423, %cst_218 [0] : vector<32x256xf32> to vector<256xf32>
      %425 = vector.shape_cast %424 : vector<256xf32> to vector<1x256xf32>
      %c-6_i32 = arith.constant -6 : i32
      %426 = vector.broadcast %c-6_i32 : i32 to vector<1x256xi32>
      %427 = arith.addi %0, %426 : vector<1x256xi32>
      %c0_i32_219 = arith.constant 0 : i32
      %428 = vector.broadcast %c0_i32_219 : i32 to vector<1x256xi32>
      %429 = arith.cmpi sge, %427, %428 : vector<1x256xi32>
      %c-6_i32_220 = arith.constant -6 : i32
      %430 = vector.broadcast %c-6_i32_220 : i32 to vector<1x256xi32>
      %431 = arith.addi %0, %430 : vector<1x256xi32>
      %c16_i32_221 = arith.constant 16 : i32
      %432 = vector.broadcast %c16_i32_221 : i32 to vector<1x256xi32>
      %433 = arith.cmpi slt, %431, %432 : vector<1x256xi32>
      %434 = arith.andi %429, %433 : vector<1x256xi1>
      %cst_222 = arith.constant 0.000000e+00 : f32
      %435 = vector.broadcast %cst_222 : f32 to vector<1x256xf32>
      %436 = arith.select %434, %425, %435 : vector<1x256xi1>, vector<1x256xf32>
      %c17_i32_223 = arith.constant 17 : i32
      %437 = arith.muli %arg9, %c17_i32_223 : i32
      %c2_i32 = arith.constant 2 : i32
      %438 = arith.addi %437, %c2_i32 : i32
      %439 = arith.cmpf ogt, %436, %419 : vector<1x256xf32>
      %440 = arith.select %439, %436, %419 : vector<1x256xi1>, vector<1x256xf32>
      %441 = vector.broadcast %438 : i32 to vector<1x256xi32>
      %442 = arith.select %439, %441, %421 : vector<1x256xi1>, vector<1x256xi32>
      %443 = vector.extract_strided_slice %379 {offsets = [0, 3], sizes = [32, 256], strides = [1, 1]} : vector<32x272xf32> to vector<32x256xf32>
      %444 = arith.mulf %286, %443 : vector<32x256xf32>
      %cst_224 = arith.constant dense<0.000000e+00> : vector<256xf32>
      %445 = vector.multi_reduction <add>, %444, %cst_224 [0] : vector<32x256xf32> to vector<256xf32>
      %446 = vector.shape_cast %445 : vector<256xf32> to vector<1x256xf32>
      %c-5_i32 = arith.constant -5 : i32
      %447 = vector.broadcast %c-5_i32 : i32 to vector<1x256xi32>
      %448 = arith.addi %0, %447 : vector<1x256xi32>
      %c0_i32_225 = arith.constant 0 : i32
      %449 = vector.broadcast %c0_i32_225 : i32 to vector<1x256xi32>
      %450 = arith.cmpi sge, %448, %449 : vector<1x256xi32>
      %c-5_i32_226 = arith.constant -5 : i32
      %451 = vector.broadcast %c-5_i32_226 : i32 to vector<1x256xi32>
      %452 = arith.addi %0, %451 : vector<1x256xi32>
      %c16_i32_227 = arith.constant 16 : i32
      %453 = vector.broadcast %c16_i32_227 : i32 to vector<1x256xi32>
      %454 = arith.cmpi slt, %452, %453 : vector<1x256xi32>
      %455 = arith.andi %450, %454 : vector<1x256xi1>
      %cst_228 = arith.constant 0.000000e+00 : f32
      %456 = vector.broadcast %cst_228 : f32 to vector<1x256xf32>
      %457 = arith.select %455, %446, %456 : vector<1x256xi1>, vector<1x256xf32>
      %c17_i32_229 = arith.constant 17 : i32
      %458 = arith.muli %arg9, %c17_i32_229 : i32
      %c3_i32 = arith.constant 3 : i32
      %459 = arith.addi %458, %c3_i32 : i32
      %460 = arith.cmpf ogt, %457, %440 : vector<1x256xf32>
      %461 = arith.select %460, %457, %440 : vector<1x256xi1>, vector<1x256xf32>
      %462 = vector.broadcast %459 : i32 to vector<1x256xi32>
      %463 = arith.select %460, %462, %442 : vector<1x256xi1>, vector<1x256xi32>
      %464 = vector.extract_strided_slice %379 {offsets = [0, 4], sizes = [32, 256], strides = [1, 1]} : vector<32x272xf32> to vector<32x256xf32>
      %465 = arith.mulf %286, %464 : vector<32x256xf32>
      %cst_230 = arith.constant dense<0.000000e+00> : vector<256xf32>
      %466 = vector.multi_reduction <add>, %465, %cst_230 [0] : vector<32x256xf32> to vector<256xf32>
      %467 = vector.shape_cast %466 : vector<256xf32> to vector<1x256xf32>
      %c-4_i32 = arith.constant -4 : i32
      %468 = vector.broadcast %c-4_i32 : i32 to vector<1x256xi32>
      %469 = arith.addi %0, %468 : vector<1x256xi32>
      %c0_i32_231 = arith.constant 0 : i32
      %470 = vector.broadcast %c0_i32_231 : i32 to vector<1x256xi32>
      %471 = arith.cmpi sge, %469, %470 : vector<1x256xi32>
      %c-4_i32_232 = arith.constant -4 : i32
      %472 = vector.broadcast %c-4_i32_232 : i32 to vector<1x256xi32>
      %473 = arith.addi %0, %472 : vector<1x256xi32>
      %c16_i32_233 = arith.constant 16 : i32
      %474 = vector.broadcast %c16_i32_233 : i32 to vector<1x256xi32>
      %475 = arith.cmpi slt, %473, %474 : vector<1x256xi32>
      %476 = arith.andi %471, %475 : vector<1x256xi1>
      %cst_234 = arith.constant 0.000000e+00 : f32
      %477 = vector.broadcast %cst_234 : f32 to vector<1x256xf32>
      %478 = arith.select %476, %467, %477 : vector<1x256xi1>, vector<1x256xf32>
      %c17_i32_235 = arith.constant 17 : i32
      %479 = arith.muli %arg9, %c17_i32_235 : i32
      %c4_i32 = arith.constant 4 : i32
      %480 = arith.addi %479, %c4_i32 : i32
      %481 = arith.cmpf ogt, %478, %461 : vector<1x256xf32>
      %482 = arith.select %481, %478, %461 : vector<1x256xi1>, vector<1x256xf32>
      %483 = vector.broadcast %480 : i32 to vector<1x256xi32>
      %484 = arith.select %481, %483, %463 : vector<1x256xi1>, vector<1x256xi32>
      %485 = vector.extract_strided_slice %379 {offsets = [0, 5], sizes = [32, 256], strides = [1, 1]} : vector<32x272xf32> to vector<32x256xf32>
      %486 = arith.mulf %286, %485 : vector<32x256xf32>
      %cst_236 = arith.constant dense<0.000000e+00> : vector<256xf32>
      %487 = vector.multi_reduction <add>, %486, %cst_236 [0] : vector<32x256xf32> to vector<256xf32>
      %488 = vector.shape_cast %487 : vector<256xf32> to vector<1x256xf32>
      %c-3_i32 = arith.constant -3 : i32
      %489 = vector.broadcast %c-3_i32 : i32 to vector<1x256xi32>
      %490 = arith.addi %0, %489 : vector<1x256xi32>
      %c0_i32_237 = arith.constant 0 : i32
      %491 = vector.broadcast %c0_i32_237 : i32 to vector<1x256xi32>
      %492 = arith.cmpi sge, %490, %491 : vector<1x256xi32>
      %c-3_i32_238 = arith.constant -3 : i32
      %493 = vector.broadcast %c-3_i32_238 : i32 to vector<1x256xi32>
      %494 = arith.addi %0, %493 : vector<1x256xi32>
      %c16_i32_239 = arith.constant 16 : i32
      %495 = vector.broadcast %c16_i32_239 : i32 to vector<1x256xi32>
      %496 = arith.cmpi slt, %494, %495 : vector<1x256xi32>
      %497 = arith.andi %492, %496 : vector<1x256xi1>
      %cst_240 = arith.constant 0.000000e+00 : f32
      %498 = vector.broadcast %cst_240 : f32 to vector<1x256xf32>
      %499 = arith.select %497, %488, %498 : vector<1x256xi1>, vector<1x256xf32>
      %c17_i32_241 = arith.constant 17 : i32
      %500 = arith.muli %arg9, %c17_i32_241 : i32
      %c5_i32 = arith.constant 5 : i32
      %501 = arith.addi %500, %c5_i32 : i32
      %502 = arith.cmpf ogt, %499, %482 : vector<1x256xf32>
      %503 = arith.select %502, %499, %482 : vector<1x256xi1>, vector<1x256xf32>
      %504 = vector.broadcast %501 : i32 to vector<1x256xi32>
      %505 = arith.select %502, %504, %484 : vector<1x256xi1>, vector<1x256xi32>
      %506 = vector.extract_strided_slice %379 {offsets = [0, 6], sizes = [32, 256], strides = [1, 1]} : vector<32x272xf32> to vector<32x256xf32>
      %507 = arith.mulf %286, %506 : vector<32x256xf32>
      %cst_242 = arith.constant dense<0.000000e+00> : vector<256xf32>
      %508 = vector.multi_reduction <add>, %507, %cst_242 [0] : vector<32x256xf32> to vector<256xf32>
      %509 = vector.shape_cast %508 : vector<256xf32> to vector<1x256xf32>
      %c-2_i32 = arith.constant -2 : i32
      %510 = vector.broadcast %c-2_i32 : i32 to vector<1x256xi32>
      %511 = arith.addi %0, %510 : vector<1x256xi32>
      %c0_i32_243 = arith.constant 0 : i32
      %512 = vector.broadcast %c0_i32_243 : i32 to vector<1x256xi32>
      %513 = arith.cmpi sge, %511, %512 : vector<1x256xi32>
      %c-2_i32_244 = arith.constant -2 : i32
      %514 = vector.broadcast %c-2_i32_244 : i32 to vector<1x256xi32>
      %515 = arith.addi %0, %514 : vector<1x256xi32>
      %c16_i32_245 = arith.constant 16 : i32
      %516 = vector.broadcast %c16_i32_245 : i32 to vector<1x256xi32>
      %517 = arith.cmpi slt, %515, %516 : vector<1x256xi32>
      %518 = arith.andi %513, %517 : vector<1x256xi1>
      %cst_246 = arith.constant 0.000000e+00 : f32
      %519 = vector.broadcast %cst_246 : f32 to vector<1x256xf32>
      %520 = arith.select %518, %509, %519 : vector<1x256xi1>, vector<1x256xf32>
      %c17_i32_247 = arith.constant 17 : i32
      %521 = arith.muli %arg9, %c17_i32_247 : i32
      %c6_i32 = arith.constant 6 : i32
      %522 = arith.addi %521, %c6_i32 : i32
      %523 = arith.cmpf ogt, %520, %503 : vector<1x256xf32>
      %524 = arith.select %523, %520, %503 : vector<1x256xi1>, vector<1x256xf32>
      %525 = vector.broadcast %522 : i32 to vector<1x256xi32>
      %526 = arith.select %523, %525, %505 : vector<1x256xi1>, vector<1x256xi32>
      %527 = vector.extract_strided_slice %379 {offsets = [0, 7], sizes = [32, 256], strides = [1, 1]} : vector<32x272xf32> to vector<32x256xf32>
      %528 = arith.mulf %286, %527 : vector<32x256xf32>
      %cst_248 = arith.constant dense<0.000000e+00> : vector<256xf32>
      %529 = vector.multi_reduction <add>, %528, %cst_248 [0] : vector<32x256xf32> to vector<256xf32>
      %530 = vector.shape_cast %529 : vector<256xf32> to vector<1x256xf32>
      %c-1_i32_249 = arith.constant -1 : i32
      %531 = vector.broadcast %c-1_i32_249 : i32 to vector<1x256xi32>
      %532 = arith.addi %0, %531 : vector<1x256xi32>
      %c0_i32_250 = arith.constant 0 : i32
      %533 = vector.broadcast %c0_i32_250 : i32 to vector<1x256xi32>
      %534 = arith.cmpi sge, %532, %533 : vector<1x256xi32>
      %c-1_i32_251 = arith.constant -1 : i32
      %535 = vector.broadcast %c-1_i32_251 : i32 to vector<1x256xi32>
      %536 = arith.addi %0, %535 : vector<1x256xi32>
      %c16_i32_252 = arith.constant 16 : i32
      %537 = vector.broadcast %c16_i32_252 : i32 to vector<1x256xi32>
      %538 = arith.cmpi slt, %536, %537 : vector<1x256xi32>
      %539 = arith.andi %534, %538 : vector<1x256xi1>
      %cst_253 = arith.constant 0.000000e+00 : f32
      %540 = vector.broadcast %cst_253 : f32 to vector<1x256xf32>
      %541 = arith.select %539, %530, %540 : vector<1x256xi1>, vector<1x256xf32>
      %c17_i32_254 = arith.constant 17 : i32
      %542 = arith.muli %arg9, %c17_i32_254 : i32
      %c7_i32 = arith.constant 7 : i32
      %543 = arith.addi %542, %c7_i32 : i32
      %544 = arith.cmpf ogt, %541, %524 : vector<1x256xf32>
      %545 = arith.select %544, %541, %524 : vector<1x256xi1>, vector<1x256xf32>
      %546 = vector.broadcast %543 : i32 to vector<1x256xi32>
      %547 = arith.select %544, %546, %526 : vector<1x256xi1>, vector<1x256xi32>
      %548 = vector.extract_strided_slice %379 {offsets = [0, 8], sizes = [32, 256], strides = [1, 1]} : vector<32x272xf32> to vector<32x256xf32>
      %549 = arith.mulf %286, %548 : vector<32x256xf32>
      %cst_255 = arith.constant dense<0.000000e+00> : vector<256xf32>
      %550 = vector.multi_reduction <add>, %549, %cst_255 [0] : vector<32x256xf32> to vector<256xf32>
      %551 = vector.shape_cast %550 : vector<256xf32> to vector<1x256xf32>
      %c0_i32_256 = arith.constant 0 : i32
      %552 = vector.broadcast %c0_i32_256 : i32 to vector<1x256xi32>
      %553 = arith.addi %0, %552 : vector<1x256xi32>
      %c0_i32_257 = arith.constant 0 : i32
      %554 = vector.broadcast %c0_i32_257 : i32 to vector<1x256xi32>
      %555 = arith.cmpi sge, %553, %554 : vector<1x256xi32>
      %c0_i32_258 = arith.constant 0 : i32
      %556 = vector.broadcast %c0_i32_258 : i32 to vector<1x256xi32>
      %557 = arith.addi %0, %556 : vector<1x256xi32>
      %c16_i32_259 = arith.constant 16 : i32
      %558 = vector.broadcast %c16_i32_259 : i32 to vector<1x256xi32>
      %559 = arith.cmpi slt, %557, %558 : vector<1x256xi32>
      %560 = arith.andi %555, %559 : vector<1x256xi1>
      %cst_260 = arith.constant 0.000000e+00 : f32
      %561 = vector.broadcast %cst_260 : f32 to vector<1x256xf32>
      %562 = arith.select %560, %551, %561 : vector<1x256xi1>, vector<1x256xf32>
      %c17_i32_261 = arith.constant 17 : i32
      %563 = arith.muli %arg9, %c17_i32_261 : i32
      %c8_i32 = arith.constant 8 : i32
      %564 = arith.addi %563, %c8_i32 : i32
      %565 = arith.cmpf ogt, %562, %545 : vector<1x256xf32>
      %566 = arith.select %565, %562, %545 : vector<1x256xi1>, vector<1x256xf32>
      %567 = vector.broadcast %564 : i32 to vector<1x256xi32>
      %568 = arith.select %565, %567, %547 : vector<1x256xi1>, vector<1x256xi32>
      %569 = vector.extract_strided_slice %379 {offsets = [0, 9], sizes = [32, 256], strides = [1, 1]} : vector<32x272xf32> to vector<32x256xf32>
      %570 = arith.mulf %286, %569 : vector<32x256xf32>
      %cst_262 = arith.constant dense<0.000000e+00> : vector<256xf32>
      %571 = vector.multi_reduction <add>, %570, %cst_262 [0] : vector<32x256xf32> to vector<256xf32>
      %572 = vector.shape_cast %571 : vector<256xf32> to vector<1x256xf32>
      %c1_i32_263 = arith.constant 1 : i32
      %573 = vector.broadcast %c1_i32_263 : i32 to vector<1x256xi32>
      %574 = arith.addi %0, %573 : vector<1x256xi32>
      %c0_i32_264 = arith.constant 0 : i32
      %575 = vector.broadcast %c0_i32_264 : i32 to vector<1x256xi32>
      %576 = arith.cmpi sge, %574, %575 : vector<1x256xi32>
      %c1_i32_265 = arith.constant 1 : i32
      %577 = vector.broadcast %c1_i32_265 : i32 to vector<1x256xi32>
      %578 = arith.addi %0, %577 : vector<1x256xi32>
      %c16_i32_266 = arith.constant 16 : i32
      %579 = vector.broadcast %c16_i32_266 : i32 to vector<1x256xi32>
      %580 = arith.cmpi slt, %578, %579 : vector<1x256xi32>
      %581 = arith.andi %576, %580 : vector<1x256xi1>
      %cst_267 = arith.constant 0.000000e+00 : f32
      %582 = vector.broadcast %cst_267 : f32 to vector<1x256xf32>
      %583 = arith.select %581, %572, %582 : vector<1x256xi1>, vector<1x256xf32>
      %c17_i32_268 = arith.constant 17 : i32
      %584 = arith.muli %arg9, %c17_i32_268 : i32
      %c9_i32 = arith.constant 9 : i32
      %585 = arith.addi %584, %c9_i32 : i32
      %586 = arith.cmpf ogt, %583, %566 : vector<1x256xf32>
      %587 = arith.select %586, %583, %566 : vector<1x256xi1>, vector<1x256xf32>
      %588 = vector.broadcast %585 : i32 to vector<1x256xi32>
      %589 = arith.select %586, %588, %568 : vector<1x256xi1>, vector<1x256xi32>
      %590 = vector.extract_strided_slice %379 {offsets = [0, 10], sizes = [32, 256], strides = [1, 1]} : vector<32x272xf32> to vector<32x256xf32>
      %591 = arith.mulf %286, %590 : vector<32x256xf32>
      %cst_269 = arith.constant dense<0.000000e+00> : vector<256xf32>
      %592 = vector.multi_reduction <add>, %591, %cst_269 [0] : vector<32x256xf32> to vector<256xf32>
      %593 = vector.shape_cast %592 : vector<256xf32> to vector<1x256xf32>
      %c2_i32_270 = arith.constant 2 : i32
      %594 = vector.broadcast %c2_i32_270 : i32 to vector<1x256xi32>
      %595 = arith.addi %0, %594 : vector<1x256xi32>
      %c0_i32_271 = arith.constant 0 : i32
      %596 = vector.broadcast %c0_i32_271 : i32 to vector<1x256xi32>
      %597 = arith.cmpi sge, %595, %596 : vector<1x256xi32>
      %c2_i32_272 = arith.constant 2 : i32
      %598 = vector.broadcast %c2_i32_272 : i32 to vector<1x256xi32>
      %599 = arith.addi %0, %598 : vector<1x256xi32>
      %c16_i32_273 = arith.constant 16 : i32
      %600 = vector.broadcast %c16_i32_273 : i32 to vector<1x256xi32>
      %601 = arith.cmpi slt, %599, %600 : vector<1x256xi32>
      %602 = arith.andi %597, %601 : vector<1x256xi1>
      %cst_274 = arith.constant 0.000000e+00 : f32
      %603 = vector.broadcast %cst_274 : f32 to vector<1x256xf32>
      %604 = arith.select %602, %593, %603 : vector<1x256xi1>, vector<1x256xf32>
      %c17_i32_275 = arith.constant 17 : i32
      %605 = arith.muli %arg9, %c17_i32_275 : i32
      %c10_i32 = arith.constant 10 : i32
      %606 = arith.addi %605, %c10_i32 : i32
      %607 = arith.cmpf ogt, %604, %587 : vector<1x256xf32>
      %608 = arith.select %607, %604, %587 : vector<1x256xi1>, vector<1x256xf32>
      %609 = vector.broadcast %606 : i32 to vector<1x256xi32>
      %610 = arith.select %607, %609, %589 : vector<1x256xi1>, vector<1x256xi32>
      %611 = vector.extract_strided_slice %379 {offsets = [0, 11], sizes = [32, 256], strides = [1, 1]} : vector<32x272xf32> to vector<32x256xf32>
      %612 = arith.mulf %286, %611 : vector<32x256xf32>
      %cst_276 = arith.constant dense<0.000000e+00> : vector<256xf32>
      %613 = vector.multi_reduction <add>, %612, %cst_276 [0] : vector<32x256xf32> to vector<256xf32>
      %614 = vector.shape_cast %613 : vector<256xf32> to vector<1x256xf32>
      %c3_i32_277 = arith.constant 3 : i32
      %615 = vector.broadcast %c3_i32_277 : i32 to vector<1x256xi32>
      %616 = arith.addi %0, %615 : vector<1x256xi32>
      %c0_i32_278 = arith.constant 0 : i32
      %617 = vector.broadcast %c0_i32_278 : i32 to vector<1x256xi32>
      %618 = arith.cmpi sge, %616, %617 : vector<1x256xi32>
      %c3_i32_279 = arith.constant 3 : i32
      %619 = vector.broadcast %c3_i32_279 : i32 to vector<1x256xi32>
      %620 = arith.addi %0, %619 : vector<1x256xi32>
      %c16_i32_280 = arith.constant 16 : i32
      %621 = vector.broadcast %c16_i32_280 : i32 to vector<1x256xi32>
      %622 = arith.cmpi slt, %620, %621 : vector<1x256xi32>
      %623 = arith.andi %618, %622 : vector<1x256xi1>
      %cst_281 = arith.constant 0.000000e+00 : f32
      %624 = vector.broadcast %cst_281 : f32 to vector<1x256xf32>
      %625 = arith.select %623, %614, %624 : vector<1x256xi1>, vector<1x256xf32>
      %c17_i32_282 = arith.constant 17 : i32
      %626 = arith.muli %arg9, %c17_i32_282 : i32
      %c11_i32 = arith.constant 11 : i32
      %627 = arith.addi %626, %c11_i32 : i32
      %628 = arith.cmpf ogt, %625, %608 : vector<1x256xf32>
      %629 = arith.select %628, %625, %608 : vector<1x256xi1>, vector<1x256xf32>
      %630 = vector.broadcast %627 : i32 to vector<1x256xi32>
      %631 = arith.select %628, %630, %610 : vector<1x256xi1>, vector<1x256xi32>
      %632 = vector.extract_strided_slice %379 {offsets = [0, 12], sizes = [32, 256], strides = [1, 1]} : vector<32x272xf32> to vector<32x256xf32>
      %633 = arith.mulf %286, %632 : vector<32x256xf32>
      %cst_283 = arith.constant dense<0.000000e+00> : vector<256xf32>
      %634 = vector.multi_reduction <add>, %633, %cst_283 [0] : vector<32x256xf32> to vector<256xf32>
      %635 = vector.shape_cast %634 : vector<256xf32> to vector<1x256xf32>
      %c4_i32_284 = arith.constant 4 : i32
      %636 = vector.broadcast %c4_i32_284 : i32 to vector<1x256xi32>
      %637 = arith.addi %0, %636 : vector<1x256xi32>
      %c0_i32_285 = arith.constant 0 : i32
      %638 = vector.broadcast %c0_i32_285 : i32 to vector<1x256xi32>
      %639 = arith.cmpi sge, %637, %638 : vector<1x256xi32>
      %c4_i32_286 = arith.constant 4 : i32
      %640 = vector.broadcast %c4_i32_286 : i32 to vector<1x256xi32>
      %641 = arith.addi %0, %640 : vector<1x256xi32>
      %c16_i32_287 = arith.constant 16 : i32
      %642 = vector.broadcast %c16_i32_287 : i32 to vector<1x256xi32>
      %643 = arith.cmpi slt, %641, %642 : vector<1x256xi32>
      %644 = arith.andi %639, %643 : vector<1x256xi1>
      %cst_288 = arith.constant 0.000000e+00 : f32
      %645 = vector.broadcast %cst_288 : f32 to vector<1x256xf32>
      %646 = arith.select %644, %635, %645 : vector<1x256xi1>, vector<1x256xf32>
      %c17_i32_289 = arith.constant 17 : i32
      %647 = arith.muli %arg9, %c17_i32_289 : i32
      %c12_i32 = arith.constant 12 : i32
      %648 = arith.addi %647, %c12_i32 : i32
      %649 = arith.cmpf ogt, %646, %629 : vector<1x256xf32>
      %650 = arith.select %649, %646, %629 : vector<1x256xi1>, vector<1x256xf32>
      %651 = vector.broadcast %648 : i32 to vector<1x256xi32>
      %652 = arith.select %649, %651, %631 : vector<1x256xi1>, vector<1x256xi32>
      %653 = vector.extract_strided_slice %379 {offsets = [0, 13], sizes = [32, 256], strides = [1, 1]} : vector<32x272xf32> to vector<32x256xf32>
      %654 = arith.mulf %286, %653 : vector<32x256xf32>
      %cst_290 = arith.constant dense<0.000000e+00> : vector<256xf32>
      %655 = vector.multi_reduction <add>, %654, %cst_290 [0] : vector<32x256xf32> to vector<256xf32>
      %656 = vector.shape_cast %655 : vector<256xf32> to vector<1x256xf32>
      %c5_i32_291 = arith.constant 5 : i32
      %657 = vector.broadcast %c5_i32_291 : i32 to vector<1x256xi32>
      %658 = arith.addi %0, %657 : vector<1x256xi32>
      %c0_i32_292 = arith.constant 0 : i32
      %659 = vector.broadcast %c0_i32_292 : i32 to vector<1x256xi32>
      %660 = arith.cmpi sge, %658, %659 : vector<1x256xi32>
      %c5_i32_293 = arith.constant 5 : i32
      %661 = vector.broadcast %c5_i32_293 : i32 to vector<1x256xi32>
      %662 = arith.addi %0, %661 : vector<1x256xi32>
      %c16_i32_294 = arith.constant 16 : i32
      %663 = vector.broadcast %c16_i32_294 : i32 to vector<1x256xi32>
      %664 = arith.cmpi slt, %662, %663 : vector<1x256xi32>
      %665 = arith.andi %660, %664 : vector<1x256xi1>
      %cst_295 = arith.constant 0.000000e+00 : f32
      %666 = vector.broadcast %cst_295 : f32 to vector<1x256xf32>
      %667 = arith.select %665, %656, %666 : vector<1x256xi1>, vector<1x256xf32>
      %c17_i32_296 = arith.constant 17 : i32
      %668 = arith.muli %arg9, %c17_i32_296 : i32
      %c13_i32 = arith.constant 13 : i32
      %669 = arith.addi %668, %c13_i32 : i32
      %670 = arith.cmpf ogt, %667, %650 : vector<1x256xf32>
      %671 = arith.select %670, %667, %650 : vector<1x256xi1>, vector<1x256xf32>
      %672 = vector.broadcast %669 : i32 to vector<1x256xi32>
      %673 = arith.select %670, %672, %652 : vector<1x256xi1>, vector<1x256xi32>
      %674 = vector.extract_strided_slice %379 {offsets = [0, 14], sizes = [32, 256], strides = [1, 1]} : vector<32x272xf32> to vector<32x256xf32>
      %675 = arith.mulf %286, %674 : vector<32x256xf32>
      %cst_297 = arith.constant dense<0.000000e+00> : vector<256xf32>
      %676 = vector.multi_reduction <add>, %675, %cst_297 [0] : vector<32x256xf32> to vector<256xf32>
      %677 = vector.shape_cast %676 : vector<256xf32> to vector<1x256xf32>
      %c6_i32_298 = arith.constant 6 : i32
      %678 = vector.broadcast %c6_i32_298 : i32 to vector<1x256xi32>
      %679 = arith.addi %0, %678 : vector<1x256xi32>
      %c0_i32_299 = arith.constant 0 : i32
      %680 = vector.broadcast %c0_i32_299 : i32 to vector<1x256xi32>
      %681 = arith.cmpi sge, %679, %680 : vector<1x256xi32>
      %c6_i32_300 = arith.constant 6 : i32
      %682 = vector.broadcast %c6_i32_300 : i32 to vector<1x256xi32>
      %683 = arith.addi %0, %682 : vector<1x256xi32>
      %c16_i32_301 = arith.constant 16 : i32
      %684 = vector.broadcast %c16_i32_301 : i32 to vector<1x256xi32>
      %685 = arith.cmpi slt, %683, %684 : vector<1x256xi32>
      %686 = arith.andi %681, %685 : vector<1x256xi1>
      %cst_302 = arith.constant 0.000000e+00 : f32
      %687 = vector.broadcast %cst_302 : f32 to vector<1x256xf32>
      %688 = arith.select %686, %677, %687 : vector<1x256xi1>, vector<1x256xf32>
      %c17_i32_303 = arith.constant 17 : i32
      %689 = arith.muli %arg9, %c17_i32_303 : i32
      %c14_i32 = arith.constant 14 : i32
      %690 = arith.addi %689, %c14_i32 : i32
      %691 = arith.cmpf ogt, %688, %671 : vector<1x256xf32>
      %692 = arith.select %691, %688, %671 : vector<1x256xi1>, vector<1x256xf32>
      %693 = vector.broadcast %690 : i32 to vector<1x256xi32>
      %694 = arith.select %691, %693, %673 : vector<1x256xi1>, vector<1x256xi32>
      %695 = vector.extract_strided_slice %379 {offsets = [0, 15], sizes = [32, 256], strides = [1, 1]} : vector<32x272xf32> to vector<32x256xf32>
      %696 = arith.mulf %286, %695 : vector<32x256xf32>
      %cst_304 = arith.constant dense<0.000000e+00> : vector<256xf32>
      %697 = vector.multi_reduction <add>, %696, %cst_304 [0] : vector<32x256xf32> to vector<256xf32>
      %698 = vector.shape_cast %697 : vector<256xf32> to vector<1x256xf32>
      %c7_i32_305 = arith.constant 7 : i32
      %699 = vector.broadcast %c7_i32_305 : i32 to vector<1x256xi32>
      %700 = arith.addi %0, %699 : vector<1x256xi32>
      %c0_i32_306 = arith.constant 0 : i32
      %701 = vector.broadcast %c0_i32_306 : i32 to vector<1x256xi32>
      %702 = arith.cmpi sge, %700, %701 : vector<1x256xi32>
      %c7_i32_307 = arith.constant 7 : i32
      %703 = vector.broadcast %c7_i32_307 : i32 to vector<1x256xi32>
      %704 = arith.addi %0, %703 : vector<1x256xi32>
      %c16_i32_308 = arith.constant 16 : i32
      %705 = vector.broadcast %c16_i32_308 : i32 to vector<1x256xi32>
      %706 = arith.cmpi slt, %704, %705 : vector<1x256xi32>
      %707 = arith.andi %702, %706 : vector<1x256xi1>
      %cst_309 = arith.constant 0.000000e+00 : f32
      %708 = vector.broadcast %cst_309 : f32 to vector<1x256xf32>
      %709 = arith.select %707, %698, %708 : vector<1x256xi1>, vector<1x256xf32>
      %c17_i32_310 = arith.constant 17 : i32
      %710 = arith.muli %arg9, %c17_i32_310 : i32
      %c15_i32 = arith.constant 15 : i32
      %711 = arith.addi %710, %c15_i32 : i32
      %712 = arith.cmpf ogt, %709, %692 : vector<1x256xf32>
      %713 = arith.select %712, %709, %692 : vector<1x256xi1>, vector<1x256xf32>
      %714 = vector.broadcast %711 : i32 to vector<1x256xi32>
      %715 = arith.select %712, %714, %694 : vector<1x256xi1>, vector<1x256xi32>
      %716 = vector.extract_strided_slice %379 {offsets = [0, 16], sizes = [32, 256], strides = [1, 1]} : vector<32x272xf32> to vector<32x256xf32>
      %717 = arith.mulf %286, %716 : vector<32x256xf32>
      %cst_311 = arith.constant dense<0.000000e+00> : vector<256xf32>
      %718 = vector.multi_reduction <add>, %717, %cst_311 [0] : vector<32x256xf32> to vector<256xf32>
      %719 = vector.shape_cast %718 : vector<256xf32> to vector<1x256xf32>
      %c8_i32_312 = arith.constant 8 : i32
      %720 = vector.broadcast %c8_i32_312 : i32 to vector<1x256xi32>
      %721 = arith.addi %0, %720 : vector<1x256xi32>
      %c0_i32_313 = arith.constant 0 : i32
      %722 = vector.broadcast %c0_i32_313 : i32 to vector<1x256xi32>
      %723 = arith.cmpi sge, %721, %722 : vector<1x256xi32>
      %c8_i32_314 = arith.constant 8 : i32
      %724 = vector.broadcast %c8_i32_314 : i32 to vector<1x256xi32>
      %725 = arith.addi %0, %724 : vector<1x256xi32>
      %c16_i32_315 = arith.constant 16 : i32
      %726 = vector.broadcast %c16_i32_315 : i32 to vector<1x256xi32>
      %727 = arith.cmpi slt, %725, %726 : vector<1x256xi32>
      %728 = arith.andi %723, %727 : vector<1x256xi1>
      %cst_316 = arith.constant 0.000000e+00 : f32
      %729 = vector.broadcast %cst_316 : f32 to vector<1x256xf32>
      %730 = arith.select %728, %719, %729 : vector<1x256xi1>, vector<1x256xf32>
      %c17_i32_317 = arith.constant 17 : i32
      %731 = arith.muli %arg9, %c17_i32_317 : i32
      %c16_i32_318 = arith.constant 16 : i32
      %732 = arith.addi %731, %c16_i32_318 : i32
      %733 = arith.cmpf ogt, %730, %713 : vector<1x256xf32>
      %734 = arith.select %733, %730, %713 : vector<1x256xi1>, vector<1x256xf32>
      %735 = vector.broadcast %732 : i32 to vector<1x256xi32>
      %736 = arith.select %733, %735, %715 : vector<1x256xi1>, vector<1x256xi32>
      %737 = tpu.concatenate %394, %415, %436, %457, %478, %499, %520, %541, %562, %583, %604, %625, %646, %667, %688, %709 in 0 : vector<1x256xf32>, vector<1x256xf32>, vector<1x256xf32>, vector<1x256xf32>, vector<1x256xf32>, vector<1x256xf32>, vector<1x256xf32>, vector<1x256xf32>, vector<1x256xf32>, vector<1x256xf32>, vector<1x256xf32>, vector<1x256xf32>, vector<1x256xf32>, vector<1x256xf32>, vector<1x256xf32>, vector<1x256xf32> -> vector<16x256xf32>
      %738 = tpu.concatenate %737, %730 in 0 : vector<16x256xf32>, vector<1x256xf32> -> vector<17x256xf32>
      %c0_319 = arith.constant 0 : index
      %739 = arith.index_cast %arg9 : i32 to index
      %c0_320 = arith.constant 0 : index
      %c0_321 = arith.constant 0 : index
      %740 = vector.load %arg5[%c0_319, %739, %c0_320, %c0_321] : memref<1x17x17x256xf32, #tpu.memory_space<vmem>>, vector<1x1x17x256xf32>
      %741 = vector.shape_cast %740 : vector<1x1x17x256xf32> to vector<17x256xf32>
      %742 = vector.shape_cast %738 : vector<17x256xf32> to vector<1x1x17x256xf32>
      tpu.vector_store %arg5[%c0_319, %739, %c0_320, %c0_321], %742 {strides = array<i32>} : memref<1x17x17x256xf32, #tpu.memory_space<vmem>>, vector<1x1x17x256xf32>,
      scf.yield %734, %736 : vector<1x256xf32>, vector<1x256xi32>
    }
    %c17_i32_194 = arith.constant 17 : i32
    %c0_195 = arith.constant 0 : index
    %c0_196 = arith.constant 0 : index
    %c0_197 = arith.constant 0 : index
    %369 = vector.load %arg6[%c0_195, %c0_196, %c0_197] : memref<1x1x256xf32, #tpu.memory_space<vmem>>, vector<1x1x256xf32>
    %370 = vector.shape_cast %369 : vector<1x1x256xf32> to vector<1x256xf32>
    %371 = vector.shape_cast %368#0 : vector<1x256xf32> to vector<1x1x256xf32>
    tpu.vector_store %arg6[%c0_195, %c0_196, %c0_197], %371 {strides = array<i32>} : memref<1x1x256xf32, #tpu.memory_space<vmem>>, vector<1x1x256xf32>,
    %c0_198 = arith.constant 0 : index
    %c0_199 = arith.constant 0 : index
    %c0_200 = arith.constant 0 : index
    %372 = vector.load %arg7[%c0_198, %c0_199, %c0_200] : memref<1x1x256xi32, #tpu.memory_space<vmem>>, vector<1x1x256xi32>
    %373 = vector.shape_cast %372 : vector<1x1x256xi32> to vector<1x256xi32>
    %374 = vector.shape_cast %368#1 : vector<1x256xi32> to vector<1x1x256xi32>
    tpu.vector_store %arg7[%c0_198, %c0_199, %c0_200], %374 {strides = array<i32>} : memref<1x1x256xi32, #tpu.memory_space<vmem>>, vector<1x1x256xi32>,
    return
  }
  func.func @transform_0(%arg0: i32) -> (i32, i32, i32) {
    %c0_i32 = arith.constant 0 : i32
    %c0_i32_0 = arith.constant 0 : i32
    %c0_i32_1 = arith.constant 0 : i32
    return %arg0, %c0_i32, %c0_i32_0 : i32, i32, i32
  }
  func.func @transform_1(%arg0: i32) -> (i32, i32, i32) {
    %c0_i32 = arith.constant 0 : i32
    %c0_i32_0 = arith.constant 0 : i32
    %c0_i32_1 = arith.constant 0 : i32
    return %arg0, %c0_i32, %c0_i32_0 : i32, i32, i32
  }
  func.func @transform_2(%arg0: i32) -> (i32, i32, i32) {
    %c0_i32 = arith.constant 0 : i32
    %c0_i32_0 = arith.constant 0 : i32
    %c0_i32_1 = arith.constant 0 : i32
    %c0_i32_2 = arith.constant 0 : i32
    return %c0_i32, %c0_i32_0, %c0_i32_1 : i32, i32, i32
  }
  func.func @transform_3(%arg0: i32) -> (i32, i32) {
    %c0_i32 = arith.constant 0 : i32
    %c0_i32_0 = arith.constant 0 : i32
    %c0_i32_1 = arith.constant 0 : i32
    return %c0_i32, %c0_i32_0 : i32, i32
  }
  func.func @transform_4(%arg0: i32) -> (i32, i32, i32, i32) {
    %c0_i32 = arith.constant 0 : i32
    %c0_i32_0 = arith.constant 0 : i32
    %c0_i32_1 = arith.constant 0 : i32
    %c0_i32_2 = arith.constant 0 : i32
    return %arg0, %c0_i32, %c0_i32_0, %c0_i32_1 : i32, i32, i32, i32
  }
  func.func @transform_5(%arg0: i32) -> (i32, i32, i32) {
    %c0_i32 = arith.constant 0 : i32
    %c0_i32_0 = arith.constant 0 : i32
    %c0_i32_1 = arith.constant 0 : i32
    return %arg0, %c0_i32, %c0_i32_0 : i32, i32, i32
  }
  func.func @transform_6(%arg0: i32) -> (i32, i32, i32) {
    %c0_i32 = arith.constant 0 : i32
    %c0_i32_0 = arith.constant 0 : i32
    %c0_i32_1 = arith.constant 0 : i32
    return %arg0, %c0_i32, %c0_i32_0 : i32, i32, i32
  }
}

</mosaic_0001>

<llo_original>
// kernel: multiscale_attn_forward.1
$region0: #{multiscale_attn_forward.1}
  #allocation0 [shape = 'u32[]', space=smem, size = 0x4, offset = 0x4, fixed_abs, tag = 'smem constant byte address 0x4 - core index']
  #allocation1 [shape = 'u32[72,128]{1,0:T(1,128)}', space=vmem, size = 0x9000, scoped, tag = 'internal scratch']
  #allocation2 [shape = 'f32[17,32,256]{2,1,0:T(8,128)}', space=vmem, size = 0x88000, scoped, tag = 'scratch operand']
  %s0 = inlined_call_operand.vmem [shape: f32[2,128,256], index: 0, kind: input, shape index: {}]
  %s1 = inlined_call_operand.vmem [shape: f32[2,128,256], index: 1, kind: input, shape index: {}]
  %s2 = inlined_call_operand.vmem [shape: f32[9,128,32], index: 2, kind: input, shape index: {}]
  %s3 = inlined_call_operand.vmem [shape: s32[1,256], index: 3, kind: input, shape index: {}]
  %s4 = inlined_call_operand.vmem [shape: f32[2,17,17,256], index: 4, kind: output, shape index: {0}]
  %s5 = inlined_call_operand.vmem [shape: f32[2,1,256], index: 5, kind: output, shape index: {1}]
  %s6 = inlined_call_operand.vmem [shape: s32[2,1,256], index: 6, kind: output, shape index: {2}]
  %7 = xla_tuple %s4, %s5, %s6
  %s8 = sld [smem:[#allocation0]]
  $region72: #{multiscale_attn_forward.1} parent=0
    _
  %s10 = ssub.s32 1, %s8
  %s11 = scalar_select 0, %s10, %s8
  loop: start=0, step=1, limit=4
  $region2: #{multiscale_attn_forward.1} parent=0 // loop_pre_header
    _
  $region3: #{multiscale_attn_forward.1} parent=0 // loop_header
    %s13 = sphi 0, %s17
    %p14 = scmp.ge.s32.totalorder %s13, 4
    %s23 = sphi 0, %s25
    %s26 = sphi 0, %s23
    %s27 = sphi 0, %s26
    %s43 = sphi 0, %s27
    %s49 = sphi 0, %s51
    %s52 = sphi 0, %s49
    %s53 = sphi 0, %s52
    %s69 = sphi 0, %s53
    %s73 = sphi 0, %s73
    %s75 = sphi 0, %s73
    %s76 = sphi 0, %s75
    %s90 = sphi 0, %s76
    %s94 = sphi 0, %s94
    %s96 = sphi 0, %s94
    %s97 = sphi 0, %s96
    %s111 = sphi 0, %s97
    %s117 = sphi 0, %s119
    %s120 = sphi 0, %s117
    %s121 = sphi 0, %s120
    %s137 = sphi 0, %s121
    %s143 = sphi 0, %s145
    %s146 = sphi 0, %s143
    %s147 = sphi 0, %s146
    %s163 = sphi 0, %s147
    %s169 = sphi 0, %s171
    %s172 = sphi 0, %s169
    %s173 = sphi 0, %s172
    %s189 = sphi 0, %s173
  $region4: #{multiscale_attn_forward.1} parent=0 // loop_header_branch
    %16 = sbr.rel (%p14) target = $region8
  $region5: #{multiscale_attn_forward.1} parent=0 // loop_body
    %s18 = ssub.s32 %s13, 1
    %s19 = ssub.s32 %s13, 2
    %s20 = sadd.s32 %s13, 1
    %s21 = ssub.s32 %s13, %s20
    %p22 = scmp.eq.s32.totalorder %s21, 0
    %s24 = sadd.s32 %s23, 1
    %s25 = scalar_select %p22, %s23, %s24
    %p28 = pneg %p22
    %p29 = scmp.eq.s32.totalorder %s13, 1
    %p30 = por %p28, %p29
    %p31 = scmp.ne.s32.totalorder %s23, %s26
    %p32 = scmp.eq.s32.totalorder %s13, 0
    %p33 = por %p31, %p32
    %p34 = scmp.ne.s32.totalorder %s23, %s26
    %p35 = scmp.eq.s32.totalorder %s18, 1
    %p36 = por %p34, %p35
    %p37 = scmp.ne.s32.totalorder %s26, %s27
    %p38 = scmp.eq.s32.totalorder %s18, 0
    %p39 = por %p37, %p38
    %p40 = scmp.ne.s32.totalorder %s26, %s27
    %p41 = scmp.eq.s32.totalorder %s19, 1
    %p42 = por %p40, %p41
    %p44 = scmp.ne.s32.totalorder %s27, %s43
    %p45 = scmp.eq.s32.totalorder %s19, 0
    %p46 = por %p44, %p45
    %s47 = ssub.s32 %s13, %s20
    %p48 = scmp.eq.s32.totalorder %s47, 0
    %s50 = sadd.s32 %s49, 1
    %s51 = scalar_select %p48, %s49, %s50
    %p54 = pneg %p48
    %p55 = scmp.eq.s32.totalorder %s13, 1
    %p56 = por %p54, %p55
    %p57 = scmp.ne.s32.totalorder %s49, %s52
    %p58 = scmp.eq.s32.totalorder %s13, 0
    %p59 = por %p57, %p58
    %p60 = scmp.ne.s32.totalorder %s49, %s52
    %p61 = scmp.eq.s32.totalorder %s18, 1
    %p62 = por %p60, %p61
    %p63 = scmp.ne.s32.totalorder %s52, %s53
    %p64 = scmp.eq.s32.totalorder %s18, 0
    %p65 = por %p63, %p64
    %p66 = scmp.ne.s32.totalorder %s52, %s53
    %p67 = scmp.eq.s32.totalorder %s19, 1
    %p68 = por %p66, %p67
    %p70 = scmp.ne.s32.totalorder %s53, %s69
    %p71 = scmp.eq.s32.totalorder %s19, 0
    %p72 = por %p70, %p71
    %s74 = sadd.s32 %s73, 1
    %p77 = scmp.eq.s32.totalorder %s13, 1
    %p78 = scmp.ne.s32.totalorder %s73, %s75
    %p79 = scmp.eq.s32.totalorder %s13, 0
    %p80 = por %p78, %p79
    %p81 = scmp.ne.s32.totalorder %s73, %s75
    %p82 = scmp.eq.s32.totalorder %s18, 1
    %p83 = por %p81, %p82
    %p84 = scmp.ne.s32.totalorder %s75, %s76
    %p85 = scmp.eq.s32.totalorder %s18, 0
    %p86 = por %p84, %p85
    %p87 = scmp.ne.s32.totalorder %s75, %s76
    %p88 = scmp.eq.s32.totalorder %s19, 1
    %p89 = por %p87, %p88
    %p91 = scmp.ne.s32.totalorder %s76, %s90
    %p92 = scmp.eq.s32.totalorder %s19, 0
    %p93 = por %p91, %p92
    %s95 = sadd.s32 %s94, 1
    %p98 = scmp.eq.s32.totalorder %s13, 1
    %p99 = scmp.ne.s32.totalorder %s94, %s96
    %p100 = scmp.eq.s32.totalorder %s13, 0
    %p101 = por %p99, %p100
    %p102 = scmp.ne.s32.totalorder %s94, %s96
    %p103 = scmp.eq.s32.totalorder %s18, 1
    %p104 = por %p102, %p103
    %p105 = scmp.ne.s32.totalorder %s96, %s97
    %p106 = scmp.eq.s32.totalorder %s18, 0
    %p107 = por %p105, %p106
    %p108 = scmp.ne.s32.totalorder %s96, %s97
    %p109 = scmp.eq.s32.totalorder %s19, 1
    %p110 = por %p108, %p109
    %p112 = scmp.ne.s32.totalorder %s97, %s111
    %p113 = scmp.eq.s32.totalorder %s19, 0
    %p114 = por %p112, %p113
    %s115 = ssub.s32 %s13, %s20
    %p116 = scmp.eq.s32.totalorder %s115, 0
    %s118 = sadd.s32 %s117, 1
    %s119 = scalar_select %p116, %s117, %s118
    %p122 = pneg %p116
    %p123 = scmp.eq.s32.totalorder %s13, 1
    %p124 = por %p122, %p123
    %p125 = scmp.ne.s32.totalorder %s117, %s120
    %p126 = scmp.eq.s32.totalorder %s13, 0
    %p127 = por %p125, %p126
    %p128 = scmp.ne.s32.totalorder %s117, %s120
    %p129 = scmp.eq.s32.totalorder %s18, 1
    %p130 = por %p128, %p129
    %p131 = scmp.ne.s32.totalorder %s120, %s121
    %p132 = scmp.eq.s32.totalorder %s18, 0
    %p133 = por %p131, %p132
    %p134 = scmp.ne.s32.totalorder %s120, %s121
    %p135 = scmp.eq.s32.totalorder %s19, 1
    %p136 = por %p134, %p135
    %p138 = scmp.ne.s32.totalorder %s121, %s137
    %p139 = scmp.eq.s32.totalorder %s19, 0
    %p140 = por %p138, %p139
    %s141 = ssub.s32 %s13, %s20
    %p142 = scmp.eq.s32.totalorder %s141, 0
    %s144 = sadd.s32 %s143, 1
    %s145 = scalar_select %p142, %s143, %s144
    %p148 = pneg %p142
    %p149 = scmp.eq.s32.totalorder %s13, 1
    %p150 = por %p148, %p149
    %p151 = scmp.ne.s32.totalorder %s143, %s146
    %p152 = scmp.eq.s32.totalorder %s13, 0
    %p153 = por %p151, %p152
    %p154 = scmp.ne.s32.totalorder %s143, %s146
    %p155 = scmp.eq.s32.totalorder %s18, 1
    %p156 = por %p154, %p155
    %p157 = scmp.ne.s32.totalorder %s146, %s147
    %p158 = scmp.eq.s32.totalorder %s18, 0
    %p159 = por %p157, %p158
    %p160 = scmp.ne.s32.totalorder %s146, %s147
    %p161 = scmp.eq.s32.totalorder %s19, 1
    %p162 = por %p160, %p161
    %p164 = scmp.ne.s32.totalorder %s147, %s163
    %p165 = scmp.eq.s32.totalorder %s19, 0
    %p166 = por %p164, %p165
    %s167 = ssub.s32 %s13, %s20
    %p168 = scmp.eq.s32.totalorder %s167, 0
    %s170 = sadd.s32 %s169, 1
    %s171 = scalar_select %p168, %s169, %s170
    %p174 = pneg %p168
    %p175 = scmp.eq.s32.totalorder %s13, 1
    %p176 = por %p174, %p175
    %p177 = scmp.ne.s32.totalorder %s169, %s172
    %p178 = scmp.eq.s32.totalorder %s13, 0
    %p179 = por %p177, %p178
    %p180 = scmp.ne.s32.totalorder %s169, %s172
    %p181 = scmp.eq.s32.totalorder %s18, 1
    %p182 = por %p180, %p181
    %p183 = scmp.ne.s32.totalorder %s172, %s173
    %p184 = scmp.eq.s32.totalorder %s18, 0
    %p185 = por %p183, %p184
    %p186 = scmp.ne.s32.totalorder %s172, %s173
    %p187 = scmp.eq.s32.totalorder %s19, 1
    %p188 = por %p186, %p187
    %p190 = scmp.ne.s32.totalorder %s173, %s189
    %p191 = scmp.eq.s32.totalorder %s19, 0
    %p192 = por %p190, %p191
    %p193 = scmp.le.s32.totalorder 1, %s13
    %p194 = scmp.lt.s32.totalorder %s13, 3
    %p195 = pnand %p193, %p194
    %p196 = pneg %p195
    // Predicated region
    $region9: #{multiscale_attn_forward.1} parent=5 // pred_check
      _
    $region10: #{multiscale_attn_forward.1} parent=5 // pred_check_branch
      %198 = sbr.rel (%p195) target = $region12
    $region11: #{multiscale_attn_forward.1} parent=5 // pred_region
      %s199 = ssub.s32 %s13, 1
      // Predicated region
      $region13: #{multiscale_attn_forward.1} parent=11 // pred_check
        %p200 = pneg %p86
      $region14: #{multiscale_attn_forward.1} parent=11 // pred_check_branch
        %202 = sbr.rel (%p200) target = $region16
      $region15: #{multiscale_attn_forward.1} parent=11 // pred_region
        _
      $region16: #{multiscale_attn_forward.1} parent=11 // pred_fallthru
        _
      // Predicated region
      $region17: #{multiscale_attn_forward.1} parent=11 // pred_check
        %p203 = pneg %p107
      $region18: #{multiscale_attn_forward.1} parent=11 // pred_check_branch
        %205 = sbr.rel (%p203) target = $region20
      $region19: #{multiscale_attn_forward.1} parent=11 // pred_region
        _
      $region20: #{multiscale_attn_forward.1} parent=11 // pred_fallthru
        _
    $region12: #{multiscale_attn_forward.1} parent=5 // pred_fallthru
      _
    %p206 = scmp.lt.s32.totalorder %s13, 2
    // Predicated region
    $region21: #{multiscale_attn_forward.1} parent=5 // pred_check
      %p207 = pneg %p206
    $region22: #{multiscale_attn_forward.1} parent=5 // pred_check_branch
      %209 = sbr.rel (%p207) target = $region24
    $region23: #{multiscale_attn_forward.1} parent=5 // pred_region
      // Predicated region
      $region25: #{multiscale_attn_forward.1} parent=23 // pred_check
        %p210 = pneg %p33
      $region26: #{multiscale_attn_forward.1} parent=23 // pred_check_branch
        %212 = sbr.rel (%p210) target = $region28
      $region27: #{multiscale_attn_forward.1} parent=23 // pred_region
        %p213 = scmp.lt.s32.totalorder %s13, 1
        %s214 = scalar_select %p213, %s13, 1
        %s215 = smul.addr %s214, 32
        %s216 = smul.addr %s215, 8
        %s217 = scalar_lea.vmem %s0, %s216
      $region28: #{multiscale_attn_forward.1} parent=23 // pred_fallthru
        _
      // Predicated region
      $region29: #{multiscale_attn_forward.1} parent=23 // pred_check
        %p218 = pneg %p59
      $region30: #{multiscale_attn_forward.1} parent=23 // pred_check_branch
        %220 = sbr.rel (%p218) target = $region32
      $region31: #{multiscale_attn_forward.1} parent=23 // pred_region
        %p221 = scmp.lt.s32.totalorder %s13, 1
        %s222 = scalar_select %p221, %s13, 1
        %s223 = smul.addr %s222, 32
        %s224 = smul.addr %s223, 8
        %s225 = scalar_lea.vmem %s1, %s224
      $region32: #{multiscale_attn_forward.1} parent=23 // pred_fallthru
        _
    $region24: #{multiscale_attn_forward.1} parent=5 // pred_fallthru
      _
    %p226 = scmp.le.s32.totalorder 1, %s13
    %p227 = scmp.lt.s32.totalorder %s13, 3
    %p228 = pnand %p226, %p227
    %p229 = pneg %p228
    // Predicated region
    $region33: #{multiscale_attn_forward.1} parent=5 // pred_check
      _
    $region34: #{multiscale_attn_forward.1} parent=5 // pred_check_branch
      %231 = sbr.rel (%p228) target = $region36
    $region35: #{multiscale_attn_forward.1} parent=5 // pred_region
      %s232 = ssub.s32 %s13, 1
      %p233 = scmp.lt.s32.totalorder %s18, 1
      %s234 = scalar_select %p233, %s18, 1
      %s235 = smul.addr %s234, 32
      %s236 = smul.addr %s235, 8
      %s237 = scalar_lea.vmem %s0, %s236
      %p238 = pneg %p39
      %p239 = pneg %p36
      %p240 = scmp.lt.s32.totalorder %s18, 1
      %s241 = scalar_select %p240, %s18, 1
      %s242 = smul.addr %s241, 32
      %s243 = smul.addr %s242, 8
      %s244 = scalar_lea.vmem %s1, %s243
      %p245 = pneg %p65
      %p246 = pneg %p62
      %p247 = pneg %p86
      %p248 = pneg %p83
      %p249 = pneg %p107
      %p250 = pneg %p104
      %p251 = pneg %p133
      %p252 = pneg %p130
      %p253 = scmp.lt.s32.totalorder %s18, 1
      %s254 = scalar_select %p253, %s18, 1
      %s255 = smul.addr %s254, 102
      %s256 = smul.addr %s255, 8
      %s257 = scalar_lea.vmem %s4, %s256
      %p258 = pneg %p159
      %p259 = pneg %p156
      %p260 = scmp.lt.s32.totalorder %s18, 1
      %s261 = scalar_select %p260, %s18, 1
      %s262 = smul.addr %s261, 2
      %s263 = scalar_lea.vmem %s5, %s262
      %p264 = pneg %p185
      %p265 = pneg %p182
      %p266 = scmp.lt.s32.totalorder %s18, 1
      %s267 = scalar_select %p266, %s18, 1
      %s268 = smul.addr %s267, 2
      %s269 = scalar_lea.vmem %s6, %s268
      %p270 = scmp.lt.s32.totalorder %s18, 1
      %s271 = scalar_select %p270, %s18, 1
      %s272 = smul.addr %s271, 32
      %s273 = smul.addr %s272, 8
      %s274 = scalar_lea.vmem %s0, %s273
      %p275 = scmp.lt.s32.totalorder %s18, 1
      %s276 = scalar_select %p275, %s18, 1
      %s277 = smul.addr %s276, 32
      %s278 = smul.addr %s277, 8
      %s279 = scalar_lea.vmem %s1, %s278
      %p280 = scmp.lt.s32.totalorder %s18, 1
      %s281 = scalar_select %p280, %s18, 1
      %s282 = smul.addr %s281, 102
      %s283 = smul.addr %s282, 8
      %s284 = scalar_lea.vmem %s4, %s283
      %p285 = scmp.lt.s32.totalorder %s18, 1
      %s286 = scalar_select %p285, %s18, 1
      %s287 = smul.addr %s286, 2
      %s288 = scalar_lea.vmem %s5, %s287
      %p289 = scmp.lt.s32.totalorder %s18, 1
      %s290 = scalar_select %p289, %s18, 1
      %s291 = smul.addr %s290, 2
      %s292 = scalar_lea.vmem %s6, %s291
      %v293 = vld [vmem:[%s3] sm:$0x3]
      %v294 = vld [vmem:[%s274] sm:$0xff]
      %v295 = vld [vmem:[%s274 + $0x8] sm:$0xff]
      %v296 = vld [vmem:[%s274 + $0x10] sm:$0xff]
      %v297 = vld [vmem:[%s274 + $0x18] sm:$0xff]
      %v298 = vld [vmem:[%s274 + $0x20] sm:$0xff]
      %v299 = vld [vmem:[%s274 + $0x28] sm:$0xff]
      %v300 = vld [vmem:[%s274 + $0x30] sm:$0xff]
      %v301 = vld [vmem:[%s274 + $0x38] sm:$0xff]
      %v302 = vld [vmem:[%s274 + $0x40] sm:$0xff]
      %v303 = vld [vmem:[%s274 + $0x48] sm:$0xff]
      %v304 = vld [vmem:[%s274 + $0x50] sm:$0xff]
      %v305 = vld [vmem:[%s274 + $0x58] sm:$0xff]
      %v306 = vld [vmem:[%s274 + $0x60] sm:$0xff]
      %v307 = vld [vmem:[%s274 + $0x68] sm:$0xff]
      %v308 = vld [vmem:[%s274 + $0x70] sm:$0xff]
      %v309 = vld [vmem:[%s274 + $0x78] sm:$0xff]
      %v310 = vld [vmem:[%s274 + $0x80] sm:$0xff]
      %v311 = vld [vmem:[%s274 + $0x88] sm:$0xff]
      %v312 = vld [vmem:[%s274 + $0x90] sm:$0xff]
      %v313 = vld [vmem:[%s274 + $0x98] sm:$0xff]
      %v314 = vld [vmem:[%s274 + $0xa0] sm:$0xff]
      %v315 = vld [vmem:[%s274 + $0xa8] sm:$0xff]
      %v316 = vld [vmem:[%s274 + $0xb0] sm:$0xff]
      %v317 = vld [vmem:[%s274 + $0xb8] sm:$0xff]
      %v318 = vld [vmem:[%s274 + $0xc0] sm:$0xff]
      %v319 = vld [vmem:[%s274 + $0xc8] sm:$0xff]
      %v320 = vld [vmem:[%s274 + $0xd0] sm:$0xff]
      %v321 = vld [vmem:[%s274 + $0xd8] sm:$0xff]
      %v322 = vld [vmem:[%s274 + $0xe0] sm:$0xff]
      %v323 = vld [vmem:[%s274 + $0xe8] sm:$0xff]
      %v324 = vld [vmem:[%s274 + $0xf0] sm:$0xff]
      %v325 = vld [vmem:[%s274 + $0xf8] sm:$0xff]
      %v326 = vld [vmem:[%s2] sm:$0xff]
      %v327 = vld [vmem:[%s2 + $0x8] sm:$0xff]
      %v328 = vld [vmem:[%s2 + $0x10] sm:$0xff]
      %v329 = vld [vmem:[%s2 + $0x18] sm:$0xff]
      %v330 = vld [vmem:[%s2 + $0x20] sm:$0xff]
      %v331 = vld [vmem:[%s2 + $0x28] sm:$0xff]
      %v332 = vld [vmem:[%s2 + $0x30] sm:$0xff]
      %v333 = vld [vmem:[%s2 + $0x38] sm:$0xff]
      %v334 = vld [vmem:[%s2 + $0x40] sm:$0xff]
      %v335 = vld [vmem:[%s2 + $0x48] sm:$0xff]
      %v336 = vld [vmem:[%s2 + $0x50] sm:$0xff]
      %v337 = vld [vmem:[%s2 + $0x58] sm:$0xff]
      %v338 = vld [vmem:[%s2 + $0x60] sm:$0xff]
      %v339 = vld [vmem:[%s2 + $0x68] sm:$0xff]
      %v340 = vld [vmem:[%s2 + $0x70] sm:$0xff]
      %v341 = vld [vmem:[%s2 + $0x78] sm:$0xff]
      %342 = vxpose.xlu0.b32.start [1/16] %v326, 128
      %343 = vxpose.xlu0.b32.cont [2/16] %v327, 128
      %344 = vxpose.xlu0.b32.cont [3/16] %v328, 128
      %345 = vxpose.xlu0.b32.cont [4/16] %v329, 128
      %346 = vxpose.xlu0.b32.cont [5/16] %v330, 128
      %347 = vxpose.xlu0.b32.cont [6/16] %v331, 128
      %348 = vxpose.xlu0.b32.cont [7/16] %v332, 128
      %349 = vxpose.xlu0.b32.cont [8/16] %v333, 128
      %350 = vxpose.xlu0.b32.cont [9/16] %v334, 128
      %351 = vxpose.xlu0.b32.cont [10/16] %v335, 128
      %352 = vxpose.xlu0.b32.cont [11/16] %v336, 128
      %353 = vxpose.xlu0.b32.cont [12/16] %v337, 128
      %354 = vxpose.xlu0.b32.cont [13/16] %v338, 128
      %355 = vxpose.xlu0.b32.cont [14/16] %v339, 128
      %356 = vxpose.xlu0.b32.cont [15/16] %v340, 128
      %357 = vxpose.xlu0.b32.end [16/16] %v341, 128
      %v358 = vpop.trf.xlu0
      %v359 = vpop.trf.xlu0
      %v360 = vpop.trf.xlu0
      %v361 = vpop.trf.xlu0
      %v362 = vpop.trf.xlu0
      %v363 = vpop.trf.xlu0
      %v364 = vpop.trf.xlu0
      %v365 = vpop.trf.xlu0
      %v366 = vpop.trf.xlu0
      %v367 = vpop.trf.xlu0
      %v368 = vpop.trf.xlu0
      %v369 = vpop.trf.xlu0
      %v370 = vpop.trf.xlu0
      %v371 = vpop.trf.xlu0
      %v372 = vpop.trf.xlu0
      %v373 = vpop.trf.xlu0
      %374 = vmatpush.msra.mxu0 %v324
      %375 = vmatpush.msra.mxu0 %v322
      %376 = vmatpush.msra.mxu0 %v320
      %377 = vmatpush.msra.mxu0 %v318
      %378 = vmatpush.msra.mxu0 %v316
      %379 = vmatpush.msra.mxu0 %v314
      %380 = vmatpush.msra.mxu0 %v312
      %381 = vmatpush.msra.mxu0 %v310
      %382 = vmatpush.msra.mxu0 %v308
      %383 = vmatpush.msra.mxu0 %v306
      %384 = vmatpush.msra.mxu0 %v304
      %385 = vmatpush.msra.mxu0 %v302
      %386 = vmatpush.msra.mxu0 %v300
      %387 = vmatpush.msra.mxu0 %v298
      %388 = vmatpush.msra.mxu0 %v296
      %389 = vmatpush.msra.mxu0 %v294
      %390 = vmatmul.f32.gmra.mxu0 %v358
      %v391 = vpop.f32.mrf.mxu0
      %v392 = vadd.f32 0.0, %v391
      %393 = vmatmul.f32.gmra.mxu0 %v359
      %v394 = vpop.f32.mrf.mxu0
      %v395 = vadd.f32 0.0, %v394
      %396 = vmatmul.f32.gmra.mxu0 %v360
      %v397 = vpop.f32.mrf.mxu0
      %v398 = vadd.f32 0.0, %v397
      %399 = vmatmul.f32.gmra.mxu0 %v361
      %v400 = vpop.f32.mrf.mxu0
      %v401 = vadd.f32 0.0, %v400
      %402 = vdwg.mxu0
      %403 = vmatpush.msra.mxu0 %v325
      %404 = vmatpush.msra.mxu0 %v323
      %405 = vmatpush.msra.mxu0 %v321
      %406 = vmatpush.msra.mxu0 %v319
      %407 = vmatpush.msra.mxu0 %v317
      %408 = vmatpush.msra.mxu0 %v315
      %409 = vmatpush.msra.mxu0 %v313
      %410 = vmatpush.msra.mxu0 %v311
      %411 = vmatpush.msra.mxu0 %v309
      %412 = vmatpush.msra.mxu0 %v307
      %413 = vmatpush.msra.mxu0 %v305
      %414 = vmatpush.msra.mxu0 %v303
      %415 = vmatpush.msra.mxu0 %v301
      %416 = vmatpush.msra.mxu0 %v299
      %417 = vmatpush.msra.mxu0 %v297
      %418 = vmatpush.msra.mxu0 %v295
      %419 = vmatmul.f32.gmra.mxu0 %v358
      %v420 = vpop.f32.mrf.mxu0
      %v421 = vadd.f32 0.0, %v420
      %422 = vmatmul.f32.gmra.mxu0 %v359
      %v423 = vpop.f32.mrf.mxu0
      %v424 = vadd.f32 0.0, %v423
      %425 = vmatmul.f32.gmra.mxu0 %v360
      %v426 = vpop.f32.mrf.mxu0
      %v427 = vadd.f32 0.0, %v426
      %428 = vmatmul.f32.gmra.mxu0 %v361
      %v429 = vpop.f32.mrf.mxu0
      %v430 = vadd.f32 0.0, %v429
      %431 = vdwg.mxu0
      %440 = vrot.lane.b32.xlu0 %v392, 17
      %v441 = vpop.permute.xlu0 %440
      %442 = vrot.lane.b32.xlu0 %v421, 17
      %v443 = vpop.permute.xlu0 %442
      %444 = vrot.lane.b32.xlu0 %v395, 17
      %v445 = vpop.permute.xlu0 %444
      %446 = vrot.lane.b32.xlu0 %v424, 17
      %v447 = vpop.permute.xlu0 %446
      %448 = vrot.lane.b32.xlu0 %v398, 17
      %v449 = vpop.permute.xlu0 %448
      %450 = vrot.lane.b32.xlu0 %v427, 17
      %v451 = vpop.permute.xlu0 %450
      %452 = vrot.lane.b32.xlu0 %v401, 17
      %v453 = vpop.permute.xlu0 %452
      %454 = vrot.lane.b32.xlu0 %v430, 17
      %v455 = vpop.permute.xlu0 %454
      %vm456 = vcmask 138240
      %v457 = vsel %vm456, %v441, %v443
      %v458 = vsel %vm456, %v445, %v447
      %v459 = vsel %vm456, %v449, %v451
      %v460 = vsel %vm456, %v453, %v455
      %v469 = vsel %vm456, 0.0, %v441
      %v470 = vsel %vm456, 0.0, %v445
      %v471 = vsel %vm456, 0.0, %v449
      %v472 = vsel %vm456, 0.0, %v453
      %v473 = vadd.s32 %v293, 4294967295
      %vm474 = vcmp.ge.s32.totalorder %v473, 0
      %vm475 = vcmp.lt.s32.totalorder %v473, 16
      %vm476 = vmand %vm474, %vm475
      %v477 = vsel %vm476, 1, 0
      %v478 = vperm.slane %v477, 0
      %v479 = vperm.slane %v477, 1
      %vm480 = vcmp.eq.s32.totalorder %v478, 1
      %vm481 = vcmp.eq.s32.totalorder %v479, 1
      %v482 = vsel %vm480, %v469, 0.0
      %v483 = vsel %vm481, %v457, 0.0
      %v484 = vsel %vm480, %v470, 0.0
      %v485 = vsel %vm481, %v458, 0.0
      %v486 = vsel %vm480, %v471, 0.0
      %v487 = vsel %vm481, %v459, 0.0
      %v488 = vsel %vm480, %v472, 0.0
      %v489 = vsel %vm481, %v460, 0.0
      %s490 = scalar_lea.vmem %s2, 128
      %v491 = vld [vmem:[%s490] sm:$0xff]
      %v492 = vld [vmem:[%s490 + $0x8] sm:$0xff]
      %v493 = vld [vmem:[%s490 + $0x10] sm:$0xff]
      %v494 = vld [vmem:[%s490 + $0x18] sm:$0xff]
      %v495 = vld [vmem:[%s490 + $0x20] sm:$0xff]
      %v496 = vld [vmem:[%s490 + $0x28] sm:$0xff]
      %v497 = vld [vmem:[%s490 + $0x30] sm:$0xff]
      %v498 = vld [vmem:[%s490 + $0x38] sm:$0xff]
      %v499 = vld [vmem:[%s490 + $0x40] sm:$0xff]
      %v500 = vld [vmem:[%s490 + $0x48] sm:$0xff]
      %v501 = vld [vmem:[%s490 + $0x50] sm:$0xff]
      %v502 = vld [vmem:[%s490 + $0x58] sm:$0xff]
      %v503 = vld [vmem:[%s490 + $0x60] sm:$0xff]
      %v504 = vld [vmem:[%s490 + $0x68] sm:$0xff]
      %v505 = vld [vmem:[%s490 + $0x70] sm:$0xff]
      %v506 = vld [vmem:[%s490 + $0x78] sm:$0xff]
      %507 = vxpose.xlu0.b32.start [1/16] %v491, 128
      %508 = vxpose.xlu0.b32.cont [2/16] %v492, 128
      %509 = vxpose.xlu0.b32.cont [3/16] %v493, 128
      %510 = vxpose.xlu0.b32.cont [4/16] %v494, 128
      %511 = vxpose.xlu0.b32.cont [5/16] %v495, 128
      %512 = vxpose.xlu0.b32.cont [6/16] %v496, 128
      %513 = vxpose.xlu0.b32.cont [7/16] %v497, 128
      %514 = vxpose.xlu0.b32.cont [8/16] %v498, 128
      %515 = vxpose.xlu0.b32.cont [9/16] %v499, 128
      %516 = vxpose.xlu0.b32.cont [10/16] %v500, 128
      %517 = vxpose.xlu0.b32.cont [11/16] %v501, 128
      %518 = vxpose.xlu0.b32.cont [12/16] %v502, 128
      %519 = vxpose.xlu0.b32.cont [13/16] %v503, 128
      %520 = vxpose.xlu0.b32.cont [14/16] %v504, 128
      %521 = vxpose.xlu0.b32.cont [15/16] %v505, 128
      %522 = vxpose.xlu0.b32.end [16/16] %v506, 128
      %v523 = vpop.trf.xlu0
      %v524 = vpop.trf.xlu0
      %v525 = vpop.trf.xlu0
      %v526 = vpop.trf.xlu0
      %v527 = vpop.trf.xlu0
      %v528 = vpop.trf.xlu0
      %v529 = vpop.trf.xlu0
      %v530 = vpop.trf.xlu0
      %v531 = vpop.trf.xlu0
      %v532 = vpop.trf.xlu0
      %v533 = vpop.trf.xlu0
      %v534 = vpop.trf.xlu0
      %v535 = vpop.trf.xlu0
      %v536 = vpop.trf.xlu0
      %v537 = vpop.trf.xlu0
      %v538 = vpop.trf.xlu0
      %539 = vmatpush.msra.mxu0 %v324
      %540 = vmatpush.msra.mxu0 %v322
      %541 = vmatpush.msra.mxu0 %v320
      %542 = vmatpush.msra.mxu0 %v318
      %543 = vmatpush.msra.mxu0 %v316
      %544 = vmatpush.msra.mxu0 %v314
      %545 = vmatpush.msra.mxu0 %v312
      %546 = vmatpush.msra.mxu0 %v310
      %547 = vmatpush.msra.mxu0 %v308
      %548 = vmatpush.msra.mxu0 %v306
      %549 = vmatpush.msra.mxu0 %v304
      %550 = vmatpush.msra.mxu0 %v302
      %551 = vmatpush.msra.mxu0 %v300
      %552 = vmatpush.msra.mxu0 %v298
      %553 = vmatpush.msra.mxu0 %v296
      %554 = vmatpush.msra.mxu0 %v294
      %555 = vmatmul.f32.gmra.mxu0 %v523
      %v556 = vpop.f32.mrf.mxu0
      %v557 = vadd.f32 0.0, %v556
      %558 = vmatmul.f32.gmra.mxu0 %v524
      %v559 = vpop.f32.mrf.mxu0
      %v560 = vadd.f32 0.0, %v559
      %561 = vmatmul.f32.gmra.mxu0 %v525
      %v562 = vpop.f32.mrf.mxu0
      %v563 = vadd.f32 0.0, %v562
      %564 = vmatmul.f32.gmra.mxu0 %v526
      %v565 = vpop.f32.mrf.mxu0
      %v566 = vadd.f32 0.0, %v565
      %567 = vdwg.mxu0
      %568 = vmatpush.msra.mxu0 %v325
      %569 = vmatpush.msra.mxu0 %v323
      %570 = vmatpush.msra.mxu0 %v321
      %571 = vmatpush.msra.mxu0 %v319
      %572 = vmatpush.msra.mxu0 %v317
      %573 = vmatpush.msra.mxu0 %v315
      %574 = vmatpush.msra.mxu0 %v313
      %575 = vmatpush.msra.mxu0 %v311
      %576 = vmatpush.msra.mxu0 %v309
      %577 = vmatpush.msra.mxu0 %v307
      %578 = vmatpush.msra.mxu0 %v305
      %579 = vmatpush.msra.mxu0 %v303
      %580 = vmatpush.msra.mxu0 %v301
      %581 = vmatpush.msra.mxu0 %v299
      %582 = vmatpush.msra.mxu0 %v297
      %583 = vmatpush.msra.mxu0 %v295
      %584 = vmatmul.f32.gmra.mxu0 %v523
      %v585 = vpop.f32.mrf.mxu0
      %v586 = vadd.f32 0.0, %v585
      %587 = vmatmul.f32.gmra.mxu0 %v524
      %v588 = vpop.f32.mrf.mxu0
      %v589 = vadd.f32 0.0, %v588
      %590 = vmatmul.f32.gmra.mxu0 %v525
      %v591 = vpop.f32.mrf.mxu0
      %v592 = vadd.f32 0.0, %v591
      %593 = vmatmul.f32.gmra.mxu0 %v526
      %v594 = vpop.f32.mrf.mxu0
      %v595 = vadd.f32 0.0, %v594
      %596 = vdwg.mxu0
      %605 = vrot.lane.b32.xlu0 %v557, 16
      %v606 = vpop.permute.xlu0 %605
      %607 = vrot.lane.b32.xlu0 %v586, 16
      %v608 = vpop.permute.xlu0 %607
      %609 = vrot.lane.b32.xlu0 %v560, 16
      %v610 = vpop.permute.xlu0 %609
      %611 = vrot.lane.b32.xlu0 %v589, 16
      %v612 = vpop.permute.xlu0 %611
      %613 = vrot.lane.b32.xlu0 %v563, 16
      %v614 = vpop.permute.xlu0 %613
      %615 = vrot.lane.b32.xlu0 %v592, 16
      %v616 = vpop.permute.xlu0 %615
      %617 = vrot.lane.b32.xlu0 %v566, 16
      %v618 = vpop.permute.xlu0 %617
      %619 = vrot.lane.b32.xlu0 %v595, 16
      %v620 = vpop.permute.xlu0 %619
      %vm621 = vcmask 130048
      %v622 = vsel %vm621, %v606, %v608
      %v623 = vsel %vm621, %v610, %v612
      %v624 = vsel %vm621, %v614, %v616
      %v625 = vsel %vm621, %v618, %v620
      %v634 = vsel %vm621, 0.0, %v606
      %v635 = vsel %vm621, 0.0, %v610
      %v636 = vsel %vm621, 0.0, %v614
      %v637 = vsel %vm621, 0.0, %v618
      %v638 = vadd.f32 %v482, %v634
      %v639 = vadd.f32 %v483, %v622
      %v640 = vadd.f32 %v484, %v635
      %v641 = vadd.f32 %v485, %v623
      %v642 = vadd.f32 %v486, %v636
      %v643 = vadd.f32 %v487, %v624
      %v644 = vadd.f32 %v488, %v637
      %v645 = vadd.f32 %v489, %v625
      %s646 = scalar_lea.vmem %s2, 256
      %v647 = vld [vmem:[%s646] sm:$0xff]
      %v648 = vld [vmem:[%s646 + $0x8] sm:$0xff]
      %v649 = vld [vmem:[%s646 + $0x10] sm:$0xff]
      %v650 = vld [vmem:[%s646 + $0x18] sm:$0xff]
      %v651 = vld [vmem:[%s646 + $0x20] sm:$0xff]
      %v652 = vld [vmem:[%s646 + $0x28] sm:$0xff]
      %v653 = vld [vmem:[%s646 + $0x30] sm:$0xff]
      %v654 = vld [vmem:[%s646 + $0x38] sm:$0xff]
      %v655 = vld [vmem:[%s646 + $0x40] sm:$0xff]
      %v656 = vld [vmem:[%s646 + $0x48] sm:$0xff]
      %v657 = vld [vmem:[%s646 + $0x50] sm:$0xff]
      %v658 = vld [vmem:[%s646 + $0x58] sm:$0xff]
      %v659 = vld [vmem:[%s646 + $0x60] sm:$0xff]
      %v660 = vld [vmem:[%s646 + $0x68] sm:$0xff]
      %v661 = vld [vmem:[%s646 + $0x70] sm:$0xff]
      %v662 = vld [vmem:[%s646 + $0x78] sm:$0xff]
      %663 = vxpose.xlu0.b32.start [1/16] %v647, 128
      %664 = vxpose.xlu0.b32.cont [2/16] %v648, 128
      %665 = vxpose.xlu0.b32.cont [3/16] %v649, 128
      %666 = vxpose.xlu0.b32.cont [4/16] %v650, 128
      %667 = vxpose.xlu0.b32.cont [5/16] %v651, 128
      %668 = vxpose.xlu0.b32.cont [6/16] %v652, 128
      %669 = vxpose.xlu0.b32.cont [7/16] %v653, 128
      %670 = vxpose.xlu0.b32.cont [8/16] %v654, 128
      %671 = vxpose.xlu0.b32.cont [9/16] %v655, 128
      %672 = vxpose.xlu0.b32.cont [10/16] %v656, 128
      %673 = vxpose.xlu0.b32.cont [11/16] %v657, 128
      %674 = vxpose.xlu0.b32.cont [12/16] %v658, 128
      %675 = vxpose.xlu0.b32.cont [13/16] %v659, 128
      %676 = vxpose.xlu0.b32.cont [14/16] %v660, 128
      %677 = vxpose.xlu0.b32.cont [15/16] %v661, 128
      %678 = vxpose.xlu0.b32.end [16/16] %v662, 128
      %v679 = vpop.trf.xlu0
      %v680 = vpop.trf.xlu0
      %v681 = vpop.trf.xlu0
      %v682 = vpop.trf.xlu0
      %v683 = vpop.trf.xlu0
      %v684 = vpop.trf.xlu0
      %v685 = vpop.trf.xlu0
      %v686 = vpop.trf.xlu0
      %v687 = vpop.trf.xlu0
      %v688 = vpop.trf.xlu0
      %v689 = vpop.trf.xlu0
      %v690 = vpop.trf.xlu0
      %v691 = vpop.trf.xlu0
      %v692 = vpop.trf.xlu0
      %v693 = vpop.trf.xlu0
      %v694 = vpop.trf.xlu0
      %695 = vmatpush.msra.mxu0 %v324
      %696 = vmatpush.msra.mxu0 %v322
      %697 = vmatpush.msra.mxu0 %v320
      %698 = vmatpush.msra.mxu0 %v318
      %699 = vmatpush.msra.mxu0 %v316
      %700 = vmatpush.msra.mxu0 %v314
      %701 = vmatpush.msra.mxu0 %v312
      %702 = vmatpush.msra.mxu0 %v310
      %703 = vmatpush.msra.mxu0 %v308
      %704 = vmatpush.msra.mxu0 %v306
      %705 = vmatpush.msra.mxu0 %v304
      %706 = vmatpush.msra.mxu0 %v302
      %707 = vmatpush.msra.mxu0 %v300
      %708 = vmatpush.msra.mxu0 %v298
      %709 = vmatpush.msra.mxu0 %v296
      %710 = vmatpush.msra.mxu0 %v294
      %711 = vmatmul.f32.gmra.mxu0 %v679
      %v712 = vpop.f32.mrf.mxu0
      %v713 = vadd.f32 0.0, %v712
      %714 = vmatmul.f32.gmra.mxu0 %v680
      %v715 = vpop.f32.mrf.mxu0
      %v716 = vadd.f32 0.0, %v715
      %717 = vmatmul.f32.gmra.mxu0 %v681
      %v718 = vpop.f32.mrf.mxu0
      %v719 = vadd.f32 0.0, %v718
      %720 = vmatmul.f32.gmra.mxu0 %v682
      %v721 = vpop.f32.mrf.mxu0
      %v722 = vadd.f32 0.0, %v721
      %723 = vdwg.mxu0
      %724 = vmatpush.msra.mxu0 %v325
      %725 = vmatpush.msra.mxu0 %v323
      %726 = vmatpush.msra.mxu0 %v321
      %727 = vmatpush.msra.mxu0 %v319
      %728 = vmatpush.msra.mxu0 %v317
      %729 = vmatpush.msra.mxu0 %v315
      %730 = vmatpush.msra.mxu0 %v313
      %731 = vmatpush.msra.mxu0 %v311
      %732 = vmatpush.msra.mxu0 %v309
      %733 = vmatpush.msra.mxu0 %v307
      %734 = vmatpush.msra.mxu0 %v305
      %735 = vmatpush.msra.mxu0 %v303
      %736 = vmatpush.msra.mxu0 %v301
      %737 = vmatpush.msra.mxu0 %v299
      %738 = vmatpush.msra.mxu0 %v297
      %739 = vmatpush.msra.mxu0 %v295
      %740 = vmatmul.f32.gmra.mxu0 %v679
      %v741 = vpop.f32.mrf.mxu0
      %v742 = vadd.f32 0.0, %v741
      %743 = vmatmul.f32.gmra.mxu0 %v680
      %v744 = vpop.f32.mrf.mxu0
      %v745 = vadd.f32 0.0, %v744
      %746 = vmatmul.f32.gmra.mxu0 %v681
      %v747 = vpop.f32.mrf.mxu0
      %v748 = vadd.f32 0.0, %v747
      %749 = vmatmul.f32.gmra.mxu0 %v682
      %v750 = vpop.f32.mrf.mxu0
      %v751 = vadd.f32 0.0, %v750
      %752 = vdwg.mxu0
      %761 = vrot.lane.b32.xlu0 %v713, 15
      %v762 = vpop.permute.xlu0 %761
      %763 = vrot.lane.b32.xlu0 %v742, 15
      %v764 = vpop.permute.xlu0 %763
      %765 = vrot.lane.b32.xlu0 %v716, 15
      %v766 = vpop.permute.xlu0 %765
      %767 = vrot.lane.b32.xlu0 %v745, 15
      %v768 = vpop.permute.xlu0 %767
      %769 = vrot.lane.b32.xlu0 %v719, 15
      %v770 = vpop.permute.xlu0 %769
      %771 = vrot.lane.b32.xlu0 %v748, 15
      %v772 = vpop.permute.xlu0 %771
      %773 = vrot.lane.b32.xlu0 %v722, 15
      %v774 = vpop.permute.xlu0 %773
      %775 = vrot.lane.b32.xlu0 %v751, 15
      %v776 = vpop.permute.xlu0 %775
      %vm777 = vcmask 121856
      %v778 = vsel %vm777, %v762, %v764
      %v779 = vsel %vm777, %v766, %v768
      %v780 = vsel %vm777, %v770, %v772
      %v781 = vsel %vm777, %v774, %v776
      %v790 = vsel %vm777, 0.0, %v762
      %v791 = vsel %vm777, 0.0, %v766
      %v792 = vsel %vm777, 0.0, %v770
      %v793 = vsel %vm777, 0.0, %v774
      %v794 = vadd.s32 %v293, 1
      %vm795 = vcmp.ge.s32.totalorder %v794, 0
      %vm796 = vcmp.lt.s32.totalorder %v794, 16
      %vm797 = vmand %vm795, %vm796
      %v798 = vsel %vm797, 1, 0
      %v799 = vperm.slane %v798, 0
      %v800 = vperm.slane %v798, 1
      %vm801 = vcmp.eq.s32.totalorder %v799, 1
      %vm802 = vcmp.eq.s32.totalorder %v800, 1
      %v803 = vsel %vm801, %v790, 0.0
      %v804 = vsel %vm802, %v778, 0.0
      %v805 = vsel %vm801, %v791, 0.0
      %v806 = vsel %vm802, %v779, 0.0
      %v807 = vsel %vm801, %v792, 0.0
      %v808 = vsel %vm802, %v780, 0.0
      %v809 = vsel %vm801, %v793, 0.0
      %v810 = vsel %vm802, %v781, 0.0
      %v811 = vadd.f32 %v638, %v803
      %v812 = vadd.f32 %v639, %v804
      %v813 = vadd.f32 %v640, %v805
      %v814 = vadd.f32 %v641, %v806
      %v815 = vadd.f32 %v642, %v807
      %v816 = vadd.f32 %v643, %v808
      %v817 = vadd.f32 %v644, %v809
      %v818 = vadd.f32 %v645, %v810
      %s819 = scalar_lea.vmem %s2, 384
      %v820 = vld [vmem:[%s819] sm:$0xff]
      %v821 = vld [vmem:[%s819 + $0x8] sm:$0xff]
      %v822 = vld [vmem:[%s819 + $0x10] sm:$0xff]
      %v823 = vld [vmem:[%s819 + $0x18] sm:$0xff]
      %v824 = vld [vmem:[%s819 + $0x20] sm:$0xff]
      %v825 = vld [vmem:[%s819 + $0x28] sm:$0xff]
      %v826 = vld [vmem:[%s819 + $0x30] sm:$0xff]
      %v827 = vld [vmem:[%s819 + $0x38] sm:$0xff]
      %v828 = vld [vmem:[%s819 + $0x40] sm:$0xff]
      %v829 = vld [vmem:[%s819 + $0x48] sm:$0xff]
      %v830 = vld [vmem:[%s819 + $0x50] sm:$0xff]
      %v831 = vld [vmem:[%s819 + $0x58] sm:$0xff]
      %v832 = vld [vmem:[%s819 + $0x60] sm:$0xff]
      %v833 = vld [vmem:[%s819 + $0x68] sm:$0xff]
      %v834 = vld [vmem:[%s819 + $0x70] sm:$0xff]
      %v835 = vld [vmem:[%s819 + $0x78] sm:$0xff]
      %836 = vxpose.xlu0.b32.start [1/16] %v820, 128
      %837 = vxpose.xlu0.b32.cont [2/16] %v821, 128
      %838 = vxpose.xlu0.b32.cont [3/16] %v822, 128
      %839 = vxpose.xlu0.b32.cont [4/16] %v823, 128
      %840 = vxpose.xlu0.b32.cont [5/16] %v824, 128
      %841 = vxpose.xlu0.b32.cont [6/16] %v825, 128
      %842 = vxpose.xlu0.b32.cont [7/16] %v826, 128
      %843 = vxpose.xlu0.b32.cont [8/16] %v827, 128
      %844 = vxpose.xlu0.b32.cont [9/16] %v828, 128
      %845 = vxpose.xlu0.b32.cont [10/16] %v829, 128
      %846 = vxpose.xlu0.b32.cont [11/16] %v830, 128
      %847 = vxpose.xlu0.b32.cont [12/16] %v831, 128
      %848 = vxpose.xlu0.b32.cont [13/16] %v832, 128
      %849 = vxpose.xlu0.b32.cont [14/16] %v833, 128
      %850 = vxpose.xlu0.b32.cont [15/16] %v834, 128
      %851 = vxpose.xlu0.b32.end [16/16] %v835, 128
      %v852 = vpop.trf.xlu0
      %v853 = vpop.trf.xlu0
      %v854 = vpop.trf.xlu0
      %v855 = vpop.trf.xlu0
      %v856 = vpop.trf.xlu0
      %v857 = vpop.trf.xlu0
      %v858 = vpop.trf.xlu0
      %v859 = vpop.trf.xlu0
      %v860 = vpop.trf.xlu0
      %v861 = vpop.trf.xlu0
      %v862 = vpop.trf.xlu0
      %v863 = vpop.trf.xlu0
      %v864 = vpop.trf.xlu0
      %v865 = vpop.trf.xlu0
      %v866 = vpop.trf.xlu0
      %v867 = vpop.trf.xlu0
      %868 = vmatpush.msra.mxu0 %v324
      %869 = vmatpush.msra.mxu0 %v322
      %870 = vmatpush.msra.mxu0 %v320
      %871 = vmatpush.msra.mxu0 %v318
      %872 = vmatpush.msra.mxu0 %v316
      %873 = vmatpush.msra.mxu0 %v314
      %874 = vmatpush.msra.mxu0 %v312
      %875 = vmatpush.msra.mxu0 %v310
      %876 = vmatpush.msra.mxu0 %v308
      %877 = vmatpush.msra.mxu0 %v306
      %878 = vmatpush.msra.mxu0 %v304
      %879 = vmatpush.msra.mxu0 %v302
      %880 = vmatpush.msra.mxu0 %v300
      %881 = vmatpush.msra.mxu0 %v298
      %882 = vmatpush.msra.mxu0 %v296
      %883 = vmatpush.msra.mxu0 %v294
      %884 = vmatmul.f32.gmra.mxu0 %v852
      %v885 = vpop.f32.mrf.mxu0
      %v886 = vadd.f32 0.0, %v885
      %887 = vmatmul.f32.gmra.mxu0 %v853
      %v888 = vpop.f32.mrf.mxu0
      %v889 = vadd.f32 0.0, %v888
      %890 = vmatmul.f32.gmra.mxu0 %v854
      %v891 = vpop.f32.mrf.mxu0
      %v892 = vadd.f32 0.0, %v891
      %893 = vmatmul.f32.gmra.mxu0 %v855
      %v894 = vpop.f32.mrf.mxu0
      %v895 = vadd.f32 0.0, %v894
      %896 = vdwg.mxu0
      %897 = vmatpush.msra.mxu0 %v325
      %898 = vmatpush.msra.mxu0 %v323
      %899 = vmatpush.msra.mxu0 %v321
      %900 = vmatpush.msra.mxu0 %v319
      %901 = vmatpush.msra.mxu0 %v317
      %902 = vmatpush.msra.mxu0 %v315
      %903 = vmatpush.msra.mxu0 %v313
      %904 = vmatpush.msra.mxu0 %v311
      %905 = vmatpush.msra.mxu0 %v309
      %906 = vmatpush.msra.mxu0 %v307
      %907 = vmatpush.msra.mxu0 %v305
      %908 = vmatpush.msra.mxu0 %v303
      %909 = vmatpush.msra.mxu0 %v301
      %910 = vmatpush.msra.mxu0 %v299
      %911 = vmatpush.msra.mxu0 %v297
      %912 = vmatpush.msra.mxu0 %v295
      %913 = vmatmul.f32.gmra.mxu0 %v852
      %v914 = vpop.f32.mrf.mxu0
      %v915 = vadd.f32 0.0, %v914
      %916 = vmatmul.f32.gmra.mxu0 %v853
      %v917 = vpop.f32.mrf.mxu0
      %v918 = vadd.f32 0.0, %v917
      %919 = vmatmul.f32.gmra.mxu0 %v854
      %v920 = vpop.f32.mrf.mxu0
      %v921 = vadd.f32 0.0, %v920
      %922 = vmatmul.f32.gmra.mxu0 %v855
      %v923 = vpop.f32.mrf.mxu0
      %v924 = vadd.f32 0.0, %v923
      %925 = vdwg.mxu0
      %934 = vrot.lane.b32.xlu0 %v886, 1
      %v935 = vpop.permute.xlu0 %934
      %936 = vrot.lane.b32.xlu0 %v915, 1
      %v937 = vpop.permute.xlu0 %936
      %938 = vrot.lane.b32.xlu0 %v889, 1
      %v939 = vpop.permute.xlu0 %938
      %940 = vrot.lane.b32.xlu0 %v918, 1
      %v941 = vpop.permute.xlu0 %940
      %942 = vrot.lane.b32.xlu0 %v892, 1
      %v943 = vpop.permute.xlu0 %942
      %944 = vrot.lane.b32.xlu0 %v921, 1
      %v945 = vpop.permute.xlu0 %944
      %946 = vrot.lane.b32.xlu0 %v895, 1
      %v947 = vpop.permute.xlu0 %946
      %948 = vrot.lane.b32.xlu0 %v924, 1
      %v949 = vpop.permute.xlu0 %948
      %vm950 = vcmask 7168
      %v951 = vsel %vm950, %v935, %v937
      %v952 = vsel %vm950, %v939, %v941
      %v953 = vsel %vm950, %v943, %v945
      %v954 = vsel %vm950, %v947, %v949
      %v963 = vsel %vm950, 0.0, %v935
      %v964 = vsel %vm950, 0.0, %v939
      %v965 = vsel %vm950, 0.0, %v943
      %v966 = vsel %vm950, 0.0, %v947
      %v967 = vsel %vm480, %v963, 0.0
      %v968 = vsel %vm481, %v951, 0.0
      %v969 = vsel %vm480, %v964, 0.0
      %v970 = vsel %vm481, %v952, 0.0
      %v971 = vsel %vm480, %v965, 0.0
      %v972 = vsel %vm481, %v953, 0.0
      %v973 = vsel %vm480, %v966, 0.0
      %v974 = vsel %vm481, %v954, 0.0
      %v975 = vadd.f32 %v811, %v967
      %v976 = vadd.f32 %v812, %v968
      %v977 = vadd.f32 %v813, %v969
      %v978 = vadd.f32 %v814, %v970
      %v979 = vadd.f32 %v815, %v971
      %v980 = vadd.f32 %v816, %v972
      %v981 = vadd.f32 %v817, %v973
      %v982 = vadd.f32 %v818, %v974
      %s983 = scalar_lea.vmem %s2, 512
      %v984 = vld [vmem:[%s983] sm:$0xff]
      %v985 = vld [vmem:[%s983 + $0x8] sm:$0xff]
      %v986 = vld [vmem:[%s983 + $0x10] sm:$0xff]
      %v987 = vld [vmem:[%s983 + $0x18] sm:$0xff]
      %v988 = vld [vmem:[%s983 + $0x20] sm:$0xff]
      %v989 = vld [vmem:[%s983 + $0x28] sm:$0xff]
      %v990 = vld [vmem:[%s983 + $0x30] sm:$0xff]
      %v991 = vld [vmem:[%s983 + $0x38] sm:$0xff]
      %v992 = vld [vmem:[%s983 + $0x40] sm:$0xff]
      %v993 = vld [vmem:[%s983 + $0x48] sm:$0xff]
      %v994 = vld [vmem:[%s983 + $0x50] sm:$0xff]
      %v995 = vld [vmem:[%s983 + $0x58] sm:$0xff]
      %v996 = vld [vmem:[%s983 + $0x60] sm:$0xff]
      %v997 = vld [vmem:[%s983 + $0x68] sm:$0xff]
      %v998 = vld [vmem:[%s983 + $0x70] sm:$0xff]
      %v999 = vld [vmem:[%s983 + $0x78] sm:$0xff]
      %1000 = vxpose.xlu0.b32.start [1/16] %v984, 128
      %1001 = vxpose.xlu0.b32.cont [2/16] %v985, 128
      %1002 = vxpose.xlu0.b32.cont [3/16] %v986, 128
      %1003 = vxpose.xlu0.b32.cont [4/16] %v987, 128
      %1004 = vxpose.xlu0.b32.cont [5/16] %v988, 128
      %1005 = vxpose.xlu0.b32.cont [6/16] %v989, 128
      %1006 = vxpose.xlu0.b32.cont [7/16] %v990, 128
      %1007 = vxpose.xlu0.b32.cont [8/16] %v991, 128
      %1008 = vxpose.xlu0.b32.cont [9/16] %v992, 128
      %1009 = vxpose.xlu0.b32.cont [10/16] %v993, 128
      %1010 = vxpose.xlu0.b32.cont [11/16] %v994, 128
      %1011 = vxpose.xlu0.b32.cont [12/16] %v995, 128
      %1012 = vxpose.xlu0.b32.cont [13/16] %v996, 128
      %1013 = vxpose.xlu0.b32.cont [14/16] %v997, 128
      %1014 = vxpose.xlu0.b32.cont [15/16] %v998, 128
      %1015 = vxpose.xlu0.b32.end [16/16] %v999, 128
      %v1016 = vpop.trf.xlu0
      %v1017 = vpop.trf.xlu0
      %v1018 = vpop.trf.xlu0
      %v1019 = vpop.trf.xlu0
      %v1020 = vpop.trf.xlu0
      %v1021 = vpop.trf.xlu0
      %v1022 = vpop.trf.xlu0
      %v1023 = vpop.trf.xlu0
      %v1024 = vpop.trf.xlu0
      %v1025 = vpop.trf.xlu0
      %v1026 = vpop.trf.xlu0
      %v1027 = vpop.trf.xlu0
      %v1028 = vpop.trf.xlu0
      %v1029 = vpop.trf.xlu0
      %v1030 = vpop.trf.xlu0
      %v1031 = vpop.trf.xlu0
      %1032 = vmatpush.msra.mxu0 %v324
      %1033 = vmatpush.msra.mxu0 %v322
      %1034 = vmatpush.msra.mxu0 %v320
      %1035 = vmatpush.msra.mxu0 %v318
      %1036 = vmatpush.msra.mxu0 %v316
      %1037 = vmatpush.msra.mxu0 %v314
      %1038 = vmatpush.msra.mxu0 %v312
      %1039 = vmatpush.msra.mxu0 %v310
      %1040 = vmatpush.msra.mxu0 %v308
      %1041 = vmatpush.msra.mxu0 %v306
      %1042 = vmatpush.msra.mxu0 %v304
      %1043 = vmatpush.msra.mxu0 %v302
      %1044 = vmatpush.msra.mxu0 %v300
      %1045 = vmatpush.msra.mxu0 %v298
      %1046 = vmatpush.msra.mxu0 %v296
      %1047 = vmatpush.msra.mxu0 %v294
      %1048 = vmatmul.f32.gmra.mxu0 %v1016
      %v1049 = vpop.f32.mrf.mxu0
      %v1050 = vadd.f32 0.0, %v1049
      %1051 = vmatmul.f32.gmra.mxu0 %v1017
      %v1052 = vpop.f32.mrf.mxu0
      %v1053 = vadd.f32 0.0, %v1052
      %1054 = vmatmul.f32.gmra.mxu0 %v1018
      %v1055 = vpop.f32.mrf.mxu0
      %v1056 = vadd.f32 0.0, %v1055
      %1057 = vmatmul.f32.gmra.mxu0 %v1019
      %v1058 = vpop.f32.mrf.mxu0
      %v1059 = vadd.f32 0.0, %v1058
      %1060 = vdwg.mxu0
      %1061 = vmatpush.msra.mxu0 %v325
      %1062 = vmatpush.msra.mxu0 %v323
      %1063 = vmatpush.msra.mxu0 %v321
      %1064 = vmatpush.msra.mxu0 %v319
      %1065 = vmatpush.msra.mxu0 %v317
      %1066 = vmatpush.msra.mxu0 %v315
      %1067 = vmatpush.msra.mxu0 %v313
      %1068 = vmatpush.msra.mxu0 %v311
      %1069 = vmatpush.msra.mxu0 %v309
      %1070 = vmatpush.msra.mxu0 %v307
      %1071 = vmatpush.msra.mxu0 %v305
      %1072 = vmatpush.msra.mxu0 %v303
      %1073 = vmatpush.msra.mxu0 %v301
      %1074 = vmatpush.msra.mxu0 %v299
      %1075 = vmatpush.msra.mxu0 %v297
      %1076 = vmatpush.msra.mxu0 %v295
      %1077 = vmatmul.f32.gmra.mxu0 %v1016
      %v1078 = vpop.f32.mrf.mxu0
      %v1079 = vadd.f32 0.0, %v1078
      %1080 = vmatmul.f32.gmra.mxu0 %v1017
      %v1081 = vpop.f32.mrf.mxu0
      %v1082 = vadd.f32 0.0, %v1081
      %1083 = vmatmul.f32.gmra.mxu0 %v1018
      %v1084 = vpop.f32.mrf.mxu0
      %v1085 = vadd.f32 0.0, %v1084
      %1086 = vmatmul.f32.gmra.mxu0 %v1019
      %v1087 = vpop.f32.mrf.mxu0
      %v1088 = vadd.f32 0.0, %v1087
      %1089 = vdwg.mxu0
      %v1090 = vadd.f32 %v975, %v1050
      %v1091 = vadd.f32 %v976, %v1079
      %v1092 = vadd.f32 %v977, %v1053
      %v1093 = vadd.f32 %v978, %v1082
      %v1094 = vadd.f32 %v979, %v1056
      %v1095 = vadd.f32 %v980, %v1085
      %v1096 = vadd.f32 %v981, %v1059
      %v1097 = vadd.f32 %v982, %v1088
      %s1098 = scalar_lea.vmem %s2, 640
      %v1099 = vld [vmem:[%s1098] sm:$0xff]
      %v1100 = vld [vmem:[%s1098 + $0x8] sm:$0xff]
      %v1101 = vld [vmem:[%s1098 + $0x10] sm:$0xff]
      %v1102 = vld [vmem:[%s1098 + $0x18] sm:$0xff]
      %v1103 = vld [vmem:[%s1098 + $0x20] sm:$0xff]
      %v1104 = vld [vmem:[%s1098 + $0x28] sm:$0xff]
      %v1105 = vld [vmem:[%s1098 + $0x30] sm:$0xff]
      %v1106 = vld [vmem:[%s1098 + $0x38] sm:$0xff]
      %v1107 = vld [vmem:[%s1098 + $0x40] sm:$0xff]
      %v1108 = vld [vmem:[%s1098 + $0x48] sm:$0xff]
      %v1109 = vld [vmem:[%s1098 + $0x50] sm:$0xff]
      %v1110 = vld [vmem:[%s1098 + $0x58] sm:$0xff]
      %v1111 = vld [vmem:[%s1098 + $0x60] sm:$0xff]
      %v1112 = vld [vmem:[%s1098 + $0x68] sm:$0xff]
      %v1113 = vld [vmem:[%s1098 + $0x70] sm:$0xff]
      %v1114 = vld [vmem:[%s1098 + $0x78] sm:$0xff]
      %1115 = vxpose.xlu0.b32.start [1/16] %v1099, 128
      %1116 = vxpose.xlu0.b32.cont [2/16] %v1100, 128
      %1117 = vxpose.xlu0.b32.cont [3/16] %v1101, 128
      %1118 = vxpose.xlu0.b32.cont [4/16] %v1102, 128
      %1119 = vxpose.xlu0.b32.cont [5/16] %v1103, 128
      %1120 = vxpose.xlu0.b32.cont [6/16] %v1104, 128
      %1121 = vxpose.xlu0.b32.cont [7/16] %v1105, 128
      %1122 = vxpose.xlu0.b32.cont [8/16] %v1106, 128
      %1123 = vxpose.xlu0.b32.cont [9/16] %v1107, 128
      %1124 = vxpose.xlu0.b32.cont [10/16] %v1108, 128
      %1125 = vxpose.xlu0.b32.cont [11/16] %v1109, 128
      %1126 = vxpose.xlu0.b32.cont [12/16] %v1110, 128
      %1127 = vxpose.xlu0.b32.cont [13/16] %v1111, 128
      %1128 = vxpose.xlu0.b32.cont [14/16] %v1112, 128
      %1129 = vxpose.xlu0.b32.cont [15/16] %v1113, 128
      %1130 = vxpose.xlu0.b32.end [16/16] %v1114, 128
      %v1131 = vpop.trf.xlu0
      %v1132 = vpop.trf.xlu0
      %v1133 = vpop.trf.xlu0
      %v1134 = vpop.trf.xlu0
      %v1135 = vpop.trf.xlu0
      %v1136 = vpop.trf.xlu0
      %v1137 = vpop.trf.xlu0
      %v1138 = vpop.trf.xlu0
      %v1139 = vpop.trf.xlu0
      %v1140 = vpop.trf.xlu0
      %v1141 = vpop.trf.xlu0
      %v1142 = vpop.trf.xlu0
      %v1143 = vpop.trf.xlu0
      %v1144 = vpop.trf.xlu0
      %v1145 = vpop.trf.xlu0
      %v1146 = vpop.trf.xlu0
      %1147 = vmatpush.msra.mxu0 %v324
      %1148 = vmatpush.msra.mxu0 %v322
      %1149 = vmatpush.msra.mxu0 %v320
      %1150 = vmatpush.msra.mxu0 %v318
      %1151 = vmatpush.msra.mxu0 %v316
      %1152 = vmatpush.msra.mxu0 %v314
      %1153 = vmatpush.msra.mxu0 %v312
      %1154 = vmatpush.msra.mxu0 %v310
      %1155 = vmatpush.msra.mxu0 %v308
      %1156 = vmatpush.msra.mxu0 %v306
      %1157 = vmatpush.msra.mxu0 %v304
      %1158 = vmatpush.msra.mxu0 %v302
      %1159 = vmatpush.msra.mxu0 %v300
      %1160 = vmatpush.msra.mxu0 %v298
      %1161 = vmatpush.msra.mxu0 %v296
      %1162 = vmatpush.msra.mxu0 %v294
      %1163 = vmatmul.f32.gmra.mxu0 %v1131
      %v1164 = vpop.f32.mrf.mxu0
      %v1165 = vadd.f32 0.0, %v1164
      %1166 = vmatmul.f32.gmra.mxu0 %v1132
      %v1167 = vpop.f32.mrf.mxu0
      %v1168 = vadd.f32 0.0, %v1167
      %1169 = vmatmul.f32.gmra.mxu0 %v1133
      %v1170 = vpop.f32.mrf.mxu0
      %v1171 = vadd.f32 0.0, %v1170
      %1172 = vmatmul.f32.gmra.mxu0 %v1134
      %v1173 = vpop.f32.mrf.mxu0
      %v1174 = vadd.f32 0.0, %v1173
      %1175 = vdwg.mxu0
      %1176 = vmatpush.msra.mxu0 %v325
      %1177 = vmatpush.msra.mxu0 %v323
      %1178 = vmatpush.msra.mxu0 %v321
      %1179 = vmatpush.msra.mxu0 %v319
      %1180 = vmatpush.msra.mxu0 %v317
      %1181 = vmatpush.msra.mxu0 %v315
      %1182 = vmatpush.msra.mxu0 %v313
      %1183 = vmatpush.msra.mxu0 %v311
      %1184 = vmatpush.msra.mxu0 %v309
      %1185 = vmatpush.msra.mxu0 %v307
      %1186 = vmatpush.msra.mxu0 %v305
      %1187 = vmatpush.msra.mxu0 %v303
      %1188 = vmatpush.msra.mxu0 %v301
      %1189 = vmatpush.msra.mxu0 %v299
      %1190 = vmatpush.msra.mxu0 %v297
      %1191 = vmatpush.msra.mxu0 %v295
      %1192 = vmatmul.f32.gmra.mxu0 %v1131
      %v1193 = vpop.f32.mrf.mxu0
      %v1194 = vadd.f32 0.0, %v1193
      %1195 = vmatmul.f32.gmra.mxu0 %v1132
      %v1196 = vpop.f32.mrf.mxu0
      %v1197 = vadd.f32 0.0, %v1196
      %1198 = vmatmul.f32.gmra.mxu0 %v1133
      %v1199 = vpop.f32.mrf.mxu0
      %v1200 = vadd.f32 0.0, %v1199
      %1201 = vmatmul.f32.gmra.mxu0 %v1134
      %v1202 = vpop.f32.mrf.mxu0
      %v1203 = vadd.f32 0.0, %v1202
      %1204 = vdwg.mxu0
      %1213 = vrot.lane.b32.xlu0 %v1165, 127
      %v1214 = vpop.permute.xlu0 %1213
      %1215 = vrot.lane.b32.xlu0 %v1194, 127
      %v1216 = vpop.permute.xlu0 %1215
      %1217 = vrot.lane.b32.xlu0 %v1168, 127
      %v1218 = vpop.permute.xlu0 %1217
      %1219 = vrot.lane.b32.xlu0 %v1197, 127
      %v1220 = vpop.permute.xlu0 %1219
      %1221 = vrot.lane.b32.xlu0 %v1171, 127
      %v1222 = vpop.permute.xlu0 %1221
      %1223 = vrot.lane.b32.xlu0 %v1200, 127
      %v1224 = vpop.permute.xlu0 %1223
      %1225 = vrot.lane.b32.xlu0 %v1174, 127
      %v1226 = vpop.permute.xlu0 %1225
      %1227 = vrot.lane.b32.xlu0 %v1203, 127
      %v1228 = vpop.permute.xlu0 %1227
      %vm1229 = vcmask 1039360
      %v1230 = vsel %vm1229, %v1214, %v1216
      %v1231 = vsel %vm1229, %v1218, %v1220
      %v1232 = vsel %vm1229, %v1222, %v1224
      %v1233 = vsel %vm1229, %v1226, %v1228
      %v1242 = vsel %vm1229, %v1216, 0.0
      %v1243 = vsel %vm1229, %v1220, 0.0
      %v1244 = vsel %vm1229, %v1224, 0.0
      %v1245 = vsel %vm1229, %v1228, 0.0
      %v1246 = vsel %vm801, %v1230, 0.0
      %v1247 = vsel %vm802, %v1242, 0.0
      %v1248 = vsel %vm801, %v1231, 0.0
      %v1249 = vsel %vm802, %v1243, 0.0
      %v1250 = vsel %vm801, %v1232, 0.0
      %v1251 = vsel %vm802, %v1244, 0.0
      %v1252 = vsel %vm801, %v1233, 0.0
      %v1253 = vsel %vm802, %v1245, 0.0
      %v1254 = vadd.f32 %v1090, %v1246
      %v1255 = vadd.f32 %v1091, %v1247
      %v1256 = vadd.f32 %v1092, %v1248
      %v1257 = vadd.f32 %v1093, %v1249
      %v1258 = vadd.f32 %v1094, %v1250
      %v1259 = vadd.f32 %v1095, %v1251
      %v1260 = vadd.f32 %v1096, %v1252
      %v1261 = vadd.f32 %v1097, %v1253
      %s1262 = scalar_lea.vmem %s2, 768
      %v1263 = vld [vmem:[%s1262] sm:$0xff]
      %v1264 = vld [vmem:[%s1262 + $0x8] sm:$0xff]
      %v1265 = vld [vmem:[%s1262 + $0x10] sm:$0xff]
      %v1266 = vld [vmem:[%s1262 + $0x18] sm:$0xff]
      %v1267 = vld [vmem:[%s1262 + $0x20] sm:$0xff]
      %v1268 = vld [vmem:[%s1262 + $0x28] sm:$0xff]
      %v1269 = vld [vmem:[%s1262 + $0x30] sm:$0xff]
      %v1270 = vld [vmem:[%s1262 + $0x38] sm:$0xff]
      %v1271 = vld [vmem:[%s1262 + $0x40] sm:$0xff]
      %v1272 = vld [vmem:[%s1262 + $0x48] sm:$0xff]
      %v1273 = vld [vmem:[%s1262 + $0x50] sm:$0xff]
      %v1274 = vld [vmem:[%s1262 + $0x58] sm:$0xff]
      %v1275 = vld [vmem:[%s1262 + $0x60] sm:$0xff]
      %v1276 = vld [vmem:[%s1262 + $0x68] sm:$0xff]
      %v1277 = vld [vmem:[%s1262 + $0x70] sm:$0xff]
      %v1278 = vld [vmem:[%s1262 + $0x78] sm:$0xff]
      %1279 = vxpose.xlu0.b32.start [1/16] %v1263, 128
      %1280 = vxpose.xlu0.b32.cont [2/16] %v1264, 128
      %1281 = vxpose.xlu0.b32.cont [3/16] %v1265, 128
      %1282 = vxpose.xlu0.b32.cont [4/16] %v1266, 128
      %1283 = vxpose.xlu0.b32.cont [5/16] %v1267, 128
      %1284 = vxpose.xlu0.b32.cont [6/16] %v1268, 128
      %1285 = vxpose.xlu0.b32.cont [7/16] %v1269, 128
      %1286 = vxpose.xlu0.b32.cont [8/16] %v1270, 128
      %1287 = vxpose.xlu0.b32.cont [9/16] %v1271, 128
      %1288 = vxpose.xlu0.b32.cont [10/16] %v1272, 128
      %1289 = vxpose.xlu0.b32.cont [11/16] %v1273, 128
      %1290 = vxpose.xlu0.b32.cont [12/16] %v1274, 128
      %1291 = vxpose.xlu0.b32.cont [13/16] %v1275, 128
      %1292 = vxpose.xlu0.b32.cont [14/16] %v1276, 128
      %1293 = vxpose.xlu0.b32.cont [15/16] %v1277, 128
      %1294 = vxpose.xlu0.b32.end [16/16] %v1278, 128
      %v1295 = vpop.trf.xlu0
      %v1296 = vpop.trf.xlu0
      %v1297 = vpop.trf.xlu0
      %v1298 = vpop.trf.xlu0
      %v1299 = vpop.trf.xlu0
      %v1300 = vpop.trf.xlu0
      %v1301 = vpop.trf.xlu0
      %v1302 = vpop.trf.xlu0
      %v1303 = vpop.trf.xlu0
      %v1304 = vpop.trf.xlu0
      %v1305 = vpop.trf.xlu0
      %v1306 = vpop.trf.xlu0
      %v1307 = vpop.trf.xlu0
      %v1308 = vpop.trf.xlu0
      %v1309 = vpop.trf.xlu0
      %v1310 = vpop.trf.xlu0
      %1311 = vmatpush.msra.mxu0 %v324
      %1312 = vmatpush.msra.mxu0 %v322
      %1313 = vmatpush.msra.mxu0 %v320
      %1314 = vmatpush.msra.mxu0 %v318
      %1315 = vmatpush.msra.mxu0 %v316
      %1316 = vmatpush.msra.mxu0 %v314
      %1317 = vmatpush.msra.mxu0 %v312
      %1318 = vmatpush.msra.mxu0 %v310
      %1319 = vmatpush.msra.mxu0 %v308
      %1320 = vmatpush.msra.mxu0 %v306
      %1321 = vmatpush.msra.mxu0 %v304
      %1322 = vmatpush.msra.mxu0 %v302
      %1323 = vmatpush.msra.mxu0 %v300
      %1324 = vmatpush.msra.mxu0 %v298
      %1325 = vmatpush.msra.mxu0 %v296
      %1326 = vmatpush.msra.mxu0 %v294
      %1327 = vmatmul.f32.gmra.mxu0 %v1295
      %v1328 = vpop.f32.mrf.mxu0
      %v1329 = vadd.f32 0.0, %v1328
      %1330 = vmatmul.f32.gmra.mxu0 %v1296
      %v1331 = vpop.f32.mrf.mxu0
      %v1332 = vadd.f32 0.0, %v1331
      %1333 = vmatmul.f32.gmra.mxu0 %v1297
      %v1334 = vpop.f32.mrf.mxu0
      %v1335 = vadd.f32 0.0, %v1334
      %1336 = vmatmul.f32.gmra.mxu0 %v1298
      %v1337 = vpop.f32.mrf.mxu0
      %v1338 = vadd.f32 0.0, %v1337
      %1339 = vdwg.mxu0
      %1340 = vmatpush.msra.mxu0 %v325
      %1341 = vmatpush.msra.mxu0 %v323
      %1342 = vmatpush.msra.mxu0 %v321
      %1343 = vmatpush.msra.mxu0 %v319
      %1344 = vmatpush.msra.mxu0 %v317
      %1345 = vmatpush.msra.mxu0 %v315
      %1346 = vmatpush.msra.mxu0 %v313
      %1347 = vmatpush.msra.mxu0 %v311
      %1348 = vmatpush.msra.mxu0 %v309
      %1349 = vmatpush.msra.mxu0 %v307
      %1350 = vmatpush.msra.mxu0 %v305
      %1351 = vmatpush.msra.mxu0 %v303
      %1352 = vmatpush.msra.mxu0 %v301
      %1353 = vmatpush.msra.mxu0 %v299
      %1354 = vmatpush.msra.mxu0 %v297
      %1355 = vmatpush.msra.mxu0 %v295
      %1356 = vmatmul.f32.gmra.mxu0 %v1295
      %v1357 = vpop.f32.mrf.mxu0
      %v1358 = vadd.f32 0.0, %v1357
      %1359 = vmatmul.f32.gmra.mxu0 %v1296
      %v1360 = vpop.f32.mrf.mxu0
      %v1361 = vadd.f32 0.0, %v1360
      %1362 = vmatmul.f32.gmra.mxu0 %v1297
      %v1363 = vpop.f32.mrf.mxu0
      %v1364 = vadd.f32 0.0, %v1363
      %1365 = vmatmul.f32.gmra.mxu0 %v1298
      %v1366 = vpop.f32.mrf.mxu0
      %v1367 = vadd.f32 0.0, %v1366
      %1368 = vdwg.mxu0
      %1377 = vrot.lane.b32.xlu0 %v1329, 113
      %v1378 = vpop.permute.xlu0 %1377
      %1379 = vrot.lane.b32.xlu0 %v1358, 113
      %v1380 = vpop.permute.xlu0 %1379
      %1381 = vrot.lane.b32.xlu0 %v1332, 113
      %v1382 = vpop.permute.xlu0 %1381
      %1383 = vrot.lane.b32.xlu0 %v1361, 113
      %v1384 = vpop.permute.xlu0 %1383
      %1385 = vrot.lane.b32.xlu0 %v1335, 113
      %v1386 = vpop.permute.xlu0 %1385
      %1387 = vrot.lane.b32.xlu0 %v1364, 113
      %v1388 = vpop.permute.xlu0 %1387
      %1389 = vrot.lane.b32.xlu0 %v1338, 113
      %v1390 = vpop.permute.xlu0 %1389
      %1391 = vrot.lane.b32.xlu0 %v1367, 113
      %v1392 = vpop.permute.xlu0 %1391
      %vm1393 = vcmask 924672
      %v1394 = vsel %vm1393, %v1378, %v1380
      %v1395 = vsel %vm1393, %v1382, %v1384
      %v1396 = vsel %vm1393, %v1386, %v1388
      %v1397 = vsel %vm1393, %v1390, %v1392
      %v1406 = vsel %vm1393, %v1380, 0.0
      %v1407 = vsel %vm1393, %v1384, 0.0
      %v1408 = vsel %vm1393, %v1388, 0.0
      %v1409 = vsel %vm1393, %v1392, 0.0
      %v1410 = vsel %vm480, %v1394, 0.0
      %v1411 = vsel %vm481, %v1406, 0.0
      %v1412 = vsel %vm480, %v1395, 0.0
      %v1413 = vsel %vm481, %v1407, 0.0
      %v1414 = vsel %vm480, %v1396, 0.0
      %v1415 = vsel %vm481, %v1408, 0.0
      %v1416 = vsel %vm480, %v1397, 0.0
      %v1417 = vsel %vm481, %v1409, 0.0
      %v1418 = vadd.f32 %v1254, %v1410
      %v1419 = vadd.f32 %v1255, %v1411
      %v1420 = vadd.f32 %v1256, %v1412
      %v1421 = vadd.f32 %v1257, %v1413
      %v1422 = vadd.f32 %v1258, %v1414
      %v1423 = vadd.f32 %v1259, %v1415
      %v1424 = vadd.f32 %v1260, %v1416
      %v1425 = vadd.f32 %v1261, %v1417
      %s1426 = scalar_lea.vmem %s2, 896
      %v1427 = vld [vmem:[%s1426] sm:$0xff]
      %v1428 = vld [vmem:[%s1426 + $0x8] sm:$0xff]
      %v1429 = vld [vmem:[%s1426 + $0x10] sm:$0xff]
      %v1430 = vld [vmem:[%s1426 + $0x18] sm:$0xff]
      %v1431 = vld [vmem:[%s1426 + $0x20] sm:$0xff]
      %v1432 = vld [vmem:[%s1426 + $0x28] sm:$0xff]
      %v1433 = vld [vmem:[%s1426 + $0x30] sm:$0xff]
      %v1434 = vld [vmem:[%s1426 + $0x38] sm:$0xff]
      %v1435 = vld [vmem:[%s1426 + $0x40] sm:$0xff]
      %v1436 = vld [vmem:[%s1426 + $0x48] sm:$0xff]
      %v1437 = vld [vmem:[%s1426 + $0x50] sm:$0xff]
      %v1438 = vld [vmem:[%s1426 + $0x58] sm:$0xff]
      %v1439 = vld [vmem:[%s1426 + $0x60] sm:$0xff]
      %v1440 = vld [vmem:[%s1426 + $0x68] sm:$0xff]
      %v1441 = vld [vmem:[%s1426 + $0x70] sm:$0xff]
      %v1442 = vld [vmem:[%s1426 + $0x78] sm:$0xff]
      %1443 = vxpose.xlu0.b32.start [1/16] %v1427, 128
      %1444 = vxpose.xlu0.b32.cont [2/16] %v1428, 128
      %1445 = vxpose.xlu0.b32.cont [3/16] %v1429, 128
      %1446 = vxpose.xlu0.b32.cont [4/16] %v1430, 128
      %1447 = vxpose.xlu0.b32.cont [5/16] %v1431, 128
      %1448 = vxpose.xlu0.b32.cont [6/16] %v1432, 128
      %1449 = vxpose.xlu0.b32.cont [7/16] %v1433, 128
      %1450 = vxpose.xlu0.b32.cont [8/16] %v1434, 128
      %1451 = vxpose.xlu0.b32.cont [9/16] %v1435, 128
      %1452 = vxpose.xlu0.b32.cont [10/16] %v1436, 128
      %1453 = vxpose.xlu0.b32.cont [11/16] %v1437, 128
      %1454 = vxpose.xlu0.b32.cont [12/16] %v1438, 128
      %1455 = vxpose.xlu0.b32.cont [13/16] %v1439, 128
      %1456 = vxpose.xlu0.b32.cont [14/16] %v1440, 128
      %1457 = vxpose.xlu0.b32.cont [15/16] %v1441, 128
      %1458 = vxpose.xlu0.b32.end [16/16] %v1442, 128
      %v1459 = vpop.trf.xlu0
      %v1460 = vpop.trf.xlu0
      %v1461 = vpop.trf.xlu0
      %v1462 = vpop.trf.xlu0
      %v1463 = vpop.trf.xlu0
      %v1464 = vpop.trf.xlu0
      %v1465 = vpop.trf.xlu0
      %v1466 = vpop.trf.xlu0
      %v1467 = vpop.trf.xlu0
      %v1468 = vpop.trf.xlu0
      %v1469 = vpop.trf.xlu0
      %v1470 = vpop.trf.xlu0
      %v1471 = vpop.trf.xlu0
      %v1472 = vpop.trf.xlu0
      %v1473 = vpop.trf.xlu0
      %v1474 = vpop.trf.xlu0
      %1475 = vmatpush.msra.mxu0 %v324
      %1476 = vmatpush.msra.mxu0 %v322
      %1477 = vmatpush.msra.mxu0 %v320
      %1478 = vmatpush.msra.mxu0 %v318
      %1479 = vmatpush.msra.mxu0 %v316
      %1480 = vmatpush.msra.mxu0 %v314
      %1481 = vmatpush.msra.mxu0 %v312
      %1482 = vmatpush.msra.mxu0 %v310
      %1483 = vmatpush.msra.mxu0 %v308
      %1484 = vmatpush.msra.mxu0 %v306
      %1485 = vmatpush.msra.mxu0 %v304
      %1486 = vmatpush.msra.mxu0 %v302
      %1487 = vmatpush.msra.mxu0 %v300
      %1488 = vmatpush.msra.mxu0 %v298
      %1489 = vmatpush.msra.mxu0 %v296
      %1490 = vmatpush.msra.mxu0 %v294
      %1491 = vmatmul.f32.gmra.mxu0 %v1459
      %v1492 = vpop.f32.mrf.mxu0
      %v1493 = vadd.f32 0.0, %v1492
      %1494 = vmatmul.f32.gmra.mxu0 %v1460
      %v1495 = vpop.f32.mrf.mxu0
      %v1496 = vadd.f32 0.0, %v1495
      %1497 = vmatmul.f32.gmra.mxu0 %v1461
      %v1498 = vpop.f32.mrf.mxu0
      %v1499 = vadd.f32 0.0, %v1498
      %1500 = vmatmul.f32.gmra.mxu0 %v1462
      %v1501 = vpop.f32.mrf.mxu0
      %v1502 = vadd.f32 0.0, %v1501
      %1503 = vdwg.mxu0
      %1504 = vmatpush.msra.mxu0 %v325
      %1505 = vmatpush.msra.mxu0 %v323
      %1506 = vmatpush.msra.mxu0 %v321
      %1507 = vmatpush.msra.mxu0 %v319
      %1508 = vmatpush.msra.mxu0 %v317
      %1509 = vmatpush.msra.mxu0 %v315
      %1510 = vmatpush.msra.mxu0 %v313
      %1511 = vmatpush.msra.mxu0 %v311
      %1512 = vmatpush.msra.mxu0 %v309
      %1513 = vmatpush.msra.mxu0 %v307
      %1514 = vmatpush.msra.mxu0 %v305
      %1515 = vmatpush.msra.mxu0 %v303
      %1516 = vmatpush.msra.mxu0 %v301
      %1517 = vmatpush.msra.mxu0 %v299
      %1518 = vmatpush.msra.mxu0 %v297
      %1519 = vmatpush.msra.mxu0 %v295
      %1520 = vmatmul.f32.gmra.mxu0 %v1459
      %v1521 = vpop.f32.mrf.mxu0
      %v1522 = vadd.f32 0.0, %v1521
      %1523 = vmatmul.f32.gmra.mxu0 %v1460
      %v1524 = vpop.f32.mrf.mxu0
      %v1525 = vadd.f32 0.0, %v1524
      %1526 = vmatmul.f32.gmra.mxu0 %v1461
      %v1527 = vpop.f32.mrf.mxu0
      %v1528 = vadd.f32 0.0, %v1527
      %1529 = vmatmul.f32.gmra.mxu0 %v1462
      %v1530 = vpop.f32.mrf.mxu0
      %v1531 = vadd.f32 0.0, %v1530
      %1532 = vdwg.mxu0
      %1541 = vrot.lane.b32.xlu0 %v1493, 112
      %v1542 = vpop.permute.xlu0 %1541
      %1543 = vrot.lane.b32.xlu0 %v1522, 112
      %v1544 = vpop.permute.xlu0 %1543
      %1545 = vrot.lane.b32.xlu0 %v1496, 112
      %v1546 = vpop.permute.xlu0 %1545
      %1547 = vrot.lane.b32.xlu0 %v1525, 112
      %v1548 = vpop.permute.xlu0 %1547
      %1549 = vrot.lane.b32.xlu0 %v1499, 112
      %v1550 = vpop.permute.xlu0 %1549
      %1551 = vrot.lane.b32.xlu0 %v1528, 112
      %v1552 = vpop.permute.xlu0 %1551
      %1553 = vrot.lane.b32.xlu0 %v1502, 112
      %v1554 = vpop.permute.xlu0 %1553
      %1555 = vrot.lane.b32.xlu0 %v1531, 112
      %v1556 = vpop.permute.xlu0 %1555
      %vm1557 = vcmask 916480
      %v1558 = vsel %vm1557, %v1542, %v1544
      %v1559 = vsel %vm1557, %v1546, %v1548
      %v1560 = vsel %vm1557, %v1550, %v1552
      %v1561 = vsel %vm1557, %v1554, %v1556
      %v1570 = vsel %vm1557, %v1544, 0.0
      %v1571 = vsel %vm1557, %v1548, 0.0
      %v1572 = vsel %vm1557, %v1552, 0.0
      %v1573 = vsel %vm1557, %v1556, 0.0
      %v1574 = vadd.f32 %v1418, %v1558
      %v1575 = vadd.f32 %v1419, %v1570
      %v1576 = vadd.f32 %v1420, %v1559
      %v1577 = vadd.f32 %v1421, %v1571
      %v1578 = vadd.f32 %v1422, %v1560
      %v1579 = vadd.f32 %v1423, %v1572
      %v1580 = vadd.f32 %v1424, %v1561
      %v1581 = vadd.f32 %v1425, %v1573
      %s1582 = scalar_lea.vmem %s2, 1024
      %v1583 = vld [vmem:[%s1582] sm:$0xff]
      %v1584 = vld [vmem:[%s1582 + $0x8] sm:$0xff]
      %v1585 = vld [vmem:[%s1582 + $0x10] sm:$0xff]
      %v1586 = vld [vmem:[%s1582 + $0x18] sm:$0xff]
      %v1587 = vld [vmem:[%s1582 + $0x20] sm:$0xff]
      %v1588 = vld [vmem:[%s1582 + $0x28] sm:$0xff]
      %v1589 = vld [vmem:[%s1582 + $0x30] sm:$0xff]
      %v1590 = vld [vmem:[%s1582 + $0x38] sm:$0xff]
      %v1591 = vld [vmem:[%s1582 + $0x40] sm:$0xff]
      %v1592 = vld [vmem:[%s1582 + $0x48] sm:$0xff]
      %v1593 = vld [vmem:[%s1582 + $0x50] sm:$0xff]
      %v1594 = vld [vmem:[%s1582 + $0x58] sm:$0xff]
      %v1595 = vld [vmem:[%s1582 + $0x60] sm:$0xff]
      %v1596 = vld [vmem:[%s1582 + $0x68] sm:$0xff]
      %v1597 = vld [vmem:[%s1582 + $0x70] sm:$0xff]
      %v1598 = vld [vmem:[%s1582 + $0x78] sm:$0xff]
      %1599 = vxpose.xlu0.b32.start [1/16] %v1583, 128
      %1600 = vxpose.xlu0.b32.cont [2/16] %v1584, 128
      %1601 = vxpose.xlu0.b32.cont [3/16] %v1585, 128
      %1602 = vxpose.xlu0.b32.cont [4/16] %v1586, 128
      %1603 = vxpose.xlu0.b32.cont [5/16] %v1587, 128
      %1604 = vxpose.xlu0.b32.cont [6/16] %v1588, 128
      %1605 = vxpose.xlu0.b32.cont [7/16] %v1589, 128
      %1606 = vxpose.xlu0.b32.cont [8/16] %v1590, 128
      %1607 = vxpose.xlu0.b32.cont [9/16] %v1591, 128
      %1608 = vxpose.xlu0.b32.cont [10/16] %v1592, 128
      %1609 = vxpose.xlu0.b32.cont [11/16] %v1593, 128
      %1610 = vxpose.xlu0.b32.cont [12/16] %v1594, 128
      %1611 = vxpose.xlu0.b32.cont [13/16] %v1595, 128
      %1612 = vxpose.xlu0.b32.cont [14/16] %v1596, 128
      %1613 = vxpose.xlu0.b32.cont [15/16] %v1597, 128
      %1614 = vxpose.xlu0.b32.end [16/16] %v1598, 128
      %v1615 = vpop.trf.xlu0
      %v1616 = vpop.trf.xlu0
      %v1617 = vpop.trf.xlu0
      %v1618 = vpop.trf.xlu0
      %v1619 = vpop.trf.xlu0
      %v1620 = vpop.trf.xlu0
      %v1621 = vpop.trf.xlu0
      %v1622 = vpop.trf.xlu0
      %v1623 = vpop.trf.xlu0
      %v1624 = vpop.trf.xlu0
      %v1625 = vpop.trf.xlu0
      %v1626 = vpop.trf.xlu0
      %v1627 = vpop.trf.xlu0
      %v1628 = vpop.trf.xlu0
      %v1629 = vpop.trf.xlu0
      %v1630 = vpop.trf.xlu0
      %1631 = vmatpush.msra.mxu0 %v324
      %1632 = vmatpush.msra.mxu0 %v322
      %1633 = vmatpush.msra.mxu0 %v320
      %1634 = vmatpush.msra.mxu0 %v318
      %1635 = vmatpush.msra.mxu0 %v316
      %1636 = vmatpush.msra.mxu0 %v314
      %1637 = vmatpush.msra.mxu0 %v312
      %1638 = vmatpush.msra.mxu0 %v310
      %1639 = vmatpush.msra.mxu0 %v308
      %1640 = vmatpush.msra.mxu0 %v306
      %1641 = vmatpush.msra.mxu0 %v304
      %1642 = vmatpush.msra.mxu0 %v302
      %1643 = vmatpush.msra.mxu0 %v300
      %1644 = vmatpush.msra.mxu0 %v298
      %1645 = vmatpush.msra.mxu0 %v296
      %1646 = vmatpush.msra.mxu0 %v294
      %1647 = vmatmul.f32.gmra.mxu0 %v1615
      %v1648 = vpop.f32.mrf.mxu0
      %v1649 = vadd.f32 0.0, %v1648
      %1650 = vmatmul.f32.gmra.mxu0 %v1616
      %v1651 = vpop.f32.mrf.mxu0
      %v1652 = vadd.f32 0.0, %v1651
      %1653 = vmatmul.f32.gmra.mxu0 %v1617
      %v1654 = vpop.f32.mrf.mxu0
      %v1655 = vadd.f32 0.0, %v1654
      %1656 = vmatmul.f32.gmra.mxu0 %v1618
      %v1657 = vpop.f32.mrf.mxu0
      %v1658 = vadd.f32 0.0, %v1657
      %1659 = vdwg.mxu0
      %1660 = vmatpush.msra.mxu0 %v325
      %1661 = vmatpush.msra.mxu0 %v323
      %1662 = vmatpush.msra.mxu0 %v321
      %1663 = vmatpush.msra.mxu0 %v319
      %1664 = vmatpush.msra.mxu0 %v317
      %1665 = vmatpush.msra.mxu0 %v315
      %1666 = vmatpush.msra.mxu0 %v313
      %1667 = vmatpush.msra.mxu0 %v311
      %1668 = vmatpush.msra.mxu0 %v309
      %1669 = vmatpush.msra.mxu0 %v307
      %1670 = vmatpush.msra.mxu0 %v305
      %1671 = vmatpush.msra.mxu0 %v303
      %1672 = vmatpush.msra.mxu0 %v301
      %1673 = vmatpush.msra.mxu0 %v299
      %1674 = vmatpush.msra.mxu0 %v297
      %1675 = vmatpush.msra.mxu0 %v295
      %1676 = vmatmul.f32.gmra.mxu0 %v1615
      %v1677 = vpop.f32.mrf.mxu0
      %v1678 = vadd.f32 0.0, %v1677
      %1679 = vmatmul.f32.gmra.mxu0 %v1616
      %v1680 = vpop.f32.mrf.mxu0
      %v1681 = vadd.f32 0.0, %v1680
      %1682 = vmatmul.f32.gmra.mxu0 %v1617
      %v1683 = vpop.f32.mrf.mxu0
      %v1684 = vadd.f32 0.0, %v1683
      %1685 = vmatmul.f32.gmra.mxu0 %v1618
      %v1686 = vpop.f32.mrf.mxu0
      %v1687 = vadd.f32 0.0, %v1686
      %1688 = vdwg.mxu0
      %1697 = vrot.lane.b32.xlu0 %v1649, 111
      %v1698 = vpop.permute.xlu0 %1697
      %1699 = vrot.lane.b32.xlu0 %v1678, 111
      %v1700 = vpop.permute.xlu0 %1699
      %1701 = vrot.lane.b32.xlu0 %v1652, 111
      %v1702 = vpop.permute.xlu0 %1701
      %1703 = vrot.lane.b32.xlu0 %v1681, 111
      %v1704 = vpop.permute.xlu0 %1703
      %1705 = vrot.lane.b32.xlu0 %v1655, 111
      %v1706 = vpop.permute.xlu0 %1705
      %1707 = vrot.lane.b32.xlu0 %v1684, 111
      %v1708 = vpop.permute.xlu0 %1707
      %1709 = vrot.lane.b32.xlu0 %v1658, 111
      %v1710 = vpop.permute.xlu0 %1709
      %1711 = vrot.lane.b32.xlu0 %v1687, 111
      %v1712 = vpop.permute.xlu0 %1711
      %vm1713 = vcmask 908288
      %v1714 = vsel %vm1713, %v1698, %v1700
      %v1715 = vsel %vm1713, %v1702, %v1704
      %v1716 = vsel %vm1713, %v1706, %v1708
      %v1717 = vsel %vm1713, %v1710, %v1712
      %v1726 = vsel %vm1713, %v1700, 0.0
      %v1727 = vsel %vm1713, %v1704, 0.0
      %v1728 = vsel %vm1713, %v1708, 0.0
      %v1729 = vsel %vm1713, %v1712, 0.0
      %v1730 = vsel %vm801, %v1714, 0.0
      %v1731 = vsel %vm802, %v1726, 0.0
      %v1732 = vsel %vm801, %v1715, 0.0
      %v1733 = vsel %vm802, %v1727, 0.0
      %v1734 = vsel %vm801, %v1716, 0.0
      %v1735 = vsel %vm802, %v1728, 0.0
      %v1736 = vsel %vm801, %v1717, 0.0
      %v1737 = vsel %vm802, %v1729, 0.0
      %v1738 = vadd.f32 %v1574, %v1730
      %v1739 = vadd.f32 %v1575, %v1731
      %v1740 = vadd.f32 %v1576, %v1732
      %v1741 = vadd.f32 %v1577, %v1733
      %v1742 = vadd.f32 %v1578, %v1734
      %v1743 = vadd.f32 %v1579, %v1735
      %v1744 = vadd.f32 %v1580, %v1736
      %v1745 = vadd.f32 %v1581, %v1737
      %v1746 = vld [vmem:[%s279] sm:$0xff]
      %v1747 = vld [vmem:[%s279 + $0x8] sm:$0xff]
      %v1748 = vld [vmem:[%s279 + $0x10] sm:$0xff]
      %v1749 = vld [vmem:[%s279 + $0x18] sm:$0xff]
      %v1750 = vld [vmem:[%s279 + $0x20] sm:$0xff]
      %v1751 = vld [vmem:[%s279 + $0x28] sm:$0xff]
      %v1752 = vld [vmem:[%s279 + $0x30] sm:$0xff]
      %v1753 = vld [vmem:[%s279 + $0x38] sm:$0xff]
      %v1754 = vld [vmem:[%s279 + $0x40] sm:$0xff]
      %v1755 = vld [vmem:[%s279 + $0x48] sm:$0xff]
      %v1756 = vld [vmem:[%s279 + $0x50] sm:$0xff]
      %v1757 = vld [vmem:[%s279 + $0x58] sm:$0xff]
      %v1758 = vld [vmem:[%s279 + $0x60] sm:$0xff]
      %v1759 = vld [vmem:[%s279 + $0x68] sm:$0xff]
      %v1760 = vld [vmem:[%s279 + $0x70] sm:$0xff]
      %v1761 = vld [vmem:[%s279 + $0x78] sm:$0xff]
      %v1762 = vld [vmem:[%s279 + $0x80] sm:$0xff]
      %v1763 = vld [vmem:[%s279 + $0x88] sm:$0xff]
      %v1764 = vld [vmem:[%s279 + $0x90] sm:$0xff]
      %v1765 = vld [vmem:[%s279 + $0x98] sm:$0xff]
      %v1766 = vld [vmem:[%s279 + $0xa0] sm:$0xff]
      %v1767 = vld [vmem:[%s279 + $0xa8] sm:$0xff]
      %v1768 = vld [vmem:[%s279 + $0xb0] sm:$0xff]
      %v1769 = vld [vmem:[%s279 + $0xb8] sm:$0xff]
      %v1770 = vld [vmem:[%s279 + $0xc0] sm:$0xff]
      %v1771 = vld [vmem:[%s279 + $0xc8] sm:$0xff]
      %v1772 = vld [vmem:[%s279 + $0xd0] sm:$0xff]
      %v1773 = vld [vmem:[%s279 + $0xd8] sm:$0xff]
      %v1774 = vld [vmem:[%s279 + $0xe0] sm:$0xff]
      %v1775 = vld [vmem:[%s279 + $0xe8] sm:$0xff]
      %v1776 = vld [vmem:[%s279 + $0xf0] sm:$0xff]
      %v1777 = vld [vmem:[%s279 + $0xf8] sm:$0xff]
      %1778 = vmatpush.msra.mxu0 %v1776
      %1779 = vmatpush.msra.mxu0 %v1774
      %1780 = vmatpush.msra.mxu0 %v1772
      %1781 = vmatpush.msra.mxu0 %v1770
      %1782 = vmatpush.msra.mxu0 %v1768
      %1783 = vmatpush.msra.mxu0 %v1766
      %1784 = vmatpush.msra.mxu0 %v1764
      %1785 = vmatpush.msra.mxu0 %v1762
      %1786 = vmatpush.msra.mxu0 %v1760
      %1787 = vmatpush.msra.mxu0 %v1758
      %1788 = vmatpush.msra.mxu0 %v1756
      %1789 = vmatpush.msra.mxu0 %v1754
      %1790 = vmatpush.msra.mxu0 %v1752
      %1791 = vmatpush.msra.mxu0 %v1750
      %1792 = vmatpush.msra.mxu0 %v1748
      %1793 = vmatpush.msra.mxu0 %v1746
      %1794 = vmatmul.f32.gmra.mxu0 %v358
      %v1795 = vpop.f32.mrf.mxu0
      %v1796 = vadd.f32 0.0, %v1795
      %1797 = vmatmul.f32.gmra.mxu0 %v359
      %v1798 = vpop.f32.mrf.mxu0
      %v1799 = vadd.f32 0.0, %v1798
      %1800 = vmatmul.f32.gmra.mxu0 %v360
      %v1801 = vpop.f32.mrf.mxu0
      %v1802 = vadd.f32 0.0, %v1801
      %1803 = vmatmul.f32.gmra.mxu0 %v361
      %v1804 = vpop.f32.mrf.mxu0
      %v1805 = vadd.f32 0.0, %v1804
      %1806 = vdwg.mxu0
      %1807 = vmatpush.msra.mxu0 %v1777
      %1808 = vmatpush.msra.mxu0 %v1775
      %1809 = vmatpush.msra.mxu0 %v1773
      %1810 = vmatpush.msra.mxu0 %v1771
      %1811 = vmatpush.msra.mxu0 %v1769
      %1812 = vmatpush.msra.mxu0 %v1767
      %1813 = vmatpush.msra.mxu0 %v1765
      %1814 = vmatpush.msra.mxu0 %v1763
      %1815 = vmatpush.msra.mxu0 %v1761
      %1816 = vmatpush.msra.mxu0 %v1759
      %1817 = vmatpush.msra.mxu0 %v1757
      %1818 = vmatpush.msra.mxu0 %v1755
      %1819 = vmatpush.msra.mxu0 %v1753
      %1820 = vmatpush.msra.mxu0 %v1751
      %1821 = vmatpush.msra.mxu0 %v1749
      %1822 = vmatpush.msra.mxu0 %v1747
      %1823 = vmatmul.f32.gmra.mxu0 %v358
      %v1824 = vpop.f32.mrf.mxu0
      %v1825 = vadd.f32 0.0, %v1824
      %1826 = vmatmul.f32.gmra.mxu0 %v359
      %v1827 = vpop.f32.mrf.mxu0
      %v1828 = vadd.f32 0.0, %v1827
      %1829 = vmatmul.f32.gmra.mxu0 %v360
      %v1830 = vpop.f32.mrf.mxu0
      %v1831 = vadd.f32 0.0, %v1830
      %1832 = vmatmul.f32.gmra.mxu0 %v361
      %v1833 = vpop.f32.mrf.mxu0
      %v1834 = vadd.f32 0.0, %v1833
      %1835 = vdwg.mxu0
      %1844 = vrot.lane.b32.xlu0 %v1796, 17
      %v1845 = vpop.permute.xlu0 %1844
      %1846 = vrot.lane.b32.xlu0 %v1825, 17
      %v1847 = vpop.permute.xlu0 %1846
      %1848 = vrot.lane.b32.xlu0 %v1799, 17
      %v1849 = vpop.permute.xlu0 %1848
      %1850 = vrot.lane.b32.xlu0 %v1828, 17
      %v1851 = vpop.permute.xlu0 %1850
      %1852 = vrot.lane.b32.xlu0 %v1802, 17
      %v1853 = vpop.permute.xlu0 %1852
      %1854 = vrot.lane.b32.xlu0 %v1831, 17
      %v1855 = vpop.permute.xlu0 %1854
      %1856 = vrot.lane.b32.xlu0 %v1805, 17
      %v1857 = vpop.permute.xlu0 %1856
      %1858 = vrot.lane.b32.xlu0 %v1834, 17
      %v1859 = vpop.permute.xlu0 %1858
      %v1860 = vsel %vm456, %v1845, %v1847
      %v1861 = vsel %vm456, %v1849, %v1851
      %v1862 = vsel %vm456, %v1853, %v1855
      %v1863 = vsel %vm456, %v1857, %v1859
      %v1872 = vsel %vm456, 0.0, %v1845
      %v1873 = vsel %vm456, 0.0, %v1849
      %v1874 = vsel %vm456, 0.0, %v1853
      %v1875 = vsel %vm456, 0.0, %v1857
      %v1876 = vsel %vm480, %v1872, 0.0
      %v1877 = vsel %vm481, %v1860, 0.0
      %v1878 = vsel %vm480, %v1873, 0.0
      %v1879 = vsel %vm481, %v1861, 0.0
      %v1880 = vsel %vm480, %v1874, 0.0
      %v1881 = vsel %vm481, %v1862, 0.0
      %v1882 = vsel %vm480, %v1875, 0.0
      %v1883 = vsel %vm481, %v1863, 0.0
      %1884 = vmatpush.msra.mxu0 %v1776
      %1885 = vmatpush.msra.mxu0 %v1774
      %1886 = vmatpush.msra.mxu0 %v1772
      %1887 = vmatpush.msra.mxu0 %v1770
      %1888 = vmatpush.msra.mxu0 %v1768
      %1889 = vmatpush.msra.mxu0 %v1766
      %1890 = vmatpush.msra.mxu0 %v1764
      %1891 = vmatpush.msra.mxu0 %v1762
      %1892 = vmatpush.msra.mxu0 %v1760
      %1893 = vmatpush.msra.mxu0 %v1758
      %1894 = vmatpush.msra.mxu0 %v1756
      %1895 = vmatpush.msra.mxu0 %v1754
      %1896 = vmatpush.msra.mxu0 %v1752
      %1897 = vmatpush.msra.mxu0 %v1750
      %1898 = vmatpush.msra.mxu0 %v1748
      %1899 = vmatpush.msra.mxu0 %v1746
      %1900 = vmatmul.f32.gmra.mxu0 %v523
      %v1901 = vpop.f32.mrf.mxu0
      %v1902 = vadd.f32 0.0, %v1901
      %1903 = vmatmul.f32.gmra.mxu0 %v524
      %v1904 = vpop.f32.mrf.mxu0
      %v1905 = vadd.f32 0.0, %v1904
      %1906 = vmatmul.f32.gmra.mxu0 %v525
      %v1907 = vpop.f32.mrf.mxu0
      %v1908 = vadd.f32 0.0, %v1907
      %1909 = vmatmul.f32.gmra.mxu0 %v526
      %v1910 = vpop.f32.mrf.mxu0
      %v1911 = vadd.f32 0.0, %v1910
      %1912 = vdwg.mxu0
      %1913 = vmatpush.msra.mxu0 %v1777
      %1914 = vmatpush.msra.mxu0 %v1775
      %1915 = vmatpush.msra.mxu0 %v1773
      %1916 = vmatpush.msra.mxu0 %v1771
      %1917 = vmatpush.msra.mxu0 %v1769
      %1918 = vmatpush.msra.mxu0 %v1767
      %1919 = vmatpush.msra.mxu0 %v1765
      %1920 = vmatpush.msra.mxu0 %v1763
      %1921 = vmatpush.msra.mxu0 %v1761
      %1922 = vmatpush.msra.mxu0 %v1759
      %1923 = vmatpush.msra.mxu0 %v1757
      %1924 = vmatpush.msra.mxu0 %v1755
      %1925 = vmatpush.msra.mxu0 %v1753
      %1926 = vmatpush.msra.mxu0 %v1751
      %1927 = vmatpush.msra.mxu0 %v1749
      %1928 = vmatpush.msra.mxu0 %v1747
      %1929 = vmatmul.f32.gmra.mxu0 %v523
      %v1930 = vpop.f32.mrf.mxu0
      %v1931 = vadd.f32 0.0, %v1930
      %1932 = vmatmul.f32.gmra.mxu0 %v524
      %v1933 = vpop.f32.mrf.mxu0
      %v1934 = vadd.f32 0.0, %v1933
      %1935 = vmatmul.f32.gmra.mxu0 %v525
      %v1936 = vpop.f32.mrf.mxu0
      %v1937 = vadd.f32 0.0, %v1936
      %1938 = vmatmul.f32.gmra.mxu0 %v526
      %v1939 = vpop.f32.mrf.mxu0
      %v1940 = vadd.f32 0.0, %v1939
      %1941 = vdwg.mxu0
      %1950 = vrot.lane.b32.xlu0 %v1902, 16
      %v1951 = vpop.permute.xlu0 %1950
      %1952 = vrot.lane.b32.xlu0 %v1931, 16
      %v1953 = vpop.permute.xlu0 %1952
      %1954 = vrot.lane.b32.xlu0 %v1905, 16
      %v1955 = vpop.permute.xlu0 %1954
      %1956 = vrot.lane.b32.xlu0 %v1934, 16
      %v1957 = vpop.permute.xlu0 %1956
      %1958 = vrot.lane.b32.xlu0 %v1908, 16
      %v1959 = vpop.permute.xlu0 %1958
      %1960 = vrot.lane.b32.xlu0 %v1937, 16
      %v1961 = vpop.permute.xlu0 %1960
      %1962 = vrot.lane.b32.xlu0 %v1911, 16
      %v1963 = vpop.permute.xlu0 %1962
      %1964 = vrot.lane.b32.xlu0 %v1940, 16
      %v1965 = vpop.permute.xlu0 %1964
      %v1966 = vsel %vm621, %v1951, %v1953
      %v1967 = vsel %vm621, %v1955, %v1957
      %v1968 = vsel %vm621, %v1959, %v1961
      %v1969 = vsel %vm621, %v1963, %v1965
      %v1978 = vsel %vm621, 0.0, %v1951
      %v1979 = vsel %vm621, 0.0, %v1955
      %v1980 = vsel %vm621, 0.0, %v1959
      %v1981 = vsel %vm621, 0.0, %v1963
      %v1982 = vadd.f32 %v1876, %v1978
      %v1983 = vadd.f32 %v1877, %v1966
      %v1984 = vadd.f32 %v1878, %v1979
      %v1985 = vadd.f32 %v1879, %v1967
      %v1986 = vadd.f32 %v1880, %v1980
      %v1987 = vadd.f32 %v1881, %v1968
      %v1988 = vadd.f32 %v1882, %v1981
      %v1989 = vadd.f32 %v1883, %v1969
      %1990 = vmatpush.msra.mxu0 %v1776
      %1991 = vmatpush.msra.mxu0 %v1774
      %1992 = vmatpush.msra.mxu0 %v1772
      %1993 = vmatpush.msra.mxu0 %v1770
      %1994 = vmatpush.msra.mxu0 %v1768
      %1995 = vmatpush.msra.mxu0 %v1766
      %1996 = vmatpush.msra.mxu0 %v1764
      %1997 = vmatpush.msra.mxu0 %v1762
      %1998 = vmatpush.msra.mxu0 %v1760
      %1999 = vmatpush.msra.mxu0 %v1758
      %2000 = vmatpush.msra.mxu0 %v1756
      %2001 = vmatpush.msra.mxu0 %v1754
      %2002 = vmatpush.msra.mxu0 %v1752
      %2003 = vmatpush.msra.mxu0 %v1750
      %2004 = vmatpush.msra.mxu0 %v1748
      %2005 = vmatpush.msra.mxu0 %v1746
      %2006 = vmatmul.f32.gmra.mxu0 %v679
      %v2007 = vpop.f32.mrf.mxu0
      %v2008 = vadd.f32 0.0, %v2007
      %2009 = vmatmul.f32.gmra.mxu0 %v680
      %v2010 = vpop.f32.mrf.mxu0
      %v2011 = vadd.f32 0.0, %v2010
      %2012 = vmatmul.f32.gmra.mxu0 %v681
      %v2013 = vpop.f32.mrf.mxu0
      %v2014 = vadd.f32 0.0, %v2013
      %2015 = vmatmul.f32.gmra.mxu0 %v682
      %v2016 = vpop.f32.mrf.mxu0
      %v2017 = vadd.f32 0.0, %v2016
      %2018 = vdwg.mxu0
      %2019 = vmatpush.msra.mxu0 %v1777
      %2020 = vmatpush.msra.mxu0 %v1775
      %2021 = vmatpush.msra.mxu0 %v1773
      %2022 = vmatpush.msra.mxu0 %v1771
      %2023 = vmatpush.msra.mxu0 %v1769
      %2024 = vmatpush.msra.mxu0 %v1767
      %2025 = vmatpush.msra.mxu0 %v1765
      %2026 = vmatpush.msra.mxu0 %v1763
      %2027 = vmatpush.msra.mxu0 %v1761
      %2028 = vmatpush.msra.mxu0 %v1759
      %2029 = vmatpush.msra.mxu0 %v1757
      %2030 = vmatpush.msra.mxu0 %v1755
      %2031 = vmatpush.msra.mxu0 %v1753
      %2032 = vmatpush.msra.mxu0 %v1751
      %2033 = vmatpush.msra.mxu0 %v1749
      %2034 = vmatpush.msra.mxu0 %v1747
      %2035 = vmatmul.f32.gmra.mxu0 %v679
      %v2036 = vpop.f32.mrf.mxu0
      %v2037 = vadd.f32 0.0, %v2036
      %2038 = vmatmul.f32.gmra.mxu0 %v680
      %v2039 = vpop.f32.mrf.mxu0
      %v2040 = vadd.f32 0.0, %v2039
      %2041 = vmatmul.f32.gmra.mxu0 %v681
      %v2042 = vpop.f32.mrf.mxu0
      %v2043 = vadd.f32 0.0, %v2042
      %2044 = vmatmul.f32.gmra.mxu0 %v682
      %v2045 = vpop.f32.mrf.mxu0
      %v2046 = vadd.f32 0.0, %v2045
      %2047 = vdwg.mxu0
      %2056 = vrot.lane.b32.xlu0 %v2008, 15
      %v2057 = vpop.permute.xlu0 %2056
      %2058 = vrot.lane.b32.xlu0 %v2037, 15
      %v2059 = vpop.permute.xlu0 %2058
      %2060 = vrot.lane.b32.xlu0 %v2011, 15
      %v2061 = vpop.permute.xlu0 %2060
      %2062 = vrot.lane.b32.xlu0 %v2040, 15
      %v2063 = vpop.permute.xlu0 %2062
      %2064 = vrot.lane.b32.xlu0 %v2014, 15
      %v2065 = vpop.permute.xlu0 %2064
      %2066 = vrot.lane.b32.xlu0 %v2043, 15
      %v2067 = vpop.permute.xlu0 %2066
      %2068 = vrot.lane.b32.xlu0 %v2017, 15
      %v2069 = vpop.permute.xlu0 %2068
      %2070 = vrot.lane.b32.xlu0 %v2046, 15
      %v2071 = vpop.permute.xlu0 %2070
      %v2072 = vsel %vm777, %v2057, %v2059
      %v2073 = vsel %vm777, %v2061, %v2063
      %v2074 = vsel %vm777, %v2065, %v2067
      %v2075 = vsel %vm777, %v2069, %v2071
      %v2084 = vsel %vm777, 0.0, %v2057
      %v2085 = vsel %vm777, 0.0, %v2061
      %v2086 = vsel %vm777, 0.0, %v2065
      %v2087 = vsel %vm777, 0.0, %v2069
      %v2088 = vsel %vm801, %v2084, 0.0
      %v2089 = vsel %vm802, %v2072, 0.0
      %v2090 = vsel %vm801, %v2085, 0.0
      %v2091 = vsel %vm802, %v2073, 0.0
      %v2092 = vsel %vm801, %v2086, 0.0
      %v2093 = vsel %vm802, %v2074, 0.0
      %v2094 = vsel %vm801, %v2087, 0.0
      %v2095 = vsel %vm802, %v2075, 0.0
      %v2096 = vadd.f32 %v1982, %v2088
      %v2097 = vadd.f32 %v1983, %v2089
      %v2098 = vadd.f32 %v1984, %v2090
      %v2099 = vadd.f32 %v1985, %v2091
      %v2100 = vadd.f32 %v1986, %v2092
      %v2101 = vadd.f32 %v1987, %v2093
      %v2102 = vadd.f32 %v1988, %v2094
      %v2103 = vadd.f32 %v1989, %v2095
      %2104 = vmatpush.msra.mxu0 %v1776
      %2105 = vmatpush.msra.mxu0 %v1774
      %2106 = vmatpush.msra.mxu0 %v1772
      %2107 = vmatpush.msra.mxu0 %v1770
      %2108 = vmatpush.msra.mxu0 %v1768
      %2109 = vmatpush.msra.mxu0 %v1766
      %2110 = vmatpush.msra.mxu0 %v1764
      %2111 = vmatpush.msra.mxu0 %v1762
      %2112 = vmatpush.msra.mxu0 %v1760
      %2113 = vmatpush.msra.mxu0 %v1758
      %2114 = vmatpush.msra.mxu0 %v1756
      %2115 = vmatpush.msra.mxu0 %v1754
      %2116 = vmatpush.msra.mxu0 %v1752
      %2117 = vmatpush.msra.mxu0 %v1750
      %2118 = vmatpush.msra.mxu0 %v1748
      %2119 = vmatpush.msra.mxu0 %v1746
      %2120 = vmatmul.f32.gmra.mxu0 %v852
      %v2121 = vpop.f32.mrf.mxu0
      %v2122 = vadd.f32 0.0, %v2121
      %2123 = vmatmul.f32.gmra.mxu0 %v853
      %v2124 = vpop.f32.mrf.mxu0
      %v2125 = vadd.f32 0.0, %v2124
      %2126 = vmatmul.f32.gmra.mxu0 %v854
      %v2127 = vpop.f32.mrf.mxu0
      %v2128 = vadd.f32 0.0, %v2127
      %2129 = vmatmul.f32.gmra.mxu0 %v855
      %v2130 = vpop.f32.mrf.mxu0
      %v2131 = vadd.f32 0.0, %v2130
      %2132 = vdwg.mxu0
      %2133 = vmatpush.msra.mxu0 %v1777
      %2134 = vmatpush.msra.mxu0 %v1775
      %2135 = vmatpush.msra.mxu0 %v1773
      %2136 = vmatpush.msra.mxu0 %v1771
      %2137 = vmatpush.msra.mxu0 %v1769
      %2138 = vmatpush.msra.mxu0 %v1767
      %2139 = vmatpush.msra.mxu0 %v1765
      %2140 = vmatpush.msra.mxu0 %v1763
      %2141 = vmatpush.msra.mxu0 %v1761
      %2142 = vmatpush.msra.mxu0 %v1759
      %2143 = vmatpush.msra.mxu0 %v1757
      %2144 = vmatpush.msra.mxu0 %v1755
      %2145 = vmatpush.msra.mxu0 %v1753
      %2146 = vmatpush.msra.mxu0 %v1751
      %2147 = vmatpush.msra.mxu0 %v1749
      %2148 = vmatpush.msra.mxu0 %v1747
      %2149 = vmatmul.f32.gmra.mxu0 %v852
      %v2150 = vpop.f32.mrf.mxu0
      %v2151 = vadd.f32 0.0, %v2150
      %2152 = vmatmul.f32.gmra.mxu0 %v853
      %v2153 = vpop.f32.mrf.mxu0
      %v2154 = vadd.f32 0.0, %v2153
      %2155 = vmatmul.f32.gmra.mxu0 %v854
      %v2156 = vpop.f32.mrf.mxu0
      %v2157 = vadd.f32 0.0, %v2156
      %2158 = vmatmul.f32.gmra.mxu0 %v855
      %v2159 = vpop.f32.mrf.mxu0
      %v2160 = vadd.f32 0.0, %v2159
      %2161 = vdwg.mxu0
      %2170 = vrot.lane.b32.xlu0 %v2122, 1
      %v2171 = vpop.permute.xlu0 %2170
      %2172 = vrot.lane.b32.xlu0 %v2151, 1
      %v2173 = vpop.permute.xlu0 %2172
      %2174 = vrot.lane.b32.xlu0 %v2125, 1
      %v2175 = vpop.permute.xlu0 %2174
      %2176 = vrot.lane.b32.xlu0 %v2154, 1
      %v2177 = vpop.permute.xlu0 %2176
      %2178 = vrot.lane.b32.xlu0 %v2128, 1
      %v2179 = vpop.permute.xlu0 %2178
      %2180 = vrot.lane.b32.xlu0 %v2157, 1
      %v2181 = vpop.permute.xlu0 %2180
      %2182 = vrot.lane.b32.xlu0 %v2131, 1
      %v2183 = vpop.permute.xlu0 %2182
      %2184 = vrot.lane.b32.xlu0 %v2160, 1
      %v2185 = vpop.permute.xlu0 %2184
      %v2186 = vsel %vm950, %v2171, %v2173
      %v2187 = vsel %vm950, %v2175, %v2177
      %v2188 = vsel %vm950, %v2179, %v2181
      %v2189 = vsel %vm950, %v2183, %v2185
      %v2198 = vsel %vm950, 0.0, %v2171
      %v2199 = vsel %vm950, 0.0, %v2175
      %v2200 = vsel %vm950, 0.0, %v2179
      %v2201 = vsel %vm950, 0.0, %v2183
      %v2202 = vsel %vm480, %v2198, 0.0
      %v2203 = vsel %vm481, %v2186, 0.0
      %v2204 = vsel %vm480, %v2199, 0.0
      %v2205 = vsel %vm481, %v2187, 0.0
      %v2206 = vsel %vm480, %v2200, 0.0
      %v2207 = vsel %vm481, %v2188, 0.0
      %v2208 = vsel %vm480, %v2201, 0.0
      %v2209 = vsel %vm481, %v2189, 0.0
      %v2210 = vadd.f32 %v2096, %v2202
      %v2211 = vadd.f32 %v2097, %v2203
      %v2212 = vadd.f32 %v2098, %v2204
      %v2213 = vadd.f32 %v2099, %v2205
      %v2214 = vadd.f32 %v2100, %v2206
      %v2215 = vadd.f32 %v2101, %v2207
      %v2216 = vadd.f32 %v2102, %v2208
      %v2217 = vadd.f32 %v2103, %v2209
      %2218 = vmatpush.msra.mxu0 %v1776
      %2219 = vmatpush.msra.mxu0 %v1774
      %2220 = vmatpush.msra.mxu0 %v1772
      %2221 = vmatpush.msra.mxu0 %v1770
      %2222 = vmatpush.msra.mxu0 %v1768
      %2223 = vmatpush.msra.mxu0 %v1766
      %2224 = vmatpush.msra.mxu0 %v1764
      %2225 = vmatpush.msra.mxu0 %v1762
      %2226 = vmatpush.msra.mxu0 %v1760
      %2227 = vmatpush.msra.mxu0 %v1758
      %2228 = vmatpush.msra.mxu0 %v1756
      %2229 = vmatpush.msra.mxu0 %v1754
      %2230 = vmatpush.msra.mxu0 %v1752
      %2231 = vmatpush.msra.mxu0 %v1750
      %2232 = vmatpush.msra.mxu0 %v1748
      %2233 = vmatpush.msra.mxu0 %v1746
      %2234 = vmatmul.f32.gmra.mxu0 %v1016
      %v2235 = vpop.f32.mrf.mxu0
      %v2236 = vadd.f32 0.0, %v2235
      %2237 = vmatmul.f32.gmra.mxu0 %v1017
      %v2238 = vpop.f32.mrf.mxu0
      %v2239 = vadd.f32 0.0, %v2238
      %2240 = vmatmul.f32.gmra.mxu0 %v1018
      %v2241 = vpop.f32.mrf.mxu0
      %v2242 = vadd.f32 0.0, %v2241
      %2243 = vmatmul.f32.gmra.mxu0 %v1019
      %v2244 = vpop.f32.mrf.mxu0
      %v2245 = vadd.f32 0.0, %v2244
      %2246 = vdwg.mxu0
      %2247 = vmatpush.msra.mxu0 %v1777
      %2248 = vmatpush.msra.mxu0 %v1775
      %2249 = vmatpush.msra.mxu0 %v1773
      %2250 = vmatpush.msra.mxu0 %v1771
      %2251 = vmatpush.msra.mxu0 %v1769
      %2252 = vmatpush.msra.mxu0 %v1767
      %2253 = vmatpush.msra.mxu0 %v1765
      %2254 = vmatpush.msra.mxu0 %v1763
      %2255 = vmatpush.msra.mxu0 %v1761
      %2256 = vmatpush.msra.mxu0 %v1759
      %2257 = vmatpush.msra.mxu0 %v1757
      %2258 = vmatpush.msra.mxu0 %v1755
      %2259 = vmatpush.msra.mxu0 %v1753
      %2260 = vmatpush.msra.mxu0 %v1751
      %2261 = vmatpush.msra.mxu0 %v1749
      %2262 = vmatpush.msra.mxu0 %v1747
      %2263 = vmatmul.f32.gmra.mxu0 %v1016
      %v2264 = vpop.f32.mrf.mxu0
      %v2265 = vadd.f32 0.0, %v2264
      %2266 = vmatmul.f32.gmra.mxu0 %v1017
      %v2267 = vpop.f32.mrf.mxu0
      %v2268 = vadd.f32 0.0, %v2267
      %2269 = vmatmul.f32.gmra.mxu0 %v1018
      %v2270 = vpop.f32.mrf.mxu0
      %v2271 = vadd.f32 0.0, %v2270
      %2272 = vmatmul.f32.gmra.mxu0 %v1019
      %v2273 = vpop.f32.mrf.mxu0
      %v2274 = vadd.f32 0.0, %v2273
      %2275 = vdwg.mxu0
      %v2276 = vadd.f32 %v2210, %v2236
      %v2277 = vadd.f32 %v2211, %v2265
      %v2278 = vadd.f32 %v2212, %v2239
      %v2279 = vadd.f32 %v2213, %v2268
      %v2280 = vadd.f32 %v2214, %v2242
      %v2281 = vadd.f32 %v2215, %v2271
      %v2282 = vadd.f32 %v2216, %v2245
      %v2283 = vadd.f32 %v2217, %v2274
      %2284 = vmatpush.msra.mxu0 %v1776
      %2285 = vmatpush.msra.mxu0 %v1774
      %2286 = vmatpush.msra.mxu0 %v1772
      %2287 = vmatpush.msra.mxu0 %v1770
      %2288 = vmatpush.msra.mxu0 %v1768
      %2289 = vmatpush.msra.mxu0 %v1766
      %2290 = vmatpush.msra.mxu0 %v1764
      %2291 = vmatpush.msra.mxu0 %v1762
      %2292 = vmatpush.msra.mxu0 %v1760
      %2293 = vmatpush.msra.mxu0 %v1758
      %2294 = vmatpush.msra.mxu0 %v1756
      %2295 = vmatpush.msra.mxu0 %v1754
      %2296 = vmatpush.msra.mxu0 %v1752
      %2297 = vmatpush.msra.mxu0 %v1750
      %2298 = vmatpush.msra.mxu0 %v1748
      %2299 = vmatpush.msra.mxu0 %v1746
      %2300 = vmatmul.f32.gmra.mxu0 %v1131
      %v2301 = vpop.f32.mrf.mxu0
      %v2302 = vadd.f32 0.0, %v2301
      %2303 = vmatmul.f32.gmra.mxu0 %v1132
      %v2304 = vpop.f32.mrf.mxu0
      %v2305 = vadd.f32 0.0, %v2304
      %2306 = vmatmul.f32.gmra.mxu0 %v1133
      %v2307 = vpop.f32.mrf.mxu0
      %v2308 = vadd.f32 0.0, %v2307
      %2309 = vmatmul.f32.gmra.mxu0 %v1134
      %v2310 = vpop.f32.mrf.mxu0
      %v2311 = vadd.f32 0.0, %v2310
      %2312 = vdwg.mxu0
      %2313 = vmatpush.msra.mxu0 %v1777
      %2314 = vmatpush.msra.mxu0 %v1775
      %2315 = vmatpush.msra.mxu0 %v1773
      %2316 = vmatpush.msra.mxu0 %v1771
      %2317 = vmatpush.msra.mxu0 %v1769
      %2318 = vmatpush.msra.mxu0 %v1767
      %2319 = vmatpush.msra.mxu0 %v1765
      %2320 = vmatpush.msra.mxu0 %v1763
      %2321 = vmatpush.msra.mxu0 %v1761
      %2322 = vmatpush.msra.mxu0 %v1759
      %2323 = vmatpush.msra.mxu0 %v1757
      %2324 = vmatpush.msra.mxu0 %v1755
      %2325 = vmatpush.msra.mxu0 %v1753
      %2326 = vmatpush.msra.mxu0 %v1751
      %2327 = vmatpush.msra.mxu0 %v1749
      %2328 = vmatpush.msra.mxu0 %v1747
      %2329 = vmatmul.f32.gmra.mxu0 %v1131
      %v2330 = vpop.f32.mrf.mxu0
      %v2331 = vadd.f32 0.0, %v2330
      %2332 = vmatmul.f32.gmra.mxu0 %v1132
      %v2333 = vpop.f32.mrf.mxu0
      %v2334 = vadd.f32 0.0, %v2333
      %2335 = vmatmul.f32.gmra.mxu0 %v1133
      %v2336 = vpop.f32.mrf.mxu0
      %v2337 = vadd.f32 0.0, %v2336
      %2338 = vmatmul.f32.gmra.mxu0 %v1134
      %v2339 = vpop.f32.mrf.mxu0
      %v2340 = vadd.f32 0.0, %v2339
      %2341 = vdwg.mxu0
      %2350 = vrot.lane.b32.xlu0 %v2302, 127
      %v2351 = vpop.permute.xlu0 %2350
      %2352 = vrot.lane.b32.xlu0 %v2331, 127
      %v2353 = vpop.permute.xlu0 %2352
      %2354 = vrot.lane.b32.xlu0 %v2305, 127
      %v2355 = vpop.permute.xlu0 %2354
      %2356 = vrot.lane.b32.xlu0 %v2334, 127
      %v2357 = vpop.permute.xlu0 %2356
      %2358 = vrot.lane.b32.xlu0 %v2308, 127
      %v2359 = vpop.permute.xlu0 %2358
      %2360 = vrot.lane.b32.xlu0 %v2337, 127
      %v2361 = vpop.permute.xlu0 %2360
      %2362 = vrot.lane.b32.xlu0 %v2311, 127
      %v2363 = vpop.permute.xlu0 %2362
      %2364 = vrot.lane.b32.xlu0 %v2340, 127
      %v2365 = vpop.permute.xlu0 %2364
      %v2366 = vsel %vm1229, %v2351, %v2353
      %v2367 = vsel %vm1229, %v2355, %v2357
      %v2368 = vsel %vm1229, %v2359, %v2361
      %v2369 = vsel %vm1229, %v2363, %v2365
      %v2378 = vsel %vm1229, %v2353, 0.0
      %v2379 = vsel %vm1229, %v2357, 0.0
      %v2380 = vsel %vm1229, %v2361, 0.0
      %v2381 = vsel %vm1229, %v2365, 0.0
      %v2382 = vsel %vm801, %v2366, 0.0
      %v2383 = vsel %vm802, %v2378, 0.0
      %v2384 = vsel %vm801, %v2367, 0.0
      %v2385 = vsel %vm802, %v2379, 0.0
      %v2386 = vsel %vm801, %v2368, 0.0
      %v2387 = vsel %vm802, %v2380, 0.0
      %v2388 = vsel %vm801, %v2369, 0.0
      %v2389 = vsel %vm802, %v2381, 0.0
      %v2390 = vadd.f32 %v2276, %v2382
      %v2391 = vadd.f32 %v2277, %v2383
      %v2392 = vadd.f32 %v2278, %v2384
      %v2393 = vadd.f32 %v2279, %v2385
      %v2394 = vadd.f32 %v2280, %v2386
      %v2395 = vadd.f32 %v2281, %v2387
      %v2396 = vadd.f32 %v2282, %v2388
      %v2397 = vadd.f32 %v2283, %v2389
      %2398 = vmatpush.msra.mxu0 %v1776
      %2399 = vmatpush.msra.mxu0 %v1774
      %2400 = vmatpush.msra.mxu0 %v1772
      %2401 = vmatpush.msra.mxu0 %v1770
      %2402 = vmatpush.msra.mxu0 %v1768
      %2403 = vmatpush.msra.mxu0 %v1766
      %2404 = vmatpush.msra.mxu0 %v1764
      %2405 = vmatpush.msra.mxu0 %v1762
      %2406 = vmatpush.msra.mxu0 %v1760
      %2407 = vmatpush.msra.mxu0 %v1758
      %2408 = vmatpush.msra.mxu0 %v1756
      %2409 = vmatpush.msra.mxu0 %v1754
      %2410 = vmatpush.msra.mxu0 %v1752
      %2411 = vmatpush.msra.mxu0 %v1750
      %2412 = vmatpush.msra.mxu0 %v1748
      %2413 = vmatpush.msra.mxu0 %v1746
      %2414 = vmatmul.f32.gmra.mxu0 %v1295
      %v2415 = vpop.f32.mrf.mxu0
      %v2416 = vadd.f32 0.0, %v2415
      %2417 = vmatmul.f32.gmra.mxu0 %v1296
      %v2418 = vpop.f32.mrf.mxu0
      %v2419 = vadd.f32 0.0, %v2418
      %2420 = vmatmul.f32.gmra.mxu0 %v1297
      %v2421 = vpop.f32.mrf.mxu0
      %v2422 = vadd.f32 0.0, %v2421
      %2423 = vmatmul.f32.gmra.mxu0 %v1298
      %v2424 = vpop.f32.mrf.mxu0
      %v2425 = vadd.f32 0.0, %v2424
      %2426 = vdwg.mxu0
      %2427 = vmatpush.msra.mxu0 %v1777
      %2428 = vmatpush.msra.mxu0 %v1775
      %2429 = vmatpush.msra.mxu0 %v1773
      %2430 = vmatpush.msra.mxu0 %v1771
      %2431 = vmatpush.msra.mxu0 %v1769
      %2432 = vmatpush.msra.mxu0 %v1767
      %2433 = vmatpush.msra.mxu0 %v1765
      %2434 = vmatpush.msra.mxu0 %v1763
      %2435 = vmatpush.msra.mxu0 %v1761
      %2436 = vmatpush.msra.mxu0 %v1759
      %2437 = vmatpush.msra.mxu0 %v1757
      %2438 = vmatpush.msra.mxu0 %v1755
      %2439 = vmatpush.msra.mxu0 %v1753
      %2440 = vmatpush.msra.mxu0 %v1751
      %2441 = vmatpush.msra.mxu0 %v1749
      %2442 = vmatpush.msra.mxu0 %v1747
      %2443 = vmatmul.f32.gmra.mxu0 %v1295
      %v2444 = vpop.f32.mrf.mxu0
      %v2445 = vadd.f32 0.0, %v2444
      %2446 = vmatmul.f32.gmra.mxu0 %v1296
      %v2447 = vpop.f32.mrf.mxu0
      %v2448 = vadd.f32 0.0, %v2447
      %2449 = vmatmul.f32.gmra.mxu0 %v1297
      %v2450 = vpop.f32.mrf.mxu0
      %v2451 = vadd.f32 0.0, %v2450
      %2452 = vmatmul.f32.gmra.mxu0 %v1298
      %v2453 = vpop.f32.mrf.mxu0
      %v2454 = vadd.f32 0.0, %v2453
      %2455 = vdwg.mxu0
      %2464 = vrot.lane.b32.xlu0 %v2416, 113
      %v2465 = vpop.permute.xlu0 %2464
      %2466 = vrot.lane.b32.xlu0 %v2445, 113
      %v2467 = vpop.permute.xlu0 %2466
      %2468 = vrot.lane.b32.xlu0 %v2419, 113
      %v2469 = vpop.permute.xlu0 %2468
      %2470 = vrot.lane.b32.xlu0 %v2448, 113
      %v2471 = vpop.permute.xlu0 %2470
      %2472 = vrot.lane.b32.xlu0 %v2422, 113
      %v2473 = vpop.permute.xlu0 %2472
      %2474 = vrot.lane.b32.xlu0 %v2451, 113
      %v2475 = vpop.permute.xlu0 %2474
      %2476 = vrot.lane.b32.xlu0 %v2425, 113
      %v2477 = vpop.permute.xlu0 %2476
      %2478 = vrot.lane.b32.xlu0 %v2454, 113
      %v2479 = vpop.permute.xlu0 %2478
      %v2480 = vsel %vm1393, %v2465, %v2467
      %v2481 = vsel %vm1393, %v2469, %v2471
      %v2482 = vsel %vm1393, %v2473, %v2475
      %v2483 = vsel %vm1393, %v2477, %v2479
      %v2492 = vsel %vm1393, %v2467, 0.0
      %v2493 = vsel %vm1393, %v2471, 0.0
      %v2494 = vsel %vm1393, %v2475, 0.0
      %v2495 = vsel %vm1393, %v2479, 0.0
      %v2496 = vsel %vm480, %v2480, 0.0
      %v2497 = vsel %vm481, %v2492, 0.0
      %v2498 = vsel %vm480, %v2481, 0.0
      %v2499 = vsel %vm481, %v2493, 0.0
      %v2500 = vsel %vm480, %v2482, 0.0
      %v2501 = vsel %vm481, %v2494, 0.0
      %v2502 = vsel %vm480, %v2483, 0.0
      %v2503 = vsel %vm481, %v2495, 0.0
      %v2504 = vadd.f32 %v2390, %v2496
      %v2505 = vadd.f32 %v2391, %v2497
      %v2506 = vadd.f32 %v2392, %v2498
      %v2507 = vadd.f32 %v2393, %v2499
      %v2508 = vadd.f32 %v2394, %v2500
      %v2509 = vadd.f32 %v2395, %v2501
      %v2510 = vadd.f32 %v2396, %v2502
      %v2511 = vadd.f32 %v2397, %v2503
      %2512 = vmatpush.msra.mxu0 %v1776
      %2513 = vmatpush.msra.mxu0 %v1774
      %2514 = vmatpush.msra.mxu0 %v1772
      %2515 = vmatpush.msra.mxu0 %v1770
      %2516 = vmatpush.msra.mxu0 %v1768
      %2517 = vmatpush.msra.mxu0 %v1766
      %2518 = vmatpush.msra.mxu0 %v1764
      %2519 = vmatpush.msra.mxu0 %v1762
      %2520 = vmatpush.msra.mxu0 %v1760
      %2521 = vmatpush.msra.mxu0 %v1758
      %2522 = vmatpush.msra.mxu0 %v1756
      %2523 = vmatpush.msra.mxu0 %v1754
      %2524 = vmatpush.msra.mxu0 %v1752
      %2525 = vmatpush.msra.mxu0 %v1750
      %2526 = vmatpush.msra.mxu0 %v1748
      %2527 = vmatpush.msra.mxu0 %v1746
      %2528 = vmatmul.f32.gmra.mxu0 %v1459
      %v2529 = vpop.f32.mrf.mxu0
      %v2530 = vadd.f32 0.0, %v2529
      %2531 = vmatmul.f32.gmra.mxu0 %v1460
      %v2532 = vpop.f32.mrf.mxu0
      %v2533 = vadd.f32 0.0, %v2532
      %2534 = vmatmul.f32.gmra.mxu0 %v1461
      %v2535 = vpop.f32.mrf.mxu0
      %v2536 = vadd.f32 0.0, %v2535
      %2537 = vmatmul.f32.gmra.mxu0 %v1462
      %v2538 = vpop.f32.mrf.mxu0
      %v2539 = vadd.f32 0.0, %v2538
      %2540 = vdwg.mxu0
      %2541 = vmatpush.msra.mxu0 %v1777
      %2542 = vmatpush.msra.mxu0 %v1775
      %2543 = vmatpush.msra.mxu0 %v1773
      %2544 = vmatpush.msra.mxu0 %v1771
      %2545 = vmatpush.msra.mxu0 %v1769
      %2546 = vmatpush.msra.mxu0 %v1767
      %2547 = vmatpush.msra.mxu0 %v1765
      %2548 = vmatpush.msra.mxu0 %v1763
      %2549 = vmatpush.msra.mxu0 %v1761
      %2550 = vmatpush.msra.mxu0 %v1759
      %2551 = vmatpush.msra.mxu0 %v1757
      %2552 = vmatpush.msra.mxu0 %v1755
      %2553 = vmatpush.msra.mxu0 %v1753
      %2554 = vmatpush.msra.mxu0 %v1751
      %2555 = vmatpush.msra.mxu0 %v1749
      %2556 = vmatpush.msra.mxu0 %v1747
      %2557 = vmatmul.f32.gmra.mxu0 %v1459
      %v2558 = vpop.f32.mrf.mxu0
      %v2559 = vadd.f32 0.0, %v2558
      %2560 = vmatmul.f32.gmra.mxu0 %v1460
      %v2561 = vpop.f32.mrf.mxu0
      %v2562 = vadd.f32 0.0, %v2561
      %2563 = vmatmul.f32.gmra.mxu0 %v1461
      %v2564 = vpop.f32.mrf.mxu0
      %v2565 = vadd.f32 0.0, %v2564
      %2566 = vmatmul.f32.gmra.mxu0 %v1462
      %v2567 = vpop.f32.mrf.mxu0
      %v2568 = vadd.f32 0.0, %v2567
      %2569 = vdwg.mxu0
      %2578 = vrot.lane.b32.xlu0 %v2530, 112
      %v2579 = vpop.permute.xlu0 %2578
      %2580 = vrot.lane.b32.xlu0 %v2559, 112
      %v2581 = vpop.permute.xlu0 %2580
      %2582 = vrot.lane.b32.xlu0 %v2533, 112
      %v2583 = vpop.permute.xlu0 %2582
      %2584 = vrot.lane.b32.xlu0 %v2562, 112
      %v2585 = vpop.permute.xlu0 %2584
      %2586 = vrot.lane.b32.xlu0 %v2536, 112
      %v2587 = vpop.permute.xlu0 %2586
      %2588 = vrot.lane.b32.xlu0 %v2565, 112
      %v2589 = vpop.permute.xlu0 %2588
      %2590 = vrot.lane.b32.xlu0 %v2539, 112
      %v2591 = vpop.permute.xlu0 %2590
      %2592 = vrot.lane.b32.xlu0 %v2568, 112
      %v2593 = vpop.permute.xlu0 %2592
      %v2594 = vsel %vm1557, %v2579, %v2581
      %v2595 = vsel %vm1557, %v2583, %v2585
      %v2596 = vsel %vm1557, %v2587, %v2589
      %v2597 = vsel %vm1557, %v2591, %v2593
      %v2606 = vsel %vm1557, %v2581, 0.0
      %v2607 = vsel %vm1557, %v2585, 0.0
      %v2608 = vsel %vm1557, %v2589, 0.0
      %v2609 = vsel %vm1557, %v2593, 0.0
      %v2610 = vadd.f32 %v2504, %v2594
      %v2611 = vadd.f32 %v2505, %v2606
      %v2612 = vadd.f32 %v2506, %v2595
      %v2613 = vadd.f32 %v2507, %v2607
      %v2614 = vadd.f32 %v2508, %v2596
      %v2615 = vadd.f32 %v2509, %v2608
      %v2616 = vadd.f32 %v2510, %v2597
      %v2617 = vadd.f32 %v2511, %v2609
      %2618 = vmatpush.msra.mxu0 %v1776
      %2619 = vmatpush.msra.mxu0 %v1774
      %2620 = vmatpush.msra.mxu0 %v1772
      %2621 = vmatpush.msra.mxu0 %v1770
      %2622 = vmatpush.msra.mxu0 %v1768
      %2623 = vmatpush.msra.mxu0 %v1766
      %2624 = vmatpush.msra.mxu0 %v1764
      %2625 = vmatpush.msra.mxu0 %v1762
      %2626 = vmatpush.msra.mxu0 %v1760
      %2627 = vmatpush.msra.mxu0 %v1758
      %2628 = vmatpush.msra.mxu0 %v1756
      %2629 = vmatpush.msra.mxu0 %v1754
      %2630 = vmatpush.msra.mxu0 %v1752
      %2631 = vmatpush.msra.mxu0 %v1750
      %2632 = vmatpush.msra.mxu0 %v1748
      %2633 = vmatpush.msra.mxu0 %v1746
      %2634 = vmatmul.f32.gmra.mxu0 %v1615
      %v2635 = vpop.f32.mrf.mxu0
      %v2636 = vadd.f32 0.0, %v2635
      %2637 = vmatmul.f32.gmra.mxu0 %v1616
      %v2638 = vpop.f32.mrf.mxu0
      %v2639 = vadd.f32 0.0, %v2638
      %2640 = vmatmul.f32.gmra.mxu0 %v1617
      %v2641 = vpop.f32.mrf.mxu0
      %v2642 = vadd.f32 0.0, %v2641
      %2643 = vmatmul.f32.gmra.mxu0 %v1618
      %v2644 = vpop.f32.mrf.mxu0
      %v2645 = vadd.f32 0.0, %v2644
      %2646 = vdwg.mxu0
      %2647 = vmatpush.msra.mxu0 %v1777
      %2648 = vmatpush.msra.mxu0 %v1775
      %2649 = vmatpush.msra.mxu0 %v1773
      %2650 = vmatpush.msra.mxu0 %v1771
      %2651 = vmatpush.msra.mxu0 %v1769
      %2652 = vmatpush.msra.mxu0 %v1767
      %2653 = vmatpush.msra.mxu0 %v1765
      %2654 = vmatpush.msra.mxu0 %v1763
      %2655 = vmatpush.msra.mxu0 %v1761
      %2656 = vmatpush.msra.mxu0 %v1759
      %2657 = vmatpush.msra.mxu0 %v1757
      %2658 = vmatpush.msra.mxu0 %v1755
      %2659 = vmatpush.msra.mxu0 %v1753
      %2660 = vmatpush.msra.mxu0 %v1751
      %2661 = vmatpush.msra.mxu0 %v1749
      %2662 = vmatpush.msra.mxu0 %v1747
      %2663 = vmatmul.f32.gmra.mxu0 %v1615
      %v2664 = vpop.f32.mrf.mxu0
      %v2665 = vadd.f32 0.0, %v2664
      %2666 = vmatmul.f32.gmra.mxu0 %v1616
      %v2667 = vpop.f32.mrf.mxu0
      %v2668 = vadd.f32 0.0, %v2667
      %2669 = vmatmul.f32.gmra.mxu0 %v1617
      %v2670 = vpop.f32.mrf.mxu0
      %v2671 = vadd.f32 0.0, %v2670
      %2672 = vmatmul.f32.gmra.mxu0 %v1618
      %v2673 = vpop.f32.mrf.mxu0
      %v2674 = vadd.f32 0.0, %v2673
      %2675 = vdwg.mxu0
      %2684 = vrot.lane.b32.xlu0 %v2636, 111
      %v2685 = vpop.permute.xlu0 %2684
      %2686 = vrot.lane.b32.xlu0 %v2665, 111
      %v2687 = vpop.permute.xlu0 %2686
      %2688 = vrot.lane.b32.xlu0 %v2639, 111
      %v2689 = vpop.permute.xlu0 %2688
      %2690 = vrot.lane.b32.xlu0 %v2668, 111
      %v2691 = vpop.permute.xlu0 %2690
      %2692 = vrot.lane.b32.xlu0 %v2642, 111
      %v2693 = vpop.permute.xlu0 %2692
      %2694 = vrot.lane.b32.xlu0 %v2671, 111
      %v2695 = vpop.permute.xlu0 %2694
      %2696 = vrot.lane.b32.xlu0 %v2645, 111
      %v2697 = vpop.permute.xlu0 %2696
      %2698 = vrot.lane.b32.xlu0 %v2674, 111
      %v2699 = vpop.permute.xlu0 %2698
      %v2700 = vsel %vm1713, %v2685, %v2687
      %v2701 = vsel %vm1713, %v2689, %v2691
      %v2702 = vsel %vm1713, %v2693, %v2695
      %v2703 = vsel %vm1713, %v2697, %v2699
      %v2712 = vsel %vm1713, %v2687, 0.0
      %v2713 = vsel %vm1713, %v2691, 0.0
      %v2714 = vsel %vm1713, %v2695, 0.0
      %v2715 = vsel %vm1713, %v2699, 0.0
      %v2716 = vsel %vm801, %v2700, 0.0
      %v2717 = vsel %vm802, %v2712, 0.0
      %v2718 = vsel %vm801, %v2701, 0.0
      %v2719 = vsel %vm802, %v2713, 0.0
      %v2720 = vsel %vm801, %v2702, 0.0
      %v2721 = vsel %vm802, %v2714, 0.0
      %v2722 = vsel %vm801, %v2703, 0.0
      %v2723 = vsel %vm802, %v2715, 0.0
      %v2724 = vadd.f32 %v2610, %v2716
      %v2725 = vadd.f32 %v2611, %v2717
      %v2726 = vadd.f32 %v2612, %v2718
      %v2727 = vadd.f32 %v2613, %v2719
      %v2728 = vadd.f32 %v2614, %v2720
      %v2729 = vadd.f32 %v2615, %v2721
      %v2730 = vadd.f32 %v2616, %v2722
      %v2731 = vadd.f32 %v2617, %v2723
      %v2732 = vmul.f32 %v1738, %v1738
      %v2733 = vmul.f32 %v1739, %v1739
      %v2734 = vmul.f32 %v1740, %v1740
      %v2735 = vmul.f32 %v1741, %v1741
      %v2736 = vmul.f32 %v1742, %v1742
      %v2737 = vmul.f32 %v1743, %v1743
      %v2738 = vmul.f32 %v1744, %v1744
      %v2739 = vmul.f32 %v1745, %v1745
      %v2740 = vadd.f32 %v2732, %v2734
      %v2741 = vadd.f32 %v2740, %v2736
      %v2742 = vadd.f32 %v2741, %v2738
      %v2743 = vrot.slane %v2742, 4
      %v2744 = vadd.f32 %v2742, %v2743
      %v2745 = vrot.slane %v2744, 2
      %v2746 = vadd.f32 %v2744, %v2745
      %v2747 = vrot.slane %v2746, 1
      %v2748 = vadd.f32 %v2746, %v2747
      %v2749 = vadd.f32 %v2733, %v2735
      %v2750 = vadd.f32 %v2749, %v2737
      %v2751 = vadd.f32 %v2750, %v2739
      %v2752 = vrot.slane %v2751, 4
      %v2753 = vadd.f32 %v2751, %v2752
      %v2754 = vrot.slane %v2753, 2
      %v2755 = vadd.f32 %v2753, %v2754
      %v2756 = vrot.slane %v2755, 1
      %v2757 = vadd.f32 %v2755, %v2756
      %v2758 = vmax.f32 %v2748, 1e-24
      %v2759 = vmax.f32 %v2757, 1e-24
      %v2760 = vrsqrt.pop %v2758
      %v2761 = vmul.f32 %v2760, %v2758
      %v2762 = vmul.f32 %v2761, %v2760
      %v2763 = vmul.f32 0.5, %v2762
      %v2764 = vsub.f32 1.5, %v2763
      %v2765 = vmul.f32 %v2760, %v2764
      %vm2766 = vweird.f32 %v2758
      %vm2767 = vweird.f32 %v2760
      %vm2768 = vmor %vm2766, %vm2767
      %v2769 = vsel %vm2768, %v2760, %v2765
      %v2770 = vrsqrt.pop %v2759
      %v2771 = vmul.f32 %v2770, %v2759
      %v2772 = vmul.f32 %v2771, %v2770
      %v2773 = vmul.f32 0.5, %v2772
      %v2774 = vsub.f32 1.5, %v2773
      %v2775 = vmul.f32 %v2770, %v2774
      %vm2776 = vweird.f32 %v2759
      %vm2777 = vweird.f32 %v2770
      %vm2778 = vmor %vm2776, %vm2777
      %v2779 = vsel %vm2778, %v2770, %v2775
      %v2780 = vmul.f32 %v1738, %v2769
      %v2781 = vmul.f32 %v1739, %v2779
      %v2782 = vmul.f32 %v1740, %v2769
      %v2783 = vmul.f32 %v1741, %v2779
      %v2784 = vmul.f32 %v1742, %v2769
      %v2785 = vmul.f32 %v1743, %v2779
      %v2786 = vmul.f32 %v1744, %v2769
      %v2787 = vmul.f32 %v1745, %v2779
      %v2788 = vmul.f32 %v2724, %v2724
      %v2789 = vmul.f32 %v2725, %v2725
      %v2790 = vmul.f32 %v2726, %v2726
      %v2791 = vmul.f32 %v2727, %v2727
      %v2792 = vmul.f32 %v2728, %v2728
      %v2793 = vmul.f32 %v2729, %v2729
      %v2794 = vmul.f32 %v2730, %v2730
      %v2795 = vmul.f32 %v2731, %v2731
      %v2796 = vadd.f32 %v2788, %v2790
      %v2797 = vadd.f32 %v2796, %v2792
      %v2798 = vadd.f32 %v2797, %v2794
      %v2799 = vrot.slane %v2798, 4
      %v2800 = vadd.f32 %v2798, %v2799
      %v2801 = vrot.slane %v2800, 2
      %v2802 = vadd.f32 %v2800, %v2801
      %v2803 = vrot.slane %v2802, 1
      %v2804 = vadd.f32 %v2802, %v2803
      %v2805 = vadd.f32 %v2789, %v2791
      %v2806 = vadd.f32 %v2805, %v2793
      %v2807 = vadd.f32 %v2806, %v2795
      %v2808 = vrot.slane %v2807, 4
      %v2809 = vadd.f32 %v2807, %v2808
      %v2810 = vrot.slane %v2809, 2
      %v2811 = vadd.f32 %v2809, %v2810
      %v2812 = vrot.slane %v2811, 1
      %v2813 = vadd.f32 %v2811, %v2812
      %v2814 = vmax.f32 %v2804, 1e-24
      %v2815 = vmax.f32 %v2813, 1e-24
      %v2816 = vrsqrt.pop %v2814
      %v2817 = vmul.f32 %v2816, %v2814
      %v2818 = vmul.f32 %v2817, %v2816
      %v2819 = vmul.f32 0.5, %v2818
      %v2820 = vsub.f32 1.5, %v2819
      %v2821 = vmul.f32 %v2816, %v2820
      %vm2822 = vweird.f32 %v2814
      %vm2823 = vweird.f32 %v2816
      %vm2824 = vmor %vm2822, %vm2823
      %v2825 = vsel %vm2824, %v2816, %v2821
      %v2826 = vrsqrt.pop %v2815
      %v2827 = vmul.f32 %v2826, %v2815
      %v2828 = vmul.f32 %v2827, %v2826
      %v2829 = vmul.f32 0.5, %v2828
      %v2830 = vsub.f32 1.5, %v2829
      %v2831 = vmul.f32 %v2826, %v2830
      %vm2832 = vweird.f32 %v2815
      %vm2833 = vweird.f32 %v2826
      %vm2834 = vmor %vm2832, %vm2833
      %v2835 = vsel %vm2834, %v2826, %v2831
      %v2836 = vmul.f32 %v2724, %v2825
      %v2837 = vmul.f32 %v2725, %v2835
      %v2838 = vmul.f32 %v2726, %v2825
      %v2839 = vmul.f32 %v2727, %v2835
      %v2840 = vmul.f32 %v2728, %v2825
      %v2841 = vmul.f32 %v2729, %v2835
      %v2842 = vmul.f32 %v2730, %v2825
      %v2843 = vmul.f32 %v2731, %v2835
      %2844 = vst [vmem:[#allocation2] sm:$0xff] 0.0
      %2845 = vst [vmem:[#allocation2 + $0x8] sm:$0xff] %v2836
      %2846 = vst [vmem:[#allocation2 + $0x10] sm:$0xff] 0.0
      %2847 = vst [vmem:[#allocation2 + $0x18] sm:$0xff] %v2838
      %2848 = vst [vmem:[#allocation2 + $0x20] sm:$0xff] 0.0
      %2849 = vst [vmem:[#allocation2 + $0x28] sm:$0xff] %v2840
      %2850 = vst [vmem:[#allocation2 + $0x30] sm:$0xff] 0.0
      %2851 = vst [vmem:[#allocation2 + $0x38] sm:$0xff] %v2842
      %2861 = vrot.lane.b32.xlu0 0.0, 112
      %v2862 = vpop.permute.xlu0 %2861
      %2863 = vrot.lane.b32.xlu0 %v2836, 112
      %v2864 = vpop.permute.xlu0 %2863
      %2865 = vrot.lane.b32.xlu0 %v2837, 112
      %v2866 = vpop.permute.xlu0 %2865
      %2867 = vrot.lane.b32.xlu0 %v2838, 112
      %v2868 = vpop.permute.xlu0 %2867
      %2869 = vrot.lane.b32.xlu0 %v2839, 112
      %v2870 = vpop.permute.xlu0 %2869
      %2871 = vrot.lane.b32.xlu0 %v2840, 112
      %v2872 = vpop.permute.xlu0 %2871
      %2873 = vrot.lane.b32.xlu0 %v2841, 112
      %v2874 = vpop.permute.xlu0 %2873
      %2875 = vrot.lane.b32.xlu0 %v2842, 112
      %v2876 = vpop.permute.xlu0 %2875
      %2877 = vrot.lane.b32.xlu0 %v2843, 112
      %v2878 = vpop.permute.xlu0 %2877
      %v2879 = vsel %vm1557, %v2862, %v2864
      %v2880 = vsel %vm1557, %v2864, %v2866
      %v2881 = vsel %vm1557, %v2862, %v2868
      %v2882 = vsel %vm1557, %v2868, %v2870
      %v2883 = vsel %vm1557, %v2862, %v2872
      %v2884 = vsel %vm1557, %v2872, %v2874
      %v2885 = vsel %vm1557, %v2862, %v2876
      %v2886 = vsel %vm1557, %v2876, %v2878
      %s2895 = scalar_lea.vmem [#allocation2], 64
      %2896 = vst [vmem:[%s2895] sm:$0xff] %v2879
      %2897 = vst [vmem:[%s2895 + $0x8] sm:$0xff] %v2880
      %2898 = vst [vmem:[%s2895 + $0x10] sm:$0xff] %v2881
      %2899 = vst [vmem:[%s2895 + $0x18] sm:$0xff] %v2882
      %2900 = vst [vmem:[%s2895 + $0x20] sm:$0xff] %v2883
      %2901 = vst [vmem:[%s2895 + $0x28] sm:$0xff] %v2884
      %2902 = vst [vmem:[%s2895 + $0x30] sm:$0xff] %v2885
      %2903 = vst [vmem:[%s2895 + $0x38] sm:$0xff] %v2886
      %2904 = vrot.lane.b32.xlu0 0.0, 96
      %v2905 = vpop.permute.xlu0 %2904
      %2906 = vrot.lane.b32.xlu0 %v2836, 96
      %v2907 = vpop.permute.xlu0 %2906
      %2908 = vrot.lane.b32.xlu0 %v2837, 96
      %v2909 = vpop.permute.xlu0 %2908
      %2910 = vrot.lane.b32.xlu0 %v2838, 96
      %v2911 = vpop.permute.xlu0 %2910
      %2912 = vrot.lane.b32.xlu0 %v2839, 96
      %v2913 = vpop.permute.xlu0 %2912
      %2914 = vrot.lane.b32.xlu0 %v2840, 96
      %v2915 = vpop.permute.xlu0 %2914
      %2916 = vrot.lane.b32.xlu0 %v2841, 96
      %v2917 = vpop.permute.xlu0 %2916
      %2918 = vrot.lane.b32.xlu0 %v2842, 96
      %v2919 = vpop.permute.xlu0 %2918
      %2920 = vrot.lane.b32.xlu0 %v2843, 96
      %v2921 = vpop.permute.xlu0 %2920
      %vm2922 = vcmask 785408
      %v2923 = vsel %vm2922, %v2905, %v2907
      %v2924 = vsel %vm2922, %v2907, %v2909
      %v2925 = vsel %vm2922, %v2905, %v2911
      %v2926 = vsel %vm2922, %v2911, %v2913
      %v2927 = vsel %vm2922, %v2905, %v2915
      %v2928 = vsel %vm2922, %v2915, %v2917
      %v2929 = vsel %vm2922, %v2905, %v2919
      %v2930 = vsel %vm2922, %v2919, %v2921
      %s2939 = scalar_lea.vmem [#allocation2], 128
      %2940 = vst [vmem:[%s2939] sm:$0xff] %v2923
      %2941 = vst [vmem:[%s2939 + $0x8] sm:$0xff] %v2924
      %2942 = vst [vmem:[%s2939 + $0x10] sm:$0xff] %v2925
      %2943 = vst [vmem:[%s2939 + $0x18] sm:$0xff] %v2926
      %2944 = vst [vmem:[%s2939 + $0x20] sm:$0xff] %v2927
      %2945 = vst [vmem:[%s2939 + $0x28] sm:$0xff] %v2928
      %2946 = vst [vmem:[%s2939 + $0x30] sm:$0xff] %v2929
      %2947 = vst [vmem:[%s2939 + $0x38] sm:$0xff] %v2930
      %2948 = vrot.lane.b32.xlu0 0.0, 80
      %v2949 = vpop.permute.xlu0 %2948
      %2950 = vrot.lane.b32.xlu0 %v2836, 80
      %v2951 = vpop.permute.xlu0 %2950
      %2952 = vrot.lane.b32.xlu0 %v2837, 80
      %v2953 = vpop.permute.xlu0 %2952
      %2954 = vrot.lane.b32.xlu0 %v2838, 80
      %v2955 = vpop.permute.xlu0 %2954
      %2956 = vrot.lane.b32.xlu0 %v2839, 80
      %v2957 = vpop.permute.xlu0 %2956
      %2958 = vrot.lane.b32.xlu0 %v2840, 80
      %v2959 = vpop.permute.xlu0 %2958
      %2960 = vrot.lane.b32.xlu0 %v2841, 80
      %v2961 = vpop.permute.xlu0 %2960
      %2962 = vrot.lane.b32.xlu0 %v2842, 80
      %v2963 = vpop.permute.xlu0 %2962
      %2964 = vrot.lane.b32.xlu0 %v2843, 80
      %v2965 = vpop.permute.xlu0 %2964
      %vm2966 = vcmask 654336
      %v2967 = vsel %vm2966, %v2949, %v2951
      %v2968 = vsel %vm2966, %v2951, %v2953
      %v2969 = vsel %vm2966, %v2949, %v2955
      %v2970 = vsel %vm2966, %v2955, %v2957
      %v2971 = vsel %vm2966, %v2949, %v2959
      %v2972 = vsel %vm2966, %v2959, %v2961
      %v2973 = vsel %vm2966, %v2949, %v2963
      %v2974 = vsel %vm2966, %v2963, %v2965
      %s2983 = scalar_lea.vmem [#allocation2], 192
      %2984 = vst [vmem:[%s2983] sm:$0xff] %v2967
      %2985 = vst [vmem:[%s2983 + $0x8] sm:$0xff] %v2968
      %2986 = vst [vmem:[%s2983 + $0x10] sm:$0xff] %v2969
      %2987 = vst [vmem:[%s2983 + $0x18] sm:$0xff] %v2970
      %2988 = vst [vmem:[%s2983 + $0x20] sm:$0xff] %v2971
      %2989 = vst [vmem:[%s2983 + $0x28] sm:$0xff] %v2972
      %2990 = vst [vmem:[%s2983 + $0x30] sm:$0xff] %v2973
      %2991 = vst [vmem:[%s2983 + $0x38] sm:$0xff] %v2974
      %2992 = vrot.lane.b32.xlu0 0.0, 64
      %v2993 = vpop.permute.xlu0 %2992
      %2994 = vrot.lane.b32.xlu0 %v2836, 64
      %v2995 = vpop.permute.xlu0 %2994
      %2996 = vrot.lane.b32.xlu0 %v2837, 64
      %v2997 = vpop.permute.xlu0 %2996
      %2998 = vrot.lane.b32.xlu0 %v2838, 64
      %v2999 = vpop.permute.xlu0 %2998
      %3000 = vrot.lane.b32.xlu0 %v2839, 64
      %v3001 = vpop.permute.xlu0 %3000
      %3002 = vrot.lane.b32.xlu0 %v2840, 64
      %v3003 = vpop.permute.xlu0 %3002
      %3004 = vrot.lane.b32.xlu0 %v2841, 64
      %v3005 = vpop.permute.xlu0 %3004
      %3006 = vrot.lane.b32.xlu0 %v2842, 64
      %v3007 = vpop.permute.xlu0 %3006
      %3008 = vrot.lane.b32.xlu0 %v2843, 64
      %v3009 = vpop.permute.xlu0 %3008
      %vm3010 = vcmask 523264
      %v3011 = vsel %vm3010, %v2993, %v2995
      %v3012 = vsel %vm3010, %v2995, %v2997
      %v3013 = vsel %vm3010, %v2993, %v2999
      %v3014 = vsel %vm3010, %v2999, %v3001
      %v3015 = vsel %vm3010, %v2993, %v3003
      %v3016 = vsel %vm3010, %v3003, %v3005
      %v3017 = vsel %vm3010, %v2993, %v3007
      %v3018 = vsel %vm3010, %v3007, %v3009
      %s3027 = scalar_lea.vmem [#allocation2], 256
      %3028 = vst [vmem:[%s3027] sm:$0xff] %v3011
      %3029 = vst [vmem:[%s3027 + $0x8] sm:$0xff] %v3012
      %3030 = vst [vmem:[%s3027 + $0x10] sm:$0xff] %v3013
      %3031 = vst [vmem:[%s3027 + $0x18] sm:$0xff] %v3014
      %3032 = vst [vmem:[%s3027 + $0x20] sm:$0xff] %v3015
      %3033 = vst [vmem:[%s3027 + $0x28] sm:$0xff] %v3016
      %3034 = vst [vmem:[%s3027 + $0x30] sm:$0xff] %v3017
      %3035 = vst [vmem:[%s3027 + $0x38] sm:$0xff] %v3018
      %3036 = vrot.lane.b32.xlu0 0.0, 48
      %v3037 = vpop.permute.xlu0 %3036
      %3038 = vrot.lane.b32.xlu0 %v2836, 48
      %v3039 = vpop.permute.xlu0 %3038
      %3040 = vrot.lane.b32.xlu0 %v2837, 48
      %v3041 = vpop.permute.xlu0 %3040
      %3042 = vrot.lane.b32.xlu0 %v2838, 48
      %v3043 = vpop.permute.xlu0 %3042
      %3044 = vrot.lane.b32.xlu0 %v2839, 48
      %v3045 = vpop.permute.xlu0 %3044
      %3046 = vrot.lane.b32.xlu0 %v2840, 48
      %v3047 = vpop.permute.xlu0 %3046
      %3048 = vrot.lane.b32.xlu0 %v2841, 48
      %v3049 = vpop.permute.xlu0 %3048
      %3050 = vrot.lane.b32.xlu0 %v2842, 48
      %v3051 = vpop.permute.xlu0 %3050
      %3052 = vrot.lane.b32.xlu0 %v2843, 48
      %v3053 = vpop.permute.xlu0 %3052
      %vm3054 = vcmask 392192
      %v3055 = vsel %vm3054, %v3037, %v3039
      %v3056 = vsel %vm3054, %v3039, %v3041
      %v3057 = vsel %vm3054, %v3037, %v3043
      %v3058 = vsel %vm3054, %v3043, %v3045
      %v3059 = vsel %vm3054, %v3037, %v3047
      %v3060 = vsel %vm3054, %v3047, %v3049
      %v3061 = vsel %vm3054, %v3037, %v3051
      %v3062 = vsel %vm3054, %v3051, %v3053
      %s3071 = scalar_lea.vmem [#allocation2], 320
      %3072 = vst [vmem:[%s3071] sm:$0xff] %v3055
      %3073 = vst [vmem:[%s3071 + $0x8] sm:$0xff] %v3056
      %3074 = vst [vmem:[%s3071 + $0x10] sm:$0xff] %v3057
      %3075 = vst [vmem:[%s3071 + $0x18] sm:$0xff] %v3058
      %3076 = vst [vmem:[%s3071 + $0x20] sm:$0xff] %v3059
      %3077 = vst [vmem:[%s3071 + $0x28] sm:$0xff] %v3060
      %3078 = vst [vmem:[%s3071 + $0x30] sm:$0xff] %v3061
      %3079 = vst [vmem:[%s3071 + $0x38] sm:$0xff] %v3062
      %3080 = vrot.lane.b32.xlu0 0.0, 32
      %v3081 = vpop.permute.xlu0 %3080
      %3082 = vrot.lane.b32.xlu0 %v2836, 32
      %v3083 = vpop.permute.xlu0 %3082
      %3084 = vrot.lane.b32.xlu0 %v2837, 32
      %v3085 = vpop.permute.xlu0 %3084
      %3086 = vrot.lane.b32.xlu0 %v2838, 32
      %v3087 = vpop.permute.xlu0 %3086
      %3088 = vrot.lane.b32.xlu0 %v2839, 32
      %v3089 = vpop.permute.xlu0 %3088
      %3090 = vrot.lane.b32.xlu0 %v2840, 32
      %v3091 = vpop.permute.xlu0 %3090
      %3092 = vrot.lane.b32.xlu0 %v2841, 32
      %v3093 = vpop.permute.xlu0 %3092
      %3094 = vrot.lane.b32.xlu0 %v2842, 32
      %v3095 = vpop.permute.xlu0 %3094
      %3096 = vrot.lane.b32.xlu0 %v2843, 32
      %v3097 = vpop.permute.xlu0 %3096
      %vm3098 = vcmask 261120
      %v3099 = vsel %vm3098, %v3081, %v3083
      %v3100 = vsel %vm3098, %v3083, %v3085
      %v3101 = vsel %vm3098, %v3081, %v3087
      %v3102 = vsel %vm3098, %v3087, %v3089
      %v3103 = vsel %vm3098, %v3081, %v3091
      %v3104 = vsel %vm3098, %v3091, %v3093
      %v3105 = vsel %vm3098, %v3081, %v3095
      %v3106 = vsel %vm3098, %v3095, %v3097
      %s3115 = scalar_lea.vmem [#allocation2], 384
      %3116 = vst [vmem:[%s3115] sm:$0xff] %v3099
      %3117 = vst [vmem:[%s3115 + $0x8] sm:$0xff] %v3100
      %3118 = vst [vmem:[%s3115 + $0x10] sm:$0xff] %v3101
      %3119 = vst [vmem:[%s3115 + $0x18] sm:$0xff] %v3102
      %3120 = vst [vmem:[%s3115 + $0x20] sm:$0xff] %v3103
      %3121 = vst [vmem:[%s3115 + $0x28] sm:$0xff] %v3104
      %3122 = vst [vmem:[%s3115 + $0x30] sm:$0xff] %v3105
      %3123 = vst [vmem:[%s3115 + $0x38] sm:$0xff] %v3106
      %3124 = vrot.lane.b32.xlu0 0.0, 16
      %v3125 = vpop.permute.xlu0 %3124
      %3126 = vrot.lane.b32.xlu0 %v2836, 16
      %v3127 = vpop.permute.xlu0 %3126
      %3128 = vrot.lane.b32.xlu0 %v2837, 16
      %v3129 = vpop.permute.xlu0 %3128
      %3130 = vrot.lane.b32.xlu0 %v2838, 16
      %v3131 = vpop.permute.xlu0 %3130
      %3132 = vrot.lane.b32.xlu0 %v2839, 16
      %v3133 = vpop.permute.xlu0 %3132
      %3134 = vrot.lane.b32.xlu0 %v2840, 16
      %v3135 = vpop.permute.xlu0 %3134
      %3136 = vrot.lane.b32.xlu0 %v2841, 16
      %v3137 = vpop.permute.xlu0 %3136
      %3138 = vrot.lane.b32.xlu0 %v2842, 16
      %v3139 = vpop.permute.xlu0 %3138
      %3140 = vrot.lane.b32.xlu0 %v2843, 16
      %v3141 = vpop.permute.xlu0 %3140
      %v3142 = vsel %vm621, %v3125, %v3127
      %v3143 = vsel %vm621, %v3127, %v3129
      %v3144 = vsel %vm621, %v3125, %v3131
      %v3145 = vsel %vm621, %v3131, %v3133
      %v3146 = vsel %vm621, %v3125, %v3135
      %v3147 = vsel %vm621, %v3135, %v3137
      %v3148 = vsel %vm621, %v3125, %v3139
      %v3149 = vsel %vm621, %v3139, %v3141
      %s3158 = scalar_lea.vmem [#allocation2], 448
      %3159 = vst [vmem:[%s3158] sm:$0xff] %v3142
      %3160 = vst [vmem:[%s3158 + $0x8] sm:$0xff] %v3143
      %3161 = vst [vmem:[%s3158 + $0x10] sm:$0xff] %v3144
      %3162 = vst [vmem:[%s3158 + $0x18] sm:$0xff] %v3145
      %3163 = vst [vmem:[%s3158 + $0x20] sm:$0xff] %v3146
      %3164 = vst [vmem:[%s3158 + $0x28] sm:$0xff] %v3147
      %3165 = vst [vmem:[%s3158 + $0x30] sm:$0xff] %v3148
      %3166 = vst [vmem:[%s3158 + $0x38] sm:$0xff] %v3149
      %s3167 = scalar_lea.vmem [#allocation2], 512
      %3168 = vst [vmem:[%s3167] sm:$0xff] %v2836
      %3169 = vst [vmem:[%s3167 + $0x8] sm:$0xff] %v2837
      %3170 = vst [vmem:[%s3167 + $0x10] sm:$0xff] %v2838
      %3171 = vst [vmem:[%s3167 + $0x18] sm:$0xff] %v2839
      %3172 = vst [vmem:[%s3167 + $0x20] sm:$0xff] %v2840
      %3173 = vst [vmem:[%s3167 + $0x28] sm:$0xff] %v2841
      %3174 = vst [vmem:[%s3167 + $0x30] sm:$0xff] %v2842
      %3175 = vst [vmem:[%s3167 + $0x38] sm:$0xff] %v2843
      %v3176 = vsel %vm1557, %v2866, %v2862
      %v3177 = vsel %vm1557, %v2870, %v2862
      %v3178 = vsel %vm1557, %v2874, %v2862
      %v3179 = vsel %vm1557, %v2878, %v2862
      %s3184 = scalar_lea.vmem [#allocation2], 576
      %3185 = vst [vmem:[%s3184] sm:$0xff] %v2880
      %3186 = vst [vmem:[%s3184 + $0x8] sm:$0xff] %v3176
      %3187 = vst [vmem:[%s3184 + $0x10] sm:$0xff] %v2882
      %3188 = vst [vmem:[%s3184 + $0x18] sm:$0xff] %v3177
      %3189 = vst [vmem:[%s3184 + $0x20] sm:$0xff] %v2884
      %3190 = vst [vmem:[%s3184 + $0x28] sm:$0xff] %v3178
      %3191 = vst [vmem:[%s3184 + $0x30] sm:$0xff] %v2886
      %3192 = vst [vmem:[%s3184 + $0x38] sm:$0xff] %v3179
      %v3193 = vsel %vm2922, %v2909, %v2905
      %v3194 = vsel %vm2922, %v2913, %v2905
      %v3195 = vsel %vm2922, %v2917, %v2905
      %v3196 = vsel %vm2922, %v2921, %v2905
      %s3201 = scalar_lea.vmem [#allocation2], 640
      %3202 = vst [vmem:[%s3201] sm:$0xff] %v2924
      %3203 = vst [vmem:[%s3201 + $0x8] sm:$0xff] %v3193
      %3204 = vst [vmem:[%s3201 + $0x10] sm:$0xff] %v2926
      %3205 = vst [vmem:[%s3201 + $0x18] sm:$0xff] %v3194
      %3206 = vst [vmem:[%s3201 + $0x20] sm:$0xff] %v2928
      %3207 = vst [vmem:[%s3201 + $0x28] sm:$0xff] %v3195
      %3208 = vst [vmem:[%s3201 + $0x30] sm:$0xff] %v2930
      %3209 = vst [vmem:[%s3201 + $0x38] sm:$0xff] %v3196
      %v3210 = vsel %vm2966, %v2953, %v2949
      %v3211 = vsel %vm2966, %v2957, %v2949
      %v3212 = vsel %vm2966, %v2961, %v2949
      %v3213 = vsel %vm2966, %v2965, %v2949
      %s3218 = scalar_lea.vmem [#allocation2], 704
      %3219 = vst [vmem:[%s3218] sm:$0xff] %v2968
      %3220 = vst [vmem:[%s3218 + $0x8] sm:$0xff] %v3210
      %3221 = vst [vmem:[%s3218 + $0x10] sm:$0xff] %v2970
      %3222 = vst [vmem:[%s3218 + $0x18] sm:$0xff] %v3211
      %3223 = vst [vmem:[%s3218 + $0x20] sm:$0xff] %v2972
      %3224 = vst [vmem:[%s3218 + $0x28] sm:$0xff] %v3212
      %3225 = vst [vmem:[%s3218 + $0x30] sm:$0xff] %v2974
      %3226 = vst [vmem:[%s3218 + $0x38] sm:$0xff] %v3213
      %v3227 = vsel %vm3010, %v2997, %v2993
      %v3228 = vsel %vm3010, %v3001, %v2993
      %v3229 = vsel %vm3010, %v3005, %v2993
      %v3230 = vsel %vm3010, %v3009, %v2993
      %s3235 = scalar_lea.vmem [#allocation2], 768
      %3236 = vst [vmem:[%s3235] sm:$0xff] %v3012
      %3237 = vst [vmem:[%s3235 + $0x8] sm:$0xff] %v3227
      %3238 = vst [vmem:[%s3235 + $0x10] sm:$0xff] %v3014
      %3239 = vst [vmem:[%s3235 + $0x18] sm:$0xff] %v3228
      %3240 = vst [vmem:[%s3235 + $0x20] sm:$0xff] %v3016
      %3241 = vst [vmem:[%s3235 + $0x28] sm:$0xff] %v3229
      %3242 = vst [vmem:[%s3235 + $0x30] sm:$0xff] %v3018
      %3243 = vst [vmem:[%s3235 + $0x38] sm:$0xff] %v3230
      %v3244 = vsel %vm3054, %v3041, %v3037
      %v3245 = vsel %vm3054, %v3045, %v3037
      %v3246 = vsel %vm3054, %v3049, %v3037
      %v3247 = vsel %vm3054, %v3053, %v3037
      %s3252 = scalar_lea.vmem [#allocation2], 832
      %3253 = vst [vmem:[%s3252] sm:$0xff] %v3056
      %3254 = vst [vmem:[%s3252 + $0x8] sm:$0xff] %v3244
      %3255 = vst [vmem:[%s3252 + $0x10] sm:$0xff] %v3058
      %3256 = vst [vmem:[%s3252 + $0x18] sm:$0xff] %v3245
      %3257 = vst [vmem:[%s3252 + $0x20] sm:$0xff] %v3060
      %3258 = vst [vmem:[%s3252 + $0x28] sm:$0xff] %v3246
      %3259 = vst [vmem:[%s3252 + $0x30] sm:$0xff] %v3062
      %3260 = vst [vmem:[%s3252 + $0x38] sm:$0xff] %v3247
      %v3261 = vsel %vm3098, %v3085, %v3081
      %v3262 = vsel %vm3098, %v3089, %v3081
      %v3263 = vsel %vm3098, %v3093, %v3081
      %v3264 = vsel %vm3098, %v3097, %v3081
      %s3269 = scalar_lea.vmem [#allocation2], 896
      %3270 = vst [vmem:[%s3269] sm:$0xff] %v3100
      %3271 = vst [vmem:[%s3269 + $0x8] sm:$0xff] %v3261
      %3272 = vst [vmem:[%s3269 + $0x10] sm:$0xff] %v3102
      %3273 = vst [vmem:[%s3269 + $0x18] sm:$0xff] %v3262
      %3274 = vst [vmem:[%s3269 + $0x20] sm:$0xff] %v3104
      %3275 = vst [vmem:[%s3269 + $0x28] sm:$0xff] %v3263
      %3276 = vst [vmem:[%s3269 + $0x30] sm:$0xff] %v3106
      %3277 = vst [vmem:[%s3269 + $0x38] sm:$0xff] %v3264
      %v3278 = vsel %vm621, %v3129, %v3125
      %v3279 = vsel %vm621, %v3133, %v3125
      %v3280 = vsel %vm621, %v3137, %v3125
      %v3281 = vsel %vm621, %v3141, %v3125
      %s3286 = scalar_lea.vmem [#allocation2], 960
      %3287 = vst [vmem:[%s3286] sm:$0xff] %v3143
      %3288 = vst [vmem:[%s3286 + $0x8] sm:$0xff] %v3278
      %3289 = vst [vmem:[%s3286 + $0x10] sm:$0xff] %v3145
      %3290 = vst [vmem:[%s3286 + $0x18] sm:$0xff] %v3279
      %3291 = vst [vmem:[%s3286 + $0x20] sm:$0xff] %v3147
      %3292 = vst [vmem:[%s3286 + $0x28] sm:$0xff] %v3280
      %3293 = vst [vmem:[%s3286 + $0x30] sm:$0xff] %v3149
      %3294 = vst [vmem:[%s3286 + $0x38] sm:$0xff] %v3281
      %s3295 = scalar_lea.vmem [#allocation2], 1024
      %3296 = vst [vmem:[%s3295] sm:$0xff] %v2837
      %3297 = vst [vmem:[%s3295 + $0x8] sm:$0xff] 0.0
      %3298 = vst [vmem:[%s3295 + $0x10] sm:$0xff] %v2839
      %3299 = vst [vmem:[%s3295 + $0x18] sm:$0xff] 0.0
      %3300 = vst [vmem:[%s3295 + $0x20] sm:$0xff] %v2841
      %3301 = vst [vmem:[%s3295 + $0x28] sm:$0xff] 0.0
      %3302 = vst [vmem:[%s3295 + $0x30] sm:$0xff] %v2843
      %3303 = vst [vmem:[%s3295 + $0x38] sm:$0xff] 0.0
      loop: start=0, step=1, limit=17
      $region37: #{multiscale_attn_forward.1} parent=35 // loop_pre_header
        _
      $region38: #{multiscale_attn_forward.1} parent=35 // loop_header
        %s3305 = sphi 0, %s3309
        %p3306 = scmp.ge.s32.totalorder %s3305, 17
        %v3310 = vphi -inf, %v4719
        %v3311 = vphi 0, %v4721
      $region39: #{multiscale_attn_forward.1} parent=35 // loop_header_branch
        %3308 = sbr.rel (%p3306) target = $region43
      $region40: #{multiscale_attn_forward.1} parent=35 // loop_body
        %s3312 = smul.u32 %s3305, 8
        %s3313 = smul.addr %s3312, 8
        %s3314 = scalar_lea.vmem [#allocation2], %s3313
        %v3315 = vld [vmem:[%s3314] sm:$0xff]
        %v3316 = vld [vmem:[%s3314 + $0x8] sm:$0xff]
        %v3317 = vld [vmem:[%s3314 + $0x10] sm:$0xff]
        %v3318 = vld [vmem:[%s3314 + $0x18] sm:$0xff]
        %v3319 = vld [vmem:[%s3314 + $0x20] sm:$0xff]
        %v3320 = vld [vmem:[%s3314 + $0x28] sm:$0xff]
        %v3321 = vld [vmem:[%s3314 + $0x30] sm:$0xff]
        %v3322 = vld [vmem:[%s3314 + $0x38] sm:$0xff]
        %3331 = vrot.lane.b32.xlu0 %v3315, 8
        %v3332 = vpop.permute.xlu0 %3331
        %3333 = vrot.lane.b32.xlu0 %v3316, 8
        %v3334 = vpop.permute.xlu0 %3333
        %3335 = vrot.lane.b32.xlu0 %v3317, 8
        %v3336 = vpop.permute.xlu0 %3335
        %3337 = vrot.lane.b32.xlu0 %v3318, 8
        %v3338 = vpop.permute.xlu0 %3337
        %3339 = vrot.lane.b32.xlu0 %v3319, 8
        %v3340 = vpop.permute.xlu0 %3339
        %3341 = vrot.lane.b32.xlu0 %v3320, 8
        %v3342 = vpop.permute.xlu0 %3341
        %3343 = vrot.lane.b32.xlu0 %v3321, 8
        %v3344 = vpop.permute.xlu0 %3343
        %3345 = vrot.lane.b32.xlu0 %v3322, 8
        %v3346 = vpop.permute.xlu0 %3345
        %vm3347 = vcmask 64512
        %v3348 = vsel %vm3347, %v3332, %v3334
        %v3349 = vsel %vm3347, %v3336, %v3338
        %v3350 = vsel %vm3347, %v3340, %v3342
        %v3351 = vsel %vm3347, %v3344, %v3346
        %v3364 = vsel %vm3347, 0.0, %v3332
        %v3365 = vsel %vm3347, 0.0, %v3336
        %v3366 = vsel %vm3347, 0.0, %v3340
        %v3367 = vsel %vm3347, 0.0, %v3344
        %v3368 = vsel %vm3347, %v3334, 0.0
        %v3369 = vsel %vm3347, %v3338, 0.0
        %v3370 = vsel %vm3347, %v3342, 0.0
        %v3371 = vsel %vm3347, %v3346, 0.0
        %v3372 = vmul.f32 %v2780, %v3364
        %v3373 = vmul.f32 %v2781, %v3348
        %v3374 = vmul.f32 %v2782, %v3365
        %v3375 = vmul.f32 %v2783, %v3349
        %v3376 = vmul.f32 %v2784, %v3366
        %v3377 = vmul.f32 %v2785, %v3350
        %v3378 = vmul.f32 %v2786, %v3367
        %v3379 = vmul.f32 %v2787, %v3351
        %v3380 = vadd.f32 %v3372, %v3374
        %v3381 = vadd.f32 %v3380, %v3376
        %v3382 = vadd.f32 %v3381, %v3378
        %v3383 = vrot.slane %v3382, 4
        %v3384 = vadd.f32 %v3382, %v3383
        %v3385 = vrot.slane %v3384, 2
        %v3386 = vadd.f32 %v3384, %v3385
        %v3387 = vrot.slane %v3386, 1
        %v3388 = vadd.f32 %v3386, %v3387
        %v3389 = vadd.f32 %v3373, %v3375
        %v3390 = vadd.f32 %v3389, %v3377
        %v3391 = vadd.f32 %v3390, %v3379
        %v3392 = vrot.slane %v3391, 4
        %v3393 = vadd.f32 %v3391, %v3392
        %v3394 = vrot.slane %v3393, 2
        %v3395 = vadd.f32 %v3393, %v3394
        %v3396 = vrot.slane %v3395, 1
        %v3397 = vadd.f32 %v3395, %v3396
        %v3398 = vadd.s32 %v293, 4294967288
        %vm3399 = vcmp.ge.s32.totalorder %v3398, 0
        %vm3400 = vcmp.lt.s32.totalorder %v3398, 16
        %vm3401 = vmand %vm3399, %vm3400
        %v3404 = vrot.slane %v3397, 7
        %vm3405 = vcmask 1040384
        %v3406 = vsel %vm3405, %v3388, %v3404
        %v3408 = vsel %vm3401, %v3406, 0.0
        %s3409 = smul.u32 %s3305, 17
        %vm3410 = vcmp.gt.f32.partialorder %v3408, %v3310
        %v3411 = vsel %vm3410, %v3408, %v3310
        %v3412 = vstv %s3409
        %v3413 = vsel %vm3410, %v3412, %v3311
        %3422 = vrot.lane.b32.xlu0 %v3364, 127
        %v3423 = vpop.permute.xlu0 %3422
        %3424 = vrot.lane.b32.xlu0 %v3348, 127
        %v3425 = vpop.permute.xlu0 %3424
        %3426 = vrot.lane.b32.xlu0 %v3368, 127
        %v3427 = vpop.permute.xlu0 %3426
        %3428 = vrot.lane.b32.xlu0 %v3365, 127
        %v3429 = vpop.permute.xlu0 %3428
        %3430 = vrot.lane.b32.xlu0 %v3349, 127
        %v3431 = vpop.permute.xlu0 %3430
        %3432 = vrot.lane.b32.xlu0 %v3369, 127
        %v3433 = vpop.permute.xlu0 %3432
        %3434 = vrot.lane.b32.xlu0 %v3366, 127
        %v3435 = vpop.permute.xlu0 %3434
        %3436 = vrot.lane.b32.xlu0 %v3350, 127
        %v3437 = vpop.permute.xlu0 %3436
        %3438 = vrot.lane.b32.xlu0 %v3370, 127
        %v3439 = vpop.permute.xlu0 %3438
        %3440 = vrot.lane.b32.xlu0 %v3367, 127
        %v3441 = vpop.permute.xlu0 %3440
        %3442 = vrot.lane.b32.xlu0 %v3351, 127
        %v3443 = vpop.permute.xlu0 %3442
        %3444 = vrot.lane.b32.xlu0 %v3371, 127
        %v3445 = vpop.permute.xlu0 %3444
        %v3446 = vsel %vm1229, %v3423, %v3425
        %v3447 = vsel %vm1229, %v3425, %v3427
        %v3448 = vsel %vm1229, %v3429, %v3431
        %v3449 = vsel %vm1229, %v3431, %v3433
        %v3450 = vsel %vm1229, %v3435, %v3437
        %v3451 = vsel %vm1229, %v3437, %v3439
        %v3452 = vsel %vm1229, %v3441, %v3443
        %v3453 = vsel %vm1229, %v3443, %v3445
        %v3462 = vmul.f32 %v2780, %v3446
        %v3463 = vmul.f32 %v2781, %v3447
        %v3464 = vmul.f32 %v2782, %v3448
        %v3465 = vmul.f32 %v2783, %v3449
        %v3466 = vmul.f32 %v2784, %v3450
        %v3467 = vmul.f32 %v2785, %v3451
        %v3468 = vmul.f32 %v2786, %v3452
        %v3469 = vmul.f32 %v2787, %v3453
        %v3470 = vadd.f32 %v3462, %v3464
        %v3471 = vadd.f32 %v3470, %v3466
        %v3472 = vadd.f32 %v3471, %v3468
        %v3473 = vrot.slane %v3472, 4
        %v3474 = vadd.f32 %v3472, %v3473
        %v3475 = vrot.slane %v3474, 2
        %v3476 = vadd.f32 %v3474, %v3475
        %v3477 = vrot.slane %v3476, 1
        %v3478 = vadd.f32 %v3476, %v3477
        %v3479 = vadd.f32 %v3463, %v3465
        %v3480 = vadd.f32 %v3479, %v3467
        %v3481 = vadd.f32 %v3480, %v3469
        %v3482 = vrot.slane %v3481, 4
        %v3483 = vadd.f32 %v3481, %v3482
        %v3484 = vrot.slane %v3483, 2
        %v3485 = vadd.f32 %v3483, %v3484
        %v3486 = vrot.slane %v3485, 1
        %v3487 = vadd.f32 %v3485, %v3486
        %v3488 = vadd.s32 %v293, 4294967289
        %vm3489 = vcmp.ge.s32.totalorder %v3488, 0
        %vm3490 = vcmp.lt.s32.totalorder %v3488, 16
        %vm3491 = vmand %vm3489, %vm3490
        %v3494 = vrot.slane %v3487, 7
        %v3495 = vsel %vm3405, %v3478, %v3494
        %v3497 = vsel %vm3491, %v3495, 0.0
        %s3498 = sadd.s32 %s3409, 1
        %vm3499 = vcmp.gt.f32.partialorder %v3497, %v3411
        %v3500 = vsel %vm3499, %v3497, %v3411
        %v3501 = vstv %s3498
        %v3502 = vsel %vm3499, %v3501, %v3413
        %3503 = vrot.lane.b32.xlu0 %v3364, 126
        %v3504 = vpop.permute.xlu0 %3503
        %3505 = vrot.lane.b32.xlu0 %v3348, 126
        %v3506 = vpop.permute.xlu0 %3505
        %3507 = vrot.lane.b32.xlu0 %v3368, 126
        %v3508 = vpop.permute.xlu0 %3507
        %3509 = vrot.lane.b32.xlu0 %v3365, 126
        %v3510 = vpop.permute.xlu0 %3509
        %3511 = vrot.lane.b32.xlu0 %v3349, 126
        %v3512 = vpop.permute.xlu0 %3511
        %3513 = vrot.lane.b32.xlu0 %v3369, 126
        %v3514 = vpop.permute.xlu0 %3513
        %3515 = vrot.lane.b32.xlu0 %v3366, 126
        %v3516 = vpop.permute.xlu0 %3515
        %3517 = vrot.lane.b32.xlu0 %v3350, 126
        %v3518 = vpop.permute.xlu0 %3517
        %3519 = vrot.lane.b32.xlu0 %v3370, 126
        %v3520 = vpop.permute.xlu0 %3519
        %3521 = vrot.lane.b32.xlu0 %v3367, 126
        %v3522 = vpop.permute.xlu0 %3521
        %3523 = vrot.lane.b32.xlu0 %v3351, 126
        %v3524 = vpop.permute.xlu0 %3523
        %3525 = vrot.lane.b32.xlu0 %v3371, 126
        %v3526 = vpop.permute.xlu0 %3525
        %vm3527 = vcmask 1031168
        %v3528 = vsel %vm3527, %v3504, %v3506
        %v3529 = vsel %vm3527, %v3506, %v3508
        %v3530 = vsel %vm3527, %v3510, %v3512
        %v3531 = vsel %vm3527, %v3512, %v3514
        %v3532 = vsel %vm3527, %v3516, %v3518
        %v3533 = vsel %vm3527, %v3518, %v3520
        %v3534 = vsel %vm3527, %v3522, %v3524
        %v3535 = vsel %vm3527, %v3524, %v3526
        %v3544 = vmul.f32 %v2780, %v3528
        %v3545 = vmul.f32 %v2781, %v3529
        %v3546 = vmul.f32 %v2782, %v3530
        %v3547 = vmul.f32 %v2783, %v3531
        %v3548 = vmul.f32 %v2784, %v3532
        %v3549 = vmul.f32 %v2785, %v3533
        %v3550 = vmul.f32 %v2786, %v3534
        %v3551 = vmul.f32 %v2787, %v3535
        %v3552 = vadd.f32 %v3544, %v3546
        %v3553 = vadd.f32 %v3552, %v3548
        %v3554 = vadd.f32 %v3553, %v3550
        %v3555 = vrot.slane %v3554, 4
        %v3556 = vadd.f32 %v3554, %v3555
        %v3557 = vrot.slane %v3556, 2
        %v3558 = vadd.f32 %v3556, %v3557
        %v3559 = vrot.slane %v3558, 1
        %v3560 = vadd.f32 %v3558, %v3559
        %v3561 = vadd.f32 %v3545, %v3547
        %v3562 = vadd.f32 %v3561, %v3549
        %v3563 = vadd.f32 %v3562, %v3551
        %v3564 = vrot.slane %v3563, 4
        %v3565 = vadd.f32 %v3563, %v3564
        %v3566 = vrot.slane %v3565, 2
        %v3567 = vadd.f32 %v3565, %v3566
        %v3568 = vrot.slane %v3567, 1
        %v3569 = vadd.f32 %v3567, %v3568
        %v3570 = vadd.s32 %v293, 4294967290
        %vm3571 = vcmp.ge.s32.totalorder %v3570, 0
        %vm3572 = vcmp.lt.s32.totalorder %v3570, 16
        %vm3573 = vmand %vm3571, %vm3572
        %v3576 = vrot.slane %v3569, 7
        %v3577 = vsel %vm3405, %v3560, %v3576
        %v3579 = vsel %vm3573, %v3577, 0.0
        %s3580 = sadd.s32 %s3409, 2
        %vm3581 = vcmp.gt.f32.partialorder %v3579, %v3500
        %v3582 = vsel %vm3581, %v3579, %v3500
        %v3583 = vstv %s3580
        %v3584 = vsel %vm3581, %v3583, %v3502
        %3585 = vrot.lane.b32.xlu0 %v3364, 125
        %v3586 = vpop.permute.xlu0 %3585
        %3587 = vrot.lane.b32.xlu0 %v3348, 125
        %v3588 = vpop.permute.xlu0 %3587
        %3589 = vrot.lane.b32.xlu0 %v3368, 125
        %v3590 = vpop.permute.xlu0 %3589
        %3591 = vrot.lane.b32.xlu0 %v3365, 125
        %v3592 = vpop.permute.xlu0 %3591
        %3593 = vrot.lane.b32.xlu0 %v3349, 125
        %v3594 = vpop.permute.xlu0 %3593
        %3595 = vrot.lane.b32.xlu0 %v3369, 125
        %v3596 = vpop.permute.xlu0 %3595
        %3597 = vrot.lane.b32.xlu0 %v3366, 125
        %v3598 = vpop.permute.xlu0 %3597
        %3599 = vrot.lane.b32.xlu0 %v3350, 125
        %v3600 = vpop.permute.xlu0 %3599
        %3601 = vrot.lane.b32.xlu0 %v3370, 125
        %v3602 = vpop.permute.xlu0 %3601
        %3603 = vrot.lane.b32.xlu0 %v3367, 125
        %v3604 = vpop.permute.xlu0 %3603
        %3605 = vrot.lane.b32.xlu0 %v3351, 125
        %v3606 = vpop.permute.xlu0 %3605
        %3607 = vrot.lane.b32.xlu0 %v3371, 125
        %v3608 = vpop.permute.xlu0 %3607
        %vm3609 = vcmask 1022976
        %v3610 = vsel %vm3609, %v3586, %v3588
        %v3611 = vsel %vm3609, %v3588, %v3590
        %v3612 = vsel %vm3609, %v3592, %v3594
        %v3613 = vsel %vm3609, %v3594, %v3596
        %v3614 = vsel %vm3609, %v3598, %v3600
        %v3615 = vsel %vm3609, %v3600, %v3602
        %v3616 = vsel %vm3609, %v3604, %v3606
        %v3617 = vsel %vm3609, %v3606, %v3608
        %v3626 = vmul.f32 %v2780, %v3610
        %v3627 = vmul.f32 %v2781, %v3611
        %v3628 = vmul.f32 %v2782, %v3612
        %v3629 = vmul.f32 %v2783, %v3613
        %v3630 = vmul.f32 %v2784, %v3614
        %v3631 = vmul.f32 %v2785, %v3615
        %v3632 = vmul.f32 %v2786, %v3616
        %v3633 = vmul.f32 %v2787, %v3617
        %v3634 = vadd.f32 %v3626, %v3628
        %v3635 = vadd.f32 %v3634, %v3630
        %v3636 = vadd.f32 %v3635, %v3632
        %v3637 = vrot.slane %v3636, 4
        %v3638 = vadd.f32 %v3636, %v3637
        %v3639 = vrot.slane %v3638, 2
        %v3640 = vadd.f32 %v3638, %v3639
        %v3641 = vrot.slane %v3640, 1
        %v3642 = vadd.f32 %v3640, %v3641
        %v3643 = vadd.f32 %v3627, %v3629
        %v3644 = vadd.f32 %v3643, %v3631
        %v3645 = vadd.f32 %v3644, %v3633
        %v3646 = vrot.slane %v3645, 4
        %v3647 = vadd.f32 %v3645, %v3646
        %v3648 = vrot.slane %v3647, 2
        %v3649 = vadd.f32 %v3647, %v3648
        %v3650 = vrot.slane %v3649, 1
        %v3651 = vadd.f32 %v3649, %v3650
        %v3652 = vadd.s32 %v293, 4294967291
        %vm3653 = vcmp.ge.s32.totalorder %v3652, 0
        %vm3654 = vcmp.lt.s32.totalorder %v3652, 16
        %vm3655 = vmand %vm3653, %vm3654
        %v3658 = vrot.slane %v3651, 7
        %v3659 = vsel %vm3405, %v3642, %v3658
        %v3661 = vsel %vm3655, %v3659, 0.0
        %s3662 = sadd.s32 %s3409, 3
        %vm3663 = vcmp.gt.f32.partialorder %v3661, %v3582
        %v3664 = vsel %vm3663, %v3661, %v3582
        %v3665 = vstv %s3662
        %v3666 = vsel %vm3663, %v3665, %v3584
        %3667 = vrot.lane.b32.xlu0 %v3364, 124
        %v3668 = vpop.permute.xlu0 %3667
        %3669 = vrot.lane.b32.xlu0 %v3348, 124
        %v3670 = vpop.permute.xlu0 %3669
        %3671 = vrot.lane.b32.xlu0 %v3368, 124
        %v3672 = vpop.permute.xlu0 %3671
        %3673 = vrot.lane.b32.xlu0 %v3365, 124
        %v3674 = vpop.permute.xlu0 %3673
        %3675 = vrot.lane.b32.xlu0 %v3349, 124
        %v3676 = vpop.permute.xlu0 %3675
        %3677 = vrot.lane.b32.xlu0 %v3369, 124
        %v3678 = vpop.permute.xlu0 %3677
        %3679 = vrot.lane.b32.xlu0 %v3366, 124
        %v3680 = vpop.permute.xlu0 %3679
        %3681 = vrot.lane.b32.xlu0 %v3350, 124
        %v3682 = vpop.permute.xlu0 %3681
        %3683 = vrot.lane.b32.xlu0 %v3370, 124
        %v3684 = vpop.permute.xlu0 %3683
        %3685 = vrot.lane.b32.xlu0 %v3367, 124
        %v3686 = vpop.permute.xlu0 %3685
        %3687 = vrot.lane.b32.xlu0 %v3351, 124
        %v3688 = vpop.permute.xlu0 %3687
        %3689 = vrot.lane.b32.xlu0 %v3371, 124
        %v3690 = vpop.permute.xlu0 %3689
        %vm3691 = vcmask 1014784
        %v3692 = vsel %vm3691, %v3668, %v3670
        %v3693 = vsel %vm3691, %v3670, %v3672
        %v3694 = vsel %vm3691, %v3674, %v3676
        %v3695 = vsel %vm3691, %v3676, %v3678
        %v3696 = vsel %vm3691, %v3680, %v3682
        %v3697 = vsel %vm3691, %v3682, %v3684
        %v3698 = vsel %vm3691, %v3686, %v3688
        %v3699 = vsel %vm3691, %v3688, %v3690
        %v3708 = vmul.f32 %v2780, %v3692
        %v3709 = vmul.f32 %v2781, %v3693
        %v3710 = vmul.f32 %v2782, %v3694
        %v3711 = vmul.f32 %v2783, %v3695
        %v3712 = vmul.f32 %v2784, %v3696
        %v3713 = vmul.f32 %v2785, %v3697
        %v3714 = vmul.f32 %v2786, %v3698
        %v3715 = vmul.f32 %v2787, %v3699
        %v3716 = vadd.f32 %v3708, %v3710
        %v3717 = vadd.f32 %v3716, %v3712
        %v3718 = vadd.f32 %v3717, %v3714
        %v3719 = vrot.slane %v3718, 4
        %v3720 = vadd.f32 %v3718, %v3719
        %v3721 = vrot.slane %v3720, 2
        %v3722 = vadd.f32 %v3720, %v3721
        %v3723 = vrot.slane %v3722, 1
        %v3724 = vadd.f32 %v3722, %v3723
        %v3725 = vadd.f32 %v3709, %v3711
        %v3726 = vadd.f32 %v3725, %v3713
        %v3727 = vadd.f32 %v3726, %v3715
        %v3728 = vrot.slane %v3727, 4
        %v3729 = vadd.f32 %v3727, %v3728
        %v3730 = vrot.slane %v3729, 2
        %v3731 = vadd.f32 %v3729, %v3730
        %v3732 = vrot.slane %v3731, 1
        %v3733 = vadd.f32 %v3731, %v3732
        %v3734 = vadd.s32 %v293, 4294967292
        %vm3735 = vcmp.ge.s32.totalorder %v3734, 0
        %vm3736 = vcmp.lt.s32.totalorder %v3734, 16
        %vm3737 = vmand %vm3735, %vm3736
        %v3740 = vrot.slane %v3733, 7
        %v3741 = vsel %vm3405, %v3724, %v3740
        %v3743 = vsel %vm3737, %v3741, 0.0
        %s3744 = sadd.s32 %s3409, 4
        %vm3745 = vcmp.gt.f32.partialorder %v3743, %v3664
        %v3746 = vsel %vm3745, %v3743, %v3664
        %v3747 = vstv %s3744
        %v3748 = vsel %vm3745, %v3747, %v3666
        %3749 = vrot.lane.b32.xlu0 %v3364, 123
        %v3750 = vpop.permute.xlu0 %3749
        %3751 = vrot.lane.b32.xlu0 %v3348, 123
        %v3752 = vpop.permute.xlu0 %3751
        %3753 = vrot.lane.b32.xlu0 %v3368, 123
        %v3754 = vpop.permute.xlu0 %3753
        %3755 = vrot.lane.b32.xlu0 %v3365, 123
        %v3756 = vpop.permute.xlu0 %3755
        %3757 = vrot.lane.b32.xlu0 %v3349, 123
        %v3758 = vpop.permute.xlu0 %3757
        %3759 = vrot.lane.b32.xlu0 %v3369, 123
        %v3760 = vpop.permute.xlu0 %3759
        %3761 = vrot.lane.b32.xlu0 %v3366, 123
        %v3762 = vpop.permute.xlu0 %3761
        %3763 = vrot.lane.b32.xlu0 %v3350, 123
        %v3764 = vpop.permute.xlu0 %3763
        %3765 = vrot.lane.b32.xlu0 %v3370, 123
        %v3766 = vpop.permute.xlu0 %3765
        %3767 = vrot.lane.b32.xlu0 %v3367, 123
        %v3768 = vpop.permute.xlu0 %3767
        %3769 = vrot.lane.b32.xlu0 %v3351, 123
        %v3770 = vpop.permute.xlu0 %3769
        %3771 = vrot.lane.b32.xlu0 %v3371, 123
        %v3772 = vpop.permute.xlu0 %3771
        %vm3773 = vcmask 1006592
        %v3774 = vsel %vm3773, %v3750, %v3752
        %v3775 = vsel %vm3773, %v3752, %v3754
        %v3776 = vsel %vm3773, %v3756, %v3758
        %v3777 = vsel %vm3773, %v3758, %v3760
        %v3778 = vsel %vm3773, %v3762, %v3764
        %v3779 = vsel %vm3773, %v3764, %v3766
        %v3780 = vsel %vm3773, %v3768, %v3770
        %v3781 = vsel %vm3773, %v3770, %v3772
        %v3790 = vmul.f32 %v2780, %v3774
        %v3791 = vmul.f32 %v2781, %v3775
        %v3792 = vmul.f32 %v2782, %v3776
        %v3793 = vmul.f32 %v2783, %v3777
        %v3794 = vmul.f32 %v2784, %v3778
        %v3795 = vmul.f32 %v2785, %v3779
        %v3796 = vmul.f32 %v2786, %v3780
        %v3797 = vmul.f32 %v2787, %v3781
        %v3798 = vadd.f32 %v3790, %v3792
        %v3799 = vadd.f32 %v3798, %v3794
        %v3800 = vadd.f32 %v3799, %v3796
        %v3801 = vrot.slane %v3800, 4
        %v3802 = vadd.f32 %v3800, %v3801
        %v3803 = vrot.slane %v3802, 2
        %v3804 = vadd.f32 %v3802, %v3803
        %v3805 = vrot.slane %v3804, 1
        %v3806 = vadd.f32 %v3804, %v3805
        %v3807 = vadd.f32 %v3791, %v3793
        %v3808 = vadd.f32 %v3807, %v3795
        %v3809 = vadd.f32 %v3808, %v3797
        %v3810 = vrot.slane %v3809, 4
        %v3811 = vadd.f32 %v3809, %v3810
        %v3812 = vrot.slane %v3811, 2
        %v3813 = vadd.f32 %v3811, %v3812
        %v3814 = vrot.slane %v3813, 1
        %v3815 = vadd.f32 %v3813, %v3814
        %v3816 = vadd.s32 %v293, 4294967293
        %vm3817 = vcmp.ge.s32.totalorder %v3816, 0
        %vm3818 = vcmp.lt.s32.totalorder %v3816, 16
        %vm3819 = vmand %vm3817, %vm3818
        %v3822 = vrot.slane %v3815, 7
        %v3823 = vsel %vm3405, %v3806, %v3822
        %v3825 = vsel %vm3819, %v3823, 0.0
        %s3826 = sadd.s32 %s3409, 5
        %vm3827 = vcmp.gt.f32.partialorder %v3825, %v3746
        %v3828 = vsel %vm3827, %v3825, %v3746
        %v3829 = vstv %s3826
        %v3830 = vsel %vm3827, %v3829, %v3748
        %3831 = vrot.lane.b32.xlu0 %v3364, 122
        %v3832 = vpop.permute.xlu0 %3831
        %3833 = vrot.lane.b32.xlu0 %v3348, 122
        %v3834 = vpop.permute.xlu0 %3833
        %3835 = vrot.lane.b32.xlu0 %v3368, 122
        %v3836 = vpop.permute.xlu0 %3835
        %3837 = vrot.lane.b32.xlu0 %v3365, 122
        %v3838 = vpop.permute.xlu0 %3837
        %3839 = vrot.lane.b32.xlu0 %v3349, 122
        %v3840 = vpop.permute.xlu0 %3839
        %3841 = vrot.lane.b32.xlu0 %v3369, 122
        %v3842 = vpop.permute.xlu0 %3841
        %3843 = vrot.lane.b32.xlu0 %v3366, 122
        %v3844 = vpop.permute.xlu0 %3843
        %3845 = vrot.lane.b32.xlu0 %v3350, 122
        %v3846 = vpop.permute.xlu0 %3845
        %3847 = vrot.lane.b32.xlu0 %v3370, 122
        %v3848 = vpop.permute.xlu0 %3847
        %3849 = vrot.lane.b32.xlu0 %v3367, 122
        %v3850 = vpop.permute.xlu0 %3849
        %3851 = vrot.lane.b32.xlu0 %v3351, 122
        %v3852 = vpop.permute.xlu0 %3851
        %3853 = vrot.lane.b32.xlu0 %v3371, 122
        %v3854 = vpop.permute.xlu0 %3853
        %vm3855 = vcmask 998400
        %v3856 = vsel %vm3855, %v3832, %v3834
        %v3857 = vsel %vm3855, %v3834, %v3836
        %v3858 = vsel %vm3855, %v3838, %v3840
        %v3859 = vsel %vm3855, %v3840, %v3842
        %v3860 = vsel %vm3855, %v3844, %v3846
        %v3861 = vsel %vm3855, %v3846, %v3848
        %v3862 = vsel %vm3855, %v3850, %v3852
        %v3863 = vsel %vm3855, %v3852, %v3854
        %v3872 = vmul.f32 %v2780, %v3856
        %v3873 = vmul.f32 %v2781, %v3857
        %v3874 = vmul.f32 %v2782, %v3858
        %v3875 = vmul.f32 %v2783, %v3859
        %v3876 = vmul.f32 %v2784, %v3860
        %v3877 = vmul.f32 %v2785, %v3861
        %v3878 = vmul.f32 %v2786, %v3862
        %v3879 = vmul.f32 %v2787, %v3863
        %v3880 = vadd.f32 %v3872, %v3874
        %v3881 = vadd.f32 %v3880, %v3876
        %v3882 = vadd.f32 %v3881, %v3878
        %v3883 = vrot.slane %v3882, 4
        %v3884 = vadd.f32 %v3882, %v3883
        %v3885 = vrot.slane %v3884, 2
        %v3886 = vadd.f32 %v3884, %v3885
        %v3887 = vrot.slane %v3886, 1
        %v3888 = vadd.f32 %v3886, %v3887
        %v3889 = vadd.f32 %v3873, %v3875
        %v3890 = vadd.f32 %v3889, %v3877
        %v3891 = vadd.f32 %v3890, %v3879
        %v3892 = vrot.slane %v3891, 4
        %v3893 = vadd.f32 %v3891, %v3892
        %v3894 = vrot.slane %v3893, 2
        %v3895 = vadd.f32 %v3893, %v3894
        %v3896 = vrot.slane %v3895, 1
        %v3897 = vadd.f32 %v3895, %v3896
        %v3898 = vadd.s32 %v293, 4294967294
        %vm3899 = vcmp.ge.s32.totalorder %v3898, 0
        %vm3900 = vcmp.lt.s32.totalorder %v3898, 16
        %vm3901 = vmand %vm3899, %vm3900
        %v3904 = vrot.slane %v3897, 7
        %v3905 = vsel %vm3405, %v3888, %v3904
        %v3907 = vsel %vm3901, %v3905, 0.0
        %s3908 = sadd.s32 %s3409, 6
        %vm3909 = vcmp.gt.f32.partialorder %v3907, %v3828
        %v3910 = vsel %vm3909, %v3907, %v3828
        %v3911 = vstv %s3908
        %v3912 = vsel %vm3909, %v3911, %v3830
        %3913 = vrot.lane.b32.xlu0 %v3364, 121
        %v3914 = vpop.permute.xlu0 %3913
        %3915 = vrot.lane.b32.xlu0 %v3348, 121
        %v3916 = vpop.permute.xlu0 %3915
        %3917 = vrot.lane.b32.xlu0 %v3368, 121
        %v3918 = vpop.permute.xlu0 %3917
        %3919 = vrot.lane.b32.xlu0 %v3365, 121
        %v3920 = vpop.permute.xlu0 %3919
        %3921 = vrot.lane.b32.xlu0 %v3349, 121
        %v3922 = vpop.permute.xlu0 %3921
        %3923 = vrot.lane.b32.xlu0 %v3369, 121
        %v3924 = vpop.permute.xlu0 %3923
        %3925 = vrot.lane.b32.xlu0 %v3366, 121
        %v3926 = vpop.permute.xlu0 %3925
        %3927 = vrot.lane.b32.xlu0 %v3350, 121
        %v3928 = vpop.permute.xlu0 %3927
        %3929 = vrot.lane.b32.xlu0 %v3370, 121
        %v3930 = vpop.permute.xlu0 %3929
        %3931 = vrot.lane.b32.xlu0 %v3367, 121
        %v3932 = vpop.permute.xlu0 %3931
        %3933 = vrot.lane.b32.xlu0 %v3351, 121
        %v3934 = vpop.permute.xlu0 %3933
        %3935 = vrot.lane.b32.xlu0 %v3371, 121
        %v3936 = vpop.permute.xlu0 %3935
        %vm3937 = vcmask 990208
        %v3938 = vsel %vm3937, %v3914, %v3916
        %v3939 = vsel %vm3937, %v3916, %v3918
        %v3940 = vsel %vm3937, %v3920, %v3922
        %v3941 = vsel %vm3937, %v3922, %v3924
        %v3942 = vsel %vm3937, %v3926, %v3928
        %v3943 = vsel %vm3937, %v3928, %v3930
        %v3944 = vsel %vm3937, %v3932, %v3934
        %v3945 = vsel %vm3937, %v3934, %v3936
        %v3954 = vmul.f32 %v2780, %v3938
        %v3955 = vmul.f32 %v2781, %v3939
        %v3956 = vmul.f32 %v2782, %v3940
        %v3957 = vmul.f32 %v2783, %v3941
        %v3958 = vmul.f32 %v2784, %v3942
        %v3959 = vmul.f32 %v2785, %v3943
        %v3960 = vmul.f32 %v2786, %v3944
        %v3961 = vmul.f32 %v2787, %v3945
        %v3962 = vadd.f32 %v3954, %v3956
        %v3963 = vadd.f32 %v3962, %v3958
        %v3964 = vadd.f32 %v3963, %v3960
        %v3965 = vrot.slane %v3964, 4
        %v3966 = vadd.f32 %v3964, %v3965
        %v3967 = vrot.slane %v3966, 2
        %v3968 = vadd.f32 %v3966, %v3967
        %v3969 = vrot.slane %v3968, 1
        %v3970 = vadd.f32 %v3968, %v3969
        %v3971 = vadd.f32 %v3955, %v3957
        %v3972 = vadd.f32 %v3971, %v3959
        %v3973 = vadd.f32 %v3972, %v3961
        %v3974 = vrot.slane %v3973, 4
        %v3975 = vadd.f32 %v3973, %v3974
        %v3976 = vrot.slane %v3975, 2
        %v3977 = vadd.f32 %v3975, %v3976
        %v3978 = vrot.slane %v3977, 1
        %v3979 = vadd.f32 %v3977, %v3978
        %v3982 = vrot.slane %v3979, 7
        %v3983 = vsel %vm3405, %v3970, %v3982
        %v3985 = vsel %vm476, %v3983, 0.0
        %s3986 = sadd.s32 %s3409, 7
        %vm3987 = vcmp.gt.f32.partialorder %v3985, %v3910
        %v3988 = vsel %vm3987, %v3985, %v3910
        %v3989 = vstv %s3986
        %v3990 = vsel %vm3987, %v3989, %v3912
        %3991 = vrot.lane.b32.xlu0 %v3364, 120
        %v3992 = vpop.permute.xlu0 %3991
        %3993 = vrot.lane.b32.xlu0 %v3348, 120
        %v3994 = vpop.permute.xlu0 %3993
        %3995 = vrot.lane.b32.xlu0 %v3368, 120
        %v3996 = vpop.permute.xlu0 %3995
        %3997 = vrot.lane.b32.xlu0 %v3365, 120
        %v3998 = vpop.permute.xlu0 %3997
        %3999 = vrot.lane.b32.xlu0 %v3349, 120
        %v4000 = vpop.permute.xlu0 %3999
        %4001 = vrot.lane.b32.xlu0 %v3369, 120
        %v4002 = vpop.permute.xlu0 %4001
        %4003 = vrot.lane.b32.xlu0 %v3366, 120
        %v4004 = vpop.permute.xlu0 %4003
        %4005 = vrot.lane.b32.xlu0 %v3350, 120
        %v4006 = vpop.permute.xlu0 %4005
        %4007 = vrot.lane.b32.xlu0 %v3370, 120
        %v4008 = vpop.permute.xlu0 %4007
        %4009 = vrot.lane.b32.xlu0 %v3367, 120
        %v4010 = vpop.permute.xlu0 %4009
        %4011 = vrot.lane.b32.xlu0 %v3351, 120
        %v4012 = vpop.permute.xlu0 %4011
        %4013 = vrot.lane.b32.xlu0 %v3371, 120
        %v4014 = vpop.permute.xlu0 %4013
        %vm4015 = vcmask 982016
        %v4016 = vsel %vm4015, %v3992, %v3994
        %v4017 = vsel %vm4015, %v3994, %v3996
        %v4018 = vsel %vm4015, %v3998, %v4000
        %v4019 = vsel %vm4015, %v4000, %v4002
        %v4020 = vsel %vm4015, %v4004, %v4006
        %v4021 = vsel %vm4015, %v4006, %v4008
        %v4022 = vsel %vm4015, %v4010, %v4012
        %v4023 = vsel %vm4015, %v4012, %v4014
        %v4032 = vmul.f32 %v2780, %v4016
        %v4033 = vmul.f32 %v2781, %v4017
        %v4034 = vmul.f32 %v2782, %v4018
        %v4035 = vmul.f32 %v2783, %v4019
        %v4036 = vmul.f32 %v2784, %v4020
        %v4037 = vmul.f32 %v2785, %v4021
        %v4038 = vmul.f32 %v2786, %v4022
        %v4039 = vmul.f32 %v2787, %v4023
        %v4040 = vadd.f32 %v4032, %v4034
        %v4041 = vadd.f32 %v4040, %v4036
        %v4042 = vadd.f32 %v4041, %v4038
        %v4043 = vrot.slane %v4042, 4
        %v4044 = vadd.f32 %v4042, %v4043
        %v4045 = vrot.slane %v4044, 2
        %v4046 = vadd.f32 %v4044, %v4045
        %v4047 = vrot.slane %v4046, 1
        %v4048 = vadd.f32 %v4046, %v4047
        %v4049 = vadd.f32 %v4033, %v4035
        %v4050 = vadd.f32 %v4049, %v4037
        %v4051 = vadd.f32 %v4050, %v4039
        %v4052 = vrot.slane %v4051, 4
        %v4053 = vadd.f32 %v4051, %v4052
        %v4054 = vrot.slane %v4053, 2
        %v4055 = vadd.f32 %v4053, %v4054
        %v4056 = vrot.slane %v4055, 1
        %v4057 = vadd.f32 %v4055, %v4056
        %vm4058 = vcmp.ge.s32.totalorder %v293, 0
        %vm4059 = vcmp.lt.s32.totalorder %v293, 16
        %vm4060 = vmand %vm4058, %vm4059
        %v4063 = vrot.slane %v4057, 7
        %v4064 = vsel %vm3405, %v4048, %v4063
        %v4066 = vsel %vm4060, %v4064, 0.0
        %s4067 = sadd.s32 %s3409, 8
        %vm4068 = vcmp.gt.f32.partialorder %v4066, %v3988
        %v4069 = vsel %vm4068, %v4066, %v3988
        %v4070 = vstv %s4067
        %v4071 = vsel %vm4068, %v4070, %v3990
        %4072 = vrot.lane.b32.xlu0 %v3364, 119
        %v4073 = vpop.permute.xlu0 %4072
        %4074 = vrot.lane.b32.xlu0 %v3348, 119
        %v4075 = vpop.permute.xlu0 %4074
        %4076 = vrot.lane.b32.xlu0 %v3368, 119
        %v4077 = vpop.permute.xlu0 %4076
        %4078 = vrot.lane.b32.xlu0 %v3365, 119
        %v4079 = vpop.permute.xlu0 %4078
        %4080 = vrot.lane.b32.xlu0 %v3349, 119
        %v4081 = vpop.permute.xlu0 %4080
        %4082 = vrot.lane.b32.xlu0 %v3369, 119
        %v4083 = vpop.permute.xlu0 %4082
        %4084 = vrot.lane.b32.xlu0 %v3366, 119
        %v4085 = vpop.permute.xlu0 %4084
        %4086 = vrot.lane.b32.xlu0 %v3350, 119
        %v4087 = vpop.permute.xlu0 %4086
        %4088 = vrot.lane.b32.xlu0 %v3370, 119
        %v4089 = vpop.permute.xlu0 %4088
        %4090 = vrot.lane.b32.xlu0 %v3367, 119
        %v4091 = vpop.permute.xlu0 %4090
        %4092 = vrot.lane.b32.xlu0 %v3351, 119
        %v4093 = vpop.permute.xlu0 %4092
        %4094 = vrot.lane.b32.xlu0 %v3371, 119
        %v4095 = vpop.permute.xlu0 %4094
        %vm4096 = vcmask 973824
        %v4097 = vsel %vm4096, %v4073, %v4075
        %v4098 = vsel %vm4096, %v4075, %v4077
        %v4099 = vsel %vm4096, %v4079, %v4081
        %v4100 = vsel %vm4096, %v4081, %v4083
        %v4101 = vsel %vm4096, %v4085, %v4087
        %v4102 = vsel %vm4096, %v4087, %v4089
        %v4103 = vsel %vm4096, %v4091, %v4093
        %v4104 = vsel %vm4096, %v4093, %v4095
        %v4113 = vmul.f32 %v2780, %v4097
        %v4114 = vmul.f32 %v2781, %v4098
        %v4115 = vmul.f32 %v2782, %v4099
        %v4116 = vmul.f32 %v2783, %v4100
        %v4117 = vmul.f32 %v2784, %v4101
        %v4118 = vmul.f32 %v2785, %v4102
        %v4119 = vmul.f32 %v2786, %v4103
        %v4120 = vmul.f32 %v2787, %v4104
        %v4121 = vadd.f32 %v4113, %v4115
        %v4122 = vadd.f32 %v4121, %v4117
        %v4123 = vadd.f32 %v4122, %v4119
        %v4124 = vrot.slane %v4123, 4
        %v4125 = vadd.f32 %v4123, %v4124
        %v4126 = vrot.slane %v4125, 2
        %v4127 = vadd.f32 %v4125, %v4126
        %v4128 = vrot.slane %v4127, 1
        %v4129 = vadd.f32 %v4127, %v4128
        %v4130 = vadd.f32 %v4114, %v4116
        %v4131 = vadd.f32 %v4130, %v4118
        %v4132 = vadd.f32 %v4131, %v4120
        %v4133 = vrot.slane %v4132, 4
        %v4134 = vadd.f32 %v4132, %v4133
        %v4135 = vrot.slane %v4134, 2
        %v4136 = vadd.f32 %v4134, %v4135
        %v4137 = vrot.slane %v4136, 1
        %v4138 = vadd.f32 %v4136, %v4137
        %v4141 = vrot.slane %v4138, 7
        %v4142 = vsel %vm3405, %v4129, %v4141
        %v4144 = vsel %vm797, %v4142, 0.0
        %s4145 = sadd.s32 %s3409, 9
        %vm4146 = vcmp.gt.f32.partialorder %v4144, %v4069
        %v4147 = vsel %vm4146, %v4144, %v4069
        %v4148 = vstv %s4145
        %v4149 = vsel %vm4146, %v4148, %v4071
        %4150 = vrot.lane.b32.xlu0 %v3364, 118
        %v4151 = vpop.permute.xlu0 %4150
        %4152 = vrot.lane.b32.xlu0 %v3348, 118
        %v4153 = vpop.permute.xlu0 %4152
        %4154 = vrot.lane.b32.xlu0 %v3368, 118
        %v4155 = vpop.permute.xlu0 %4154
        %4156 = vrot.lane.b32.xlu0 %v3365, 118
        %v4157 = vpop.permute.xlu0 %4156
        %4158 = vrot.lane.b32.xlu0 %v3349, 118
        %v4159 = vpop.permute.xlu0 %4158
        %4160 = vrot.lane.b32.xlu0 %v3369, 118
        %v4161 = vpop.permute.xlu0 %4160
        %4162 = vrot.lane.b32.xlu0 %v3366, 118
        %v4163 = vpop.permute.xlu0 %4162
        %4164 = vrot.lane.b32.xlu0 %v3350, 118
        %v4165 = vpop.permute.xlu0 %4164
        %4166 = vrot.lane.b32.xlu0 %v3370, 118
        %v4167 = vpop.permute.xlu0 %4166
        %4168 = vrot.lane.b32.xlu0 %v3367, 118
        %v4169 = vpop.permute.xlu0 %4168
        %4170 = vrot.lane.b32.xlu0 %v3351, 118
        %v4171 = vpop.permute.xlu0 %4170
        %4172 = vrot.lane.b32.xlu0 %v3371, 118
        %v4173 = vpop.permute.xlu0 %4172
        %vm4174 = vcmask 965632
        %v4175 = vsel %vm4174, %v4151, %v4153
        %v4176 = vsel %vm4174, %v4153, %v4155
        %v4177 = vsel %vm4174, %v4157, %v4159
        %v4178 = vsel %vm4174, %v4159, %v4161
        %v4179 = vsel %vm4174, %v4163, %v4165
        %v4180 = vsel %vm4174, %v4165, %v4167
        %v4181 = vsel %vm4174, %v4169, %v4171
        %v4182 = vsel %vm4174, %v4171, %v4173
        %v4191 = vmul.f32 %v2780, %v4175
        %v4192 = vmul.f32 %v2781, %v4176
        %v4193 = vmul.f32 %v2782, %v4177
        %v4194 = vmul.f32 %v2783, %v4178
        %v4195 = vmul.f32 %v2784, %v4179
        %v4196 = vmul.f32 %v2785, %v4180
        %v4197 = vmul.f32 %v2786, %v4181
        %v4198 = vmul.f32 %v2787, %v4182
        %v4199 = vadd.f32 %v4191, %v4193
        %v4200 = vadd.f32 %v4199, %v4195
        %v4201 = vadd.f32 %v4200, %v4197
        %v4202 = vrot.slane %v4201, 4
        %v4203 = vadd.f32 %v4201, %v4202
        %v4204 = vrot.slane %v4203, 2
        %v4205 = vadd.f32 %v4203, %v4204
        %v4206 = vrot.slane %v4205, 1
        %v4207 = vadd.f32 %v4205, %v4206
        %v4208 = vadd.f32 %v4192, %v4194
        %v4209 = vadd.f32 %v4208, %v4196
        %v4210 = vadd.f32 %v4209, %v4198
        %v4211 = vrot.slane %v4210, 4
        %v4212 = vadd.f32 %v4210, %v4211
        %v4213 = vrot.slane %v4212, 2
        %v4214 = vadd.f32 %v4212, %v4213
        %v4215 = vrot.slane %v4214, 1
        %v4216 = vadd.f32 %v4214, %v4215
        %v4217 = vadd.s32 %v293, 2
        %vm4218 = vcmp.ge.s32.totalorder %v4217, 0
        %vm4219 = vcmp.lt.s32.totalorder %v4217, 16
        %vm4220 = vmand %vm4218, %vm4219
        %v4223 = vrot.slane %v4216, 7
        %v4224 = vsel %vm3405, %v4207, %v4223
        %v4226 = vsel %vm4220, %v4224, 0.0
        %s4227 = sadd.s32 %s3409, 10
        %vm4228 = vcmp.gt.f32.partialorder %v4226, %v4147
        %v4229 = vsel %vm4228, %v4226, %v4147
        %v4230 = vstv %s4227
        %v4231 = vsel %vm4228, %v4230, %v4149
        %4232 = vrot.lane.b32.xlu0 %v3364, 117
        %v4233 = vpop.permute.xlu0 %4232
        %4234 = vrot.lane.b32.xlu0 %v3348, 117
        %v4235 = vpop.permute.xlu0 %4234
        %4236 = vrot.lane.b32.xlu0 %v3368, 117
        %v4237 = vpop.permute.xlu0 %4236
        %4238 = vrot.lane.b32.xlu0 %v3365, 117
        %v4239 = vpop.permute.xlu0 %4238
        %4240 = vrot.lane.b32.xlu0 %v3349, 117
        %v4241 = vpop.permute.xlu0 %4240
        %4242 = vrot.lane.b32.xlu0 %v3369, 117
        %v4243 = vpop.permute.xlu0 %4242
        %4244 = vrot.lane.b32.xlu0 %v3366, 117
        %v4245 = vpop.permute.xlu0 %4244
        %4246 = vrot.lane.b32.xlu0 %v3350, 117
        %v4247 = vpop.permute.xlu0 %4246
        %4248 = vrot.lane.b32.xlu0 %v3370, 117
        %v4249 = vpop.permute.xlu0 %4248
        %4250 = vrot.lane.b32.xlu0 %v3367, 117
        %v4251 = vpop.permute.xlu0 %4250
        %4252 = vrot.lane.b32.xlu0 %v3351, 117
        %v4253 = vpop.permute.xlu0 %4252
        %4254 = vrot.lane.b32.xlu0 %v3371, 117
        %v4255 = vpop.permute.xlu0 %4254
        %vm4256 = vcmask 957440
        %v4257 = vsel %vm4256, %v4233, %v4235
        %v4258 = vsel %vm4256, %v4235, %v4237
        %v4259 = vsel %vm4256, %v4239, %v4241
        %v4260 = vsel %vm4256, %v4241, %v4243
        %v4261 = vsel %vm4256, %v4245, %v4247
        %v4262 = vsel %vm4256, %v4247, %v4249
        %v4263 = vsel %vm4256, %v4251, %v4253
        %v4264 = vsel %vm4256, %v4253, %v4255
        %v4273 = vmul.f32 %v2780, %v4257
        %v4274 = vmul.f32 %v2781, %v4258
        %v4275 = vmul.f32 %v2782, %v4259
        %v4276 = vmul.f32 %v2783, %v4260
        %v4277 = vmul.f32 %v2784, %v4261
        %v4278 = vmul.f32 %v2785, %v4262
        %v4279 = vmul.f32 %v2786, %v4263
        %v4280 = vmul.f32 %v2787, %v4264
        %v4281 = vadd.f32 %v4273, %v4275
        %v4282 = vadd.f32 %v4281, %v4277
        %v4283 = vadd.f32 %v4282, %v4279
        %v4284 = vrot.slane %v4283, 4
        %v4285 = vadd.f32 %v4283, %v4284
        %v4286 = vrot.slane %v4285, 2
        %v4287 = vadd.f32 %v4285, %v4286
        %v4288 = vrot.slane %v4287, 1
        %v4289 = vadd.f32 %v4287, %v4288
        %v4290 = vadd.f32 %v4274, %v4276
        %v4291 = vadd.f32 %v4290, %v4278
        %v4292 = vadd.f32 %v4291, %v4280
        %v4293 = vrot.slane %v4292, 4
        %v4294 = vadd.f32 %v4292, %v4293
        %v4295 = vrot.slane %v4294, 2
        %v4296 = vadd.f32 %v4294, %v4295
        %v4297 = vrot.slane %v4296, 1
        %v4298 = vadd.f32 %v4296, %v4297
        %v4299 = vadd.s32 %v293, 3
        %vm4300 = vcmp.ge.s32.totalorder %v4299, 0
        %vm4301 = vcmp.lt.s32.totalorder %v4299, 16
        %vm4302 = vmand %vm4300, %vm4301
        %v4305 = vrot.slane %v4298, 7
        %v4306 = vsel %vm3405, %v4289, %v4305
        %v4308 = vsel %vm4302, %v4306, 0.0
        %s4309 = sadd.s32 %s3409, 11
        %vm4310 = vcmp.gt.f32.partialorder %v4308, %v4229
        %v4311 = vsel %vm4310, %v4308, %v4229
        %v4312 = vstv %s4309
        %v4313 = vsel %vm4310, %v4312, %v4231
        %4314 = vrot.lane.b32.xlu0 %v3364, 116
        %v4315 = vpop.permute.xlu0 %4314
        %4316 = vrot.lane.b32.xlu0 %v3348, 116
        %v4317 = vpop.permute.xlu0 %4316
        %4318 = vrot.lane.b32.xlu0 %v3368, 116
        %v4319 = vpop.permute.xlu0 %4318
        %4320 = vrot.lane.b32.xlu0 %v3365, 116
        %v4321 = vpop.permute.xlu0 %4320
        %4322 = vrot.lane.b32.xlu0 %v3349, 116
        %v4323 = vpop.permute.xlu0 %4322
        %4324 = vrot.lane.b32.xlu0 %v3369, 116
        %v4325 = vpop.permute.xlu0 %4324
        %4326 = vrot.lane.b32.xlu0 %v3366, 116
        %v4327 = vpop.permute.xlu0 %4326
        %4328 = vrot.lane.b32.xlu0 %v3350, 116
        %v4329 = vpop.permute.xlu0 %4328
        %4330 = vrot.lane.b32.xlu0 %v3370, 116
        %v4331 = vpop.permute.xlu0 %4330
        %4332 = vrot.lane.b32.xlu0 %v3367, 116
        %v4333 = vpop.permute.xlu0 %4332
        %4334 = vrot.lane.b32.xlu0 %v3351, 116
        %v4335 = vpop.permute.xlu0 %4334
        %4336 = vrot.lane.b32.xlu0 %v3371, 116
        %v4337 = vpop.permute.xlu0 %4336
        %vm4338 = vcmask 949248
        %v4339 = vsel %vm4338, %v4315, %v4317
        %v4340 = vsel %vm4338, %v4317, %v4319
        %v4341 = vsel %vm4338, %v4321, %v4323
        %v4342 = vsel %vm4338, %v4323, %v4325
        %v4343 = vsel %vm4338, %v4327, %v4329
        %v4344 = vsel %vm4338, %v4329, %v4331
        %v4345 = vsel %vm4338, %v4333, %v4335
        %v4346 = vsel %vm4338, %v4335, %v4337
        %v4355 = vmul.f32 %v2780, %v4339
        %v4356 = vmul.f32 %v2781, %v4340
        %v4357 = vmul.f32 %v2782, %v4341
        %v4358 = vmul.f32 %v2783, %v4342
        %v4359 = vmul.f32 %v2784, %v4343
        %v4360 = vmul.f32 %v2785, %v4344
        %v4361 = vmul.f32 %v2786, %v4345
        %v4362 = vmul.f32 %v2787, %v4346
        %v4363 = vadd.f32 %v4355, %v4357
        %v4364 = vadd.f32 %v4363, %v4359
        %v4365 = vadd.f32 %v4364, %v4361
        %v4366 = vrot.slane %v4365, 4
        %v4367 = vadd.f32 %v4365, %v4366
        %v4368 = vrot.slane %v4367, 2
        %v4369 = vadd.f32 %v4367, %v4368
        %v4370 = vrot.slane %v4369, 1
        %v4371 = vadd.f32 %v4369, %v4370
        %v4372 = vadd.f32 %v4356, %v4358
        %v4373 = vadd.f32 %v4372, %v4360
        %v4374 = vadd.f32 %v4373, %v4362
        %v4375 = vrot.slane %v4374, 4
        %v4376 = vadd.f32 %v4374, %v4375
        %v4377 = vrot.slane %v4376, 2
        %v4378 = vadd.f32 %v4376, %v4377
        %v4379 = vrot.slane %v4378, 1
        %v4380 = vadd.f32 %v4378, %v4379
        %v4381 = vadd.s32 %v293, 4
        %vm4382 = vcmp.ge.s32.totalorder %v4381, 0
        %vm4383 = vcmp.lt.s32.totalorder %v4381, 16
        %vm4384 = vmand %vm4382, %vm4383
        %v4387 = vrot.slane %v4380, 7
        %v4388 = vsel %vm3405, %v4371, %v4387
        %v4390 = vsel %vm4384, %v4388, 0.0
        %s4391 = sadd.s32 %s3409, 12
        %vm4392 = vcmp.gt.f32.partialorder %v4390, %v4311
        %v4393 = vsel %vm4392, %v4390, %v4311
        %v4394 = vstv %s4391
        %v4395 = vsel %vm4392, %v4394, %v4313
        %4396 = vrot.lane.b32.xlu0 %v3364, 115
        %v4397 = vpop.permute.xlu0 %4396
        %4398 = vrot.lane.b32.xlu0 %v3348, 115
        %v4399 = vpop.permute.xlu0 %4398
        %4400 = vrot.lane.b32.xlu0 %v3368, 115
        %v4401 = vpop.permute.xlu0 %4400
        %4402 = vrot.lane.b32.xlu0 %v3365, 115
        %v4403 = vpop.permute.xlu0 %4402
        %4404 = vrot.lane.b32.xlu0 %v3349, 115
        %v4405 = vpop.permute.xlu0 %4404
        %4406 = vrot.lane.b32.xlu0 %v3369, 115
        %v4407 = vpop.permute.xlu0 %4406
        %4408 = vrot.lane.b32.xlu0 %v3366, 115
        %v4409 = vpop.permute.xlu0 %4408
        %4410 = vrot.lane.b32.xlu0 %v3350, 115
        %v4411 = vpop.permute.xlu0 %4410
        %4412 = vrot.lane.b32.xlu0 %v3370, 115
        %v4413 = vpop.permute.xlu0 %4412
        %4414 = vrot.lane.b32.xlu0 %v3367, 115
        %v4415 = vpop.permute.xlu0 %4414
        %4416 = vrot.lane.b32.xlu0 %v3351, 115
        %v4417 = vpop.permute.xlu0 %4416
        %4418 = vrot.lane.b32.xlu0 %v3371, 115
        %v4419 = vpop.permute.xlu0 %4418
        %vm4420 = vcmask 941056
        %v4421 = vsel %vm4420, %v4397, %v4399
        %v4422 = vsel %vm4420, %v4399, %v4401
        %v4423 = vsel %vm4420, %v4403, %v4405
        %v4424 = vsel %vm4420, %v4405, %v4407
        %v4425 = vsel %vm4420, %v4409, %v4411
        %v4426 = vsel %vm4420, %v4411, %v4413
        %v4427 = vsel %vm4420, %v4415, %v4417
        %v4428 = vsel %vm4420, %v4417, %v4419
        %v4437 = vmul.f32 %v2780, %v4421
        %v4438 = vmul.f32 %v2781, %v4422
        %v4439 = vmul.f32 %v2782, %v4423
        %v4440 = vmul.f32 %v2783, %v4424
        %v4441 = vmul.f32 %v2784, %v4425
        %v4442 = vmul.f32 %v2785, %v4426
        %v4443 = vmul.f32 %v2786, %v4427
        %v4444 = vmul.f32 %v2787, %v4428
        %v4445 = vadd.f32 %v4437, %v4439
        %v4446 = vadd.f32 %v4445, %v4441
        %v4447 = vadd.f32 %v4446, %v4443
        %v4448 = vrot.slane %v4447, 4
        %v4449 = vadd.f32 %v4447, %v4448
        %v4450 = vrot.slane %v4449, 2
        %v4451 = vadd.f32 %v4449, %v4450
        %v4452 = vrot.slane %v4451, 1
        %v4453 = vadd.f32 %v4451, %v4452
        %v4454 = vadd.f32 %v4438, %v4440
        %v4455 = vadd.f32 %v4454, %v4442
        %v4456 = vadd.f32 %v4455, %v4444
        %v4457 = vrot.slane %v4456, 4
        %v4458 = vadd.f32 %v4456, %v4457
        %v4459 = vrot.slane %v4458, 2
        %v4460 = vadd.f32 %v4458, %v4459
        %v4461 = vrot.slane %v4460, 1
        %v4462 = vadd.f32 %v4460, %v4461
        %v4463 = vadd.s32 %v293, 5
        %vm4464 = vcmp.ge.s32.totalorder %v4463, 0
        %vm4465 = vcmp.lt.s32.totalorder %v4463, 16
        %vm4466 = vmand %vm4464, %vm4465
        %v4469 = vrot.slane %v4462, 7
        %v4470 = vsel %vm3405, %v4453, %v4469
        %v4472 = vsel %vm4466, %v4470, 0.0
        %s4473 = sadd.s32 %s3409, 13
        %vm4474 = vcmp.gt.f32.partialorder %v4472, %v4393
        %v4475 = vsel %vm4474, %v4472, %v4393
        %v4476 = vstv %s4473
        %v4477 = vsel %vm4474, %v4476, %v4395
        %4478 = vrot.lane.b32.xlu0 %v3364, 114
        %v4479 = vpop.permute.xlu0 %4478
        %4480 = vrot.lane.b32.xlu0 %v3348, 114
        %v4481 = vpop.permute.xlu0 %4480
        %4482 = vrot.lane.b32.xlu0 %v3368, 114
        %v4483 = vpop.permute.xlu0 %4482
        %4484 = vrot.lane.b32.xlu0 %v3365, 114
        %v4485 = vpop.permute.xlu0 %4484
        %4486 = vrot.lane.b32.xlu0 %v3349, 114
        %v4487 = vpop.permute.xlu0 %4486
        %4488 = vrot.lane.b32.xlu0 %v3369, 114
        %v4489 = vpop.permute.xlu0 %4488
        %4490 = vrot.lane.b32.xlu0 %v3366, 114
        %v4491 = vpop.permute.xlu0 %4490
        %4492 = vrot.lane.b32.xlu0 %v3350, 114
        %v4493 = vpop.permute.xlu0 %4492
        %4494 = vrot.lane.b32.xlu0 %v3370, 114
        %v4495 = vpop.permute.xlu0 %4494
        %4496 = vrot.lane.b32.xlu0 %v3367, 114
        %v4497 = vpop.permute.xlu0 %4496
        %4498 = vrot.lane.b32.xlu0 %v3351, 114
        %v4499 = vpop.permute.xlu0 %4498
        %4500 = vrot.lane.b32.xlu0 %v3371, 114
        %v4501 = vpop.permute.xlu0 %4500
        %vm4502 = vcmask 932864
        %v4503 = vsel %vm4502, %v4479, %v4481
        %v4504 = vsel %vm4502, %v4481, %v4483
        %v4505 = vsel %vm4502, %v4485, %v4487
        %v4506 = vsel %vm4502, %v4487, %v4489
        %v4507 = vsel %vm4502, %v4491, %v4493
        %v4508 = vsel %vm4502, %v4493, %v4495
        %v4509 = vsel %vm4502, %v4497, %v4499
        %v4510 = vsel %vm4502, %v4499, %v4501
        %v4519 = vmul.f32 %v2780, %v4503
        %v4520 = vmul.f32 %v2781, %v4504
        %v4521 = vmul.f32 %v2782, %v4505
        %v4522 = vmul.f32 %v2783, %v4506
        %v4523 = vmul.f32 %v2784, %v4507
        %v4524 = vmul.f32 %v2785, %v4508
        %v4525 = vmul.f32 %v2786, %v4509
        %v4526 = vmul.f32 %v2787, %v4510
        %v4527 = vadd.f32 %v4519, %v4521
        %v4528 = vadd.f32 %v4527, %v4523
        %v4529 = vadd.f32 %v4528, %v4525
        %v4530 = vrot.slane %v4529, 4
        %v4531 = vadd.f32 %v4529, %v4530
        %v4532 = vrot.slane %v4531, 2
        %v4533 = vadd.f32 %v4531, %v4532
        %v4534 = vrot.slane %v4533, 1
        %v4535 = vadd.f32 %v4533, %v4534
        %v4536 = vadd.f32 %v4520, %v4522
        %v4537 = vadd.f32 %v4536, %v4524
        %v4538 = vadd.f32 %v4537, %v4526
        %v4539 = vrot.slane %v4538, 4
        %v4540 = vadd.f32 %v4538, %v4539
        %v4541 = vrot.slane %v4540, 2
        %v4542 = vadd.f32 %v4540, %v4541
        %v4543 = vrot.slane %v4542, 1
        %v4544 = vadd.f32 %v4542, %v4543
        %v4545 = vadd.s32 %v293, 6
        %vm4546 = vcmp.ge.s32.totalorder %v4545, 0
        %vm4547 = vcmp.lt.s32.totalorder %v4545, 16
        %vm4548 = vmand %vm4546, %vm4547
        %v4551 = vrot.slane %v4544, 7
        %v4552 = vsel %vm3405, %v4535, %v4551
        %v4554 = vsel %vm4548, %v4552, 0.0
        %s4555 = sadd.s32 %s3409, 14
        %vm4556 = vcmp.gt.f32.partialorder %v4554, %v4475
        %v4557 = vsel %vm4556, %v4554, %v4475
        %v4558 = vstv %s4555
        %v4559 = vsel %vm4556, %v4558, %v4477
        %4560 = vrot.lane.b32.xlu0 %v3364, 113
        %v4561 = vpop.permute.xlu0 %4560
        %4562 = vrot.lane.b32.xlu0 %v3348, 113
        %v4563 = vpop.permute.xlu0 %4562
        %4564 = vrot.lane.b32.xlu0 %v3368, 113
        %v4565 = vpop.permute.xlu0 %4564
        %4566 = vrot.lane.b32.xlu0 %v3365, 113
        %v4567 = vpop.permute.xlu0 %4566
        %4568 = vrot.lane.b32.xlu0 %v3349, 113
        %v4569 = vpop.permute.xlu0 %4568
        %4570 = vrot.lane.b32.xlu0 %v3369, 113
        %v4571 = vpop.permute.xlu0 %4570
        %4572 = vrot.lane.b32.xlu0 %v3366, 113
        %v4573 = vpop.permute.xlu0 %4572
        %4574 = vrot.lane.b32.xlu0 %v3350, 113
        %v4575 = vpop.permute.xlu0 %4574
        %4576 = vrot.lane.b32.xlu0 %v3370, 113
        %v4577 = vpop.permute.xlu0 %4576
        %4578 = vrot.lane.b32.xlu0 %v3367, 113
        %v4579 = vpop.permute.xlu0 %4578
        %4580 = vrot.lane.b32.xlu0 %v3351, 113
        %v4581 = vpop.permute.xlu0 %4580
        %4582 = vrot.lane.b32.xlu0 %v3371, 113
        %v4583 = vpop.permute.xlu0 %4582
        %v4584 = vsel %vm1393, %v4561, %v4563
        %v4585 = vsel %vm1393, %v4563, %v4565
        %v4586 = vsel %vm1393, %v4567, %v4569
        %v4587 = vsel %vm1393, %v4569, %v4571
        %v4588 = vsel %vm1393, %v4573, %v4575
        %v4589 = vsel %vm1393, %v4575, %v4577
        %v4590 = vsel %vm1393, %v4579, %v4581
        %v4591 = vsel %vm1393, %v4581, %v4583
        %v4600 = vmul.f32 %v2780, %v4584
        %v4601 = vmul.f32 %v2781, %v4585
        %v4602 = vmul.f32 %v2782, %v4586
        %v4603 = vmul.f32 %v2783, %v4587
        %v4604 = vmul.f32 %v2784, %v4588
        %v4605 = vmul.f32 %v2785, %v4589
        %v4606 = vmul.f32 %v2786, %v4590
        %v4607 = vmul.f32 %v2787, %v4591
        %v4608 = vadd.f32 %v4600, %v4602
        %v4609 = vadd.f32 %v4608, %v4604
        %v4610 = vadd.f32 %v4609, %v4606
        %v4611 = vrot.slane %v4610, 4
        %v4612 = vadd.f32 %v4610, %v4611
        %v4613 = vrot.slane %v4612, 2
        %v4614 = vadd.f32 %v4612, %v4613
        %v4615 = vrot.slane %v4614, 1
        %v4616 = vadd.f32 %v4614, %v4615
        %v4617 = vadd.f32 %v4601, %v4603
        %v4618 = vadd.f32 %v4617, %v4605
        %v4619 = vadd.f32 %v4618, %v4607
        %v4620 = vrot.slane %v4619, 4
        %v4621 = vadd.f32 %v4619, %v4620
        %v4622 = vrot.slane %v4621, 2
        %v4623 = vadd.f32 %v4621, %v4622
        %v4624 = vrot.slane %v4623, 1
        %v4625 = vadd.f32 %v4623, %v4624
        %v4626 = vadd.s32 %v293, 7
        %vm4627 = vcmp.ge.s32.totalorder %v4626, 0
        %vm4628 = vcmp.lt.s32.totalorder %v4626, 16
        %vm4629 = vmand %vm4627, %vm4628
        %v4632 = vrot.slane %v4625, 7
        %v4633 = vsel %vm3405, %v4616, %v4632
        %v4635 = vsel %vm4629, %v4633, 0.0
        %s4636 = sadd.s32 %s3409, 15
        %vm4637 = vcmp.gt.f32.partialorder %v4635, %v4557
        %v4638 = vsel %vm4637, %v4635, %v4557
        %v4639 = vstv %s4636
        %v4640 = vsel %vm4637, %v4639, %v4559
        %4641 = vrot.lane.b32.xlu0 %v3364, 112
        %v4642 = vpop.permute.xlu0 %4641
        %4643 = vrot.lane.b32.xlu0 %v3348, 112
        %v4644 = vpop.permute.xlu0 %4643
        %4645 = vrot.lane.b32.xlu0 %v3368, 112
        %v4646 = vpop.permute.xlu0 %4645
        %4647 = vrot.lane.b32.xlu0 %v3365, 112
        %v4648 = vpop.permute.xlu0 %4647
        %4649 = vrot.lane.b32.xlu0 %v3349, 112
        %v4650 = vpop.permute.xlu0 %4649
        %4651 = vrot.lane.b32.xlu0 %v3369, 112
        %v4652 = vpop.permute.xlu0 %4651
        %4653 = vrot.lane.b32.xlu0 %v3366, 112
        %v4654 = vpop.permute.xlu0 %4653
        %4655 = vrot.lane.b32.xlu0 %v3350, 112
        %v4656 = vpop.permute.xlu0 %4655
        %4657 = vrot.lane.b32.xlu0 %v3370, 112
        %v4658 = vpop.permute.xlu0 %4657
        %4659 = vrot.lane.b32.xlu0 %v3367, 112
        %v4660 = vpop.permute.xlu0 %4659
        %4661 = vrot.lane.b32.xlu0 %v3351, 112
        %v4662 = vpop.permute.xlu0 %4661
        %4663 = vrot.lane.b32.xlu0 %v3371, 112
        %v4664 = vpop.permute.xlu0 %4663
        %v4665 = vsel %vm1557, %v4642, %v4644
        %v4666 = vsel %vm1557, %v4644, %v4646
        %v4667 = vsel %vm1557, %v4648, %v4650
        %v4668 = vsel %vm1557, %v4650, %v4652
        %v4669 = vsel %vm1557, %v4654, %v4656
        %v4670 = vsel %vm1557, %v4656, %v4658
        %v4671 = vsel %vm1557, %v4660, %v4662
        %v4672 = vsel %vm1557, %v4662, %v4664
        %v4681 = vmul.f32 %v2780, %v4665
        %v4682 = vmul.f32 %v2781, %v4666
        %v4683 = vmul.f32 %v2782, %v4667
        %v4684 = vmul.f32 %v2783, %v4668
        %v4685 = vmul.f32 %v2784, %v4669
        %v4686 = vmul.f32 %v2785, %v4670
        %v4687 = vmul.f32 %v2786, %v4671
        %v4688 = vmul.f32 %v2787, %v4672
        %v4689 = vadd.f32 %v4681, %v4683
        %v4690 = vadd.f32 %v4689, %v4685
        %v4691 = vadd.f32 %v4690, %v4687
        %v4692 = vrot.slane %v4691, 4
        %v4693 = vadd.f32 %v4691, %v4692
        %v4694 = vrot.slane %v4693, 2
        %v4695 = vadd.f32 %v4693, %v4694
        %v4696 = vrot.slane %v4695, 1
        %v4697 = vadd.f32 %v4695, %v4696
        %v4698 = vadd.f32 %v4682, %v4684
        %v4699 = vadd.f32 %v4698, %v4686
        %v4700 = vadd.f32 %v4699, %v4688
        %v4701 = vrot.slane %v4700, 4
        %v4702 = vadd.f32 %v4700, %v4701
        %v4703 = vrot.slane %v4702, 2
        %v4704 = vadd.f32 %v4702, %v4703
        %v4705 = vrot.slane %v4704, 1
        %v4706 = vadd.f32 %v4704, %v4705
        %v4707 = vadd.s32 %v293, 8
        %vm4708 = vcmp.ge.s32.totalorder %v4707, 0
        %vm4709 = vcmp.lt.s32.totalorder %v4707, 16
        %vm4710 = vmand %vm4708, %vm4709
        %v4713 = vrot.slane %v4706, 7
        %v4714 = vsel %vm3405, %v4697, %v4713
        %v4716 = vsel %vm4710, %v4714, 0.0
        %s4717 = sadd.s32 %s3409, 16
        %vm4718 = vcmp.gt.f32.partialorder %v4716, %v4638
        %v4719 = vsel %vm4718, %v4716, %v4638
        %v4720 = vstv %s4717
        %v4721 = vsel %vm4718, %v4720, %v4640
        %v4723 = vperm.slane %v3408, 0
        %v4724 = vperm.slane %v3408, 1
        %v4728 = vperm.slane %v3497, 0
        %v4729 = vperm.slane %v3497, 1
        %v4733 = vperm.slane %v3579, 0
        %v4734 = vperm.slane %v3579, 1
        %v4738 = vperm.slane %v3661, 0
        %v4739 = vperm.slane %v3661, 1
        %v4743 = vperm.slane %v3743, 0
        %v4744 = vperm.slane %v3743, 1
        %v4748 = vperm.slane %v3825, 0
        %v4749 = vperm.slane %v3825, 1
        %v4753 = vperm.slane %v3907, 0
        %v4754 = vperm.slane %v3907, 1
        %v4758 = vperm.slane %v3985, 0
        %v4759 = vperm.slane %v3985, 1
        %v4763 = vperm.slane %v4066, 0
        %v4764 = vperm.slane %v4066, 1
        %v4768 = vperm.slane %v4144, 0
        %v4769 = vperm.slane %v4144, 1
        %v4773 = vperm.slane %v4226, 0
        %v4774 = vperm.slane %v4226, 1
        %v4778 = vperm.slane %v4308, 0
        %v4779 = vperm.slane %v4308, 1
        %v4783 = vperm.slane %v4390, 0
        %v4784 = vperm.slane %v4390, 1
        %v4788 = vperm.slane %v4472, 0
        %v4789 = vperm.slane %v4472, 1
        %v4793 = vperm.slane %v4554, 0
        %v4794 = vperm.slane %v4554, 1
        %v4798 = vperm.slane %v4635, 0
        %v4799 = vperm.slane %v4635, 1
        %v4802 = vsel %vm3405, %v4723, %v4728
        %v4803 = vsel %vm3405, %v4724, %v4729
        %vm4804 = vcmask 1041408
        %v4805 = vsel %vm4804, %v4802, %v4733
        %v4806 = vsel %vm4804, %v4803, %v4734
        %vm4807 = vcmask 1042432
        %v4808 = vsel %vm4807, %v4805, %v4738
        %v4809 = vsel %vm4807, %v4806, %v4739
        %vm4810 = vcmask 1043456
        %v4811 = vsel %vm4810, %v4808, %v4743
        %v4812 = vsel %vm4810, %v4809, %v4744
        %vm4813 = vcmask 1044480
        %v4814 = vsel %vm4813, %v4811, %v4748
        %v4815 = vsel %vm4813, %v4812, %v4749
        %vm4816 = vcmask 1045504
        %v4817 = vsel %vm4816, %v4814, %v4753
        %v4818 = vsel %vm4816, %v4815, %v4754
        %vm4819 = vcmask 1046528
        %v4820 = vsel %vm4819, %v4817, %v4758
        %v4821 = vsel %vm4819, %v4818, %v4759
        %v4822 = vsel %vm3405, %v4763, %v4768
        %v4823 = vsel %vm3405, %v4764, %v4769
        %v4824 = vsel %vm4804, %v4822, %v4773
        %v4825 = vsel %vm4804, %v4823, %v4774
        %v4826 = vsel %vm4807, %v4824, %v4778
        %v4827 = vsel %vm4807, %v4825, %v4779
        %v4828 = vsel %vm4810, %v4826, %v4783
        %v4829 = vsel %vm4810, %v4827, %v4784
        %v4830 = vsel %vm4813, %v4828, %v4788
        %v4831 = vsel %vm4813, %v4829, %v4789
        %v4832 = vsel %vm4816, %v4830, %v4793
        %v4833 = vsel %vm4816, %v4831, %v4794
        %v4834 = vsel %vm4819, %v4832, %v4798
        %v4835 = vsel %vm4819, %v4833, %v4799
        %v4837 = vperm.slane %v4716, 0
        %v4838 = vperm.slane %v4716, 1
        %s4841 = smul.u32 %s3305, 6
        %s4842 = smul.addr %s4841, 8
        %s4843 = scalar_lea.vmem %s284, %s4842
        %4844 = vst [vmem:[%s4843] sm:$0xff] %v4820
        %4845 = vst [vmem:[%s4843 + $0x8] sm:$0xff] %v4821
        %4846 = vst [vmem:[%s4843 + $0x10] sm:$0xff] %v4834
        %4847 = vst [vmem:[%s4843 + $0x18] sm:$0xff] %v4835
        %4848 = vst [vmem:[%s4843 + $0x20] sm:$0x1] %v4837
        %4849 = vst [vmem:[%s4843 + $0x28] sm:$0x1] %v4838
      $region41: #{multiscale_attn_forward.1} parent=35 // loop_footer
        %s3309 = sadd.s32 1, %s3305
      $region42: #{multiscale_attn_forward.1} parent=35 // loop_footer_branch
        %3304 = sbr.rel target = $region38
      $region43: #{multiscale_attn_forward.1} parent=35 // loop_exit
        _
      %v4850 = vlaneseq
      %vm4851 = vcmp.ge.s32.totalorder %v4850, 0
      %vm4852 = vcmp.lt.s32.totalorder %v4850, 256
      %vm4853 = vmand %vm4851, %vm4852
      %4854 = vst.msk [vmem:[%s288] sm:$0x3] %vm4853, %v3310
      %4855 = vst.msk [vmem:[%s292] sm:$0x3] %vm4853, %v3311
      %p4856 = scmp.lt.s32.totalorder %s18, 1
      %s4857 = scalar_select %p4856, %s18, 1
      %s4858 = smul.addr %s4857, 102
      %s4859 = smul.addr %s4858, 8
      %s4860 = scalar_lea.vmem %s4, %s4859
      %p4861 = scmp.lt.s32.totalorder %s18, 1
      %s4862 = scalar_select %p4861, %s18, 1
      %s4863 = smul.addr %s4862, 2
      %s4864 = scalar_lea.vmem %s5, %s4863
      %p4865 = scmp.lt.s32.totalorder %s18, 1
      %s4866 = scalar_select %p4865, %s18, 1
      %s4867 = smul.addr %s4866, 2
      %s4868 = scalar_lea.vmem %s6, %s4867
      // Predicated region
      $region44: #{multiscale_attn_forward.1} parent=35 // pred_check
        %p4869 = pneg %p130
      $region45: #{multiscale_attn_forward.1} parent=35 // pred_check_branch
        %4871 = sbr.rel (%p4869) target = $region47
      $region46: #{multiscale_attn_forward.1} parent=35 // pred_region
        _
      $region47: #{multiscale_attn_forward.1} parent=35 // pred_fallthru
        _
      // Predicated region
      $region48: #{multiscale_attn_forward.1} parent=35 // pred_check
        %p4872 = pneg %p156
      $region49: #{multiscale_attn_forward.1} parent=35 // pred_check_branch
        %4874 = sbr.rel (%p4872) target = $region51
      $region50: #{multiscale_attn_forward.1} parent=35 // pred_region
        _
      $region51: #{multiscale_attn_forward.1} parent=35 // pred_fallthru
        _
      // Predicated region
      $region52: #{multiscale_attn_forward.1} parent=35 // pred_check
        %p4875 = pneg %p182
      $region53: #{multiscale_attn_forward.1} parent=35 // pred_check_branch
        %4877 = sbr.rel (%p4875) target = $region55
      $region54: #{multiscale_attn_forward.1} parent=35 // pred_region
        _
      $region55: #{multiscale_attn_forward.1} parent=35 // pred_fallthru
        _
    $region36: #{multiscale_attn_forward.1} parent=5 // pred_fallthru
      _
    %p4878 = scmp.le.s32.totalorder 2, %s13
    // Predicated region
    $region56: #{multiscale_attn_forward.1} parent=5 // pred_check
      %p4879 = pneg %p4878
    $region57: #{multiscale_attn_forward.1} parent=5 // pred_check_branch
      %4881 = sbr.rel (%p4879) target = $region59
    $region58: #{multiscale_attn_forward.1} parent=5 // pred_region
      %s4882 = ssub.s32 %s13, 2
      // Predicated region
      $region60: #{multiscale_attn_forward.1} parent=58 // pred_check
        %p4883 = pneg %p136
      $region61: #{multiscale_attn_forward.1} parent=58 // pred_check_branch
        %4885 = sbr.rel (%p4883) target = $region63
      $region62: #{multiscale_attn_forward.1} parent=58 // pred_region
        %p4886 = scmp.lt.s32.totalorder %s19, 1
        %s4887 = scalar_select %p4886, %s19, 1
        %s4888 = smul.addr %s4887, 102
        %s4889 = smul.addr %s4888, 8
        %s4890 = scalar_lea.vmem %s4, %s4889
      $region63: #{multiscale_attn_forward.1} parent=58 // pred_fallthru
        _
      // Predicated region
      $region64: #{multiscale_attn_forward.1} parent=58 // pred_check
        %p4891 = pneg %p162
      $region65: #{multiscale_attn_forward.1} parent=58 // pred_check_branch
        %4893 = sbr.rel (%p4891) target = $region67
      $region66: #{multiscale_attn_forward.1} parent=58 // pred_region
        %p4894 = scmp.lt.s32.totalorder %s19, 1
        %s4895 = scalar_select %p4894, %s19, 1
        %s4896 = smul.addr %s4895, 2
        %s4897 = scalar_lea.vmem %s5, %s4896
      $region67: #{multiscale_attn_forward.1} parent=58 // pred_fallthru
        _
      // Predicated region
      $region68: #{multiscale_attn_forward.1} parent=58 // pred_check
        %p4898 = pneg %p188
      $region69: #{multiscale_attn_forward.1} parent=58 // pred_check_branch
        %4900 = sbr.rel (%p4898) target = $region71
      $region70: #{multiscale_attn_forward.1} parent=58 // pred_region
        %p4901 = scmp.lt.s32.totalorder %s19, 1
        %s4902 = scalar_select %p4901, %s19, 1
        %s4903 = smul.addr %s4902, 2
        %s4904 = scalar_lea.vmem %s6, %s4903
      $region71: #{multiscale_attn_forward.1} parent=58 // pred_fallthru
        _
    $region59: #{multiscale_attn_forward.1} parent=5 // pred_fallthru
      _
  $region6: #{multiscale_attn_forward.1} parent=0 // loop_footer
    %s17 = sadd.s32 1, %s13
  $region7: #{multiscale_attn_forward.1} parent=0 // loop_footer_branch
    %12 = sbr.rel target = $region3
  $region8: #{multiscale_attn_forward.1} parent=0 // loop_exit
    _

</llo_original>
